<compile_context>
chip_gen: v5e
topology: v5e:2x2
jax: 0.10.0
libtpu: 0.0.40
codegen_flags: <defaults>
</compile_context>

<pallas_src>
import functools

import jax
import jax.numpy as jnp
from jax import lax
from jax.experimental import pallas as pl
from jax.experimental.pallas import tpu as pltpu

# ---- static model / tiling constants --------------------------------------
TB_MAX = 64       # max images per grid step (3136 rows/step; fits v7x 64 MiB VMEM)
P2 = 49           # conv2 output positions per image (7*7)
K1 = 10           # conv1 patch: 9 taps + 1 validity/bias indicator column
C1 = 64           # conv1 output channels
C2 = 128          # conv2 output channels
FC_H = 64         # fc1 width
NCLS = 10         # classes
SPK = 9 * K1      # superpatch width (90)
EPS = 1e-5        # PyTorch BatchNorm default eps


# ----------------------------------------------------------------------------
# Fused Pallas kernel: conv1(+BN1+ReLU) -> conv2(+BN2+ReLU) -> FC1 -> ReLU ->
# FC2 -> LogSoftmax, for `tb` images per grid step.
# ----------------------------------------------------------------------------
def _fused_mnist_kernel(sp_ref, w1b_ref, w2_ref, b2_ref,
                        wfc1_ref, bfc1_ref, wfc2_ref, bfc2_ref,
                        o_ref, ybuf_ref, *, tb):
    # conv1 (+ folded BN1 bias via indicator column, + conv2 zero padding) + ReLU.
    # sp rows are ordered (conv2 position, image-in-tile).  Activation emitted in
    # bf16 right after the ReLU (per review) to halve the largest VMEM intermediate.
    a = jnp.dot(sp_ref[...], w1b_ref[...],
                preferred_element_type=jnp.float32)              # (P2*tb, 9*C1)
    a = jnp.maximum(a, 0.0).astype(jnp.bfloat16)

    # conv2 (+ folded BN2) + ReLU, emitted in bf16.
    y2 = jnp.dot(a, w2_ref[...], preferred_element_type=jnp.float32)  # (P2*tb, C2)
    y2 = jnp.maximum(y2 + b2_ref[...], 0.0).astype(jnp.bfloat16)

    # FC1 as ONE K = P2*C2 = 6272 MXU matmul (review's main FC1 change):
    # relayout the pos-major conv2 output into image-major rows with positions on
    # lanes via 49 aligned (tb, 128) stores into a VMEM scratch, then one dot.
    for p in range(P2):                                          # static unroll
        ybuf_ref[:, p * C2:(p + 1) * C2] = y2[p * tb:(p + 1) * tb, :]
    h = jnp.dot(ybuf_ref[...], wfc1_ref[...],
                preferred_element_type=jnp.float32)              # (tb, FC_H)
    h = jnp.maximum(h + bfc1_ref[...], 0.0)

    # FC2 + LogSoftmax.
    # TODO(synk): Dropout(0.5) is identity in eval mode; training-mode dropout
    # (pltpu.prng_random_bits masking) is intentionally not applied here.
    logits = jnp.dot(h.astype(jnp.bfloat16), wfc2_ref[...],
                     preferred_element_type=jnp.float32) + bfc2_ref[...]
    m = jnp.max(logits, axis=-1, keepdims=True)
    s = logits - m
    o_ref[...] = s - jnp.log(jnp.sum(jnp.exp(s), axis=-1, keepdims=True))


# ----------------------------------------------------------------------------
# Wrapper-side data prep (tiny, all-bf16 tensors — no activation blow-up in HBM)
# ----------------------------------------------------------------------------
def _round_up(n, m):
    return ((n + m - 1) // m) * m


def _choose_tb(batch):
    # Clamp the batch tile near B for small batches (no wasted padded compute);
    # cap at 64 so conv intermediates fit v7x's 64 MiB VMEM (v5e/v6e would allow 128).
    return int(min(TB_MAX, _round_up(max(batch, 1), 8)))


def build_superpatches(x_nchw, tb):
    """(B,1,28,28) NCHW -> bf16 superpatches ((Bp//tb)*P2*tb, 90).

    Row order: (batch tile, conv2 position, image-in-tile).
    Column order: conv2 tap (ki*3+kj) x [9 conv1 patch values (ki1*3+kj1), indicator].
    The indicator is 1 for real conv1 positions (carries the folded conv1/BN1 bias)
    and 0 where conv2 reads its zero padding.  All intermediates are bf16.
    """
    B = x_nchw.shape[0]
    x = x_nchw[:, 0].astype(jnp.bfloat16)                       # cast early (review)
    xp = jnp.pad(x, ((0, 0), (1, 1), (1, 1)))                   # conv1 zero padding
    taps1 = [xp[:, ki:ki + 27:2, kj:kj + 27:2]
             for ki in range(3) for kj in range(3)]
    p1 = jnp.stack(taps1, axis=-1)                              # (B,14,14,9)
    p1 = jnp.concatenate(
        [p1, jnp.ones(p1.shape[:3] + (1,), p1.dtype)], axis=-1)  # + indicator
    p1 = jnp.pad(p1, ((0, 0), (1, 1), (1, 1), (0, 0)))          # conv2 zero padding
    taps2 = [p1[:, ki:ki + 13:2, kj:kj + 13:2, :]
             for ki in range(3) for kj in range(3)]
    sp = jnp.stack(taps2, axis=3).reshape(B, P2, SPK)           # (B,49,90) bf16

    Bp = _round_up(B, tb)
    sp = jnp.pad(sp, ((0, Bp - B), (0, 0), (0, 0)))
    g = Bp // tb
    # pos-major within each batch tile; this transpose fuses into the producing
    # XLA fusion (bf16, 8.8 KB/image).
    sp = sp.reshape(g, tb, P2, SPK).transpose(0, 2, 1, 3).reshape(g * P2 * tb, SPK)
    return sp, Bp


def prepare_params(p):
    """One-time: fold BN + conv bias into weights, permute fc1, cast MXU operands."""
    # conv1 + BN1 -> augmented (10, 64) block, replicated block-diagonally per conv2 tap.
    s1 = p["bn1_gamma"] / jnp.sqrt(p["bn1_var"] + EPS)
    w1 = jnp.transpose(p["w1"], (2, 3, 1, 0)).reshape(9, C1) * s1[None, :]
    b1 = (p["b1"] - p["bn1_mean"]) * s1 + p["bn1_beta"]
    w1aug = jnp.concatenate([w1, b1[None, :]], axis=0)               # (10, 64)
    eye9 = jnp.eye(9, dtype=w1aug.dtype)
    w1b = (eye9[:, None, :, None] * w1aug[None, :, None, :]).reshape(SPK, 9 * C1)

    # conv2 + BN2 (scale folded into weights, bias kept separate in f32).
    s2 = p["bn2_gamma"] / jnp.sqrt(p["bn2_var"] + EPS)
    w2 = jnp.transpose(p["w2"], (2, 3, 1, 0)).reshape(9 * C1, C2) * s2[None, :]
    b2 = (p["b2"] - p["bn2_mean"]) * s2 + p["bn2_beta"]

    # fc1: permute the 7*7*128 input axis from PyTorch NCHW flatten order
    # (c*49 + pos) to kernel order (pos*128 + c) — removes any runtime transpose.
    wfc1 = jnp.transpose(p["fc1_w"].reshape(FC_H, C2, P2), (2, 1, 0)).reshape(P2 * C2, FC_H)

    return {
        "w1b": w1b.astype(jnp.bfloat16),
        "w2": w2.astype(jnp.bfloat16),
        "b2": b2.reshape(1, C2).astype(jnp.float32),
        "wfc1": wfc1.astype(jnp.bfloat16),
        "bfc1": p["fc1_b"].reshape(1, FC_H).astype(jnp.float32),
        "wfc2": jnp.transpose(p["fc2_w"]).astype(jnp.bfloat16),      # (64, 10)
        "bfc2": p["fc2_b"].reshape(1, NCLS).astype(jnp.float32),
    }


@jax.jit
def mnist_forward(x_nchw, kp):
    B = x_nchw.shape[0]
    tb = _choose_tb(B)
    sp, Bp = build_superpatches(x_nchw, tb)
    g = Bp // tb
    rows = P2 * tb

    out = pl.pallas_call(
        functools.partial(_fused_mnist_kernel, tb=tb),
        out_shape=jax.ShapeDtypeStruct((Bp, NCLS), jnp.float32),
        grid=(g,),
        in_specs=[
            pl.BlockSpec((rows, SPK), lambda i: (i, 0)),        # superpatches (tiled M)
            pl.BlockSpec((SPK, 9 * C1), lambda i: (0, 0)),      # block-diag conv1 weight
            pl.BlockSpec((9 * C1, C2), lambda i: (0, 0)),       # conv2 weight (BN2 folded)
            pl.BlockSpec((1, C2), lambda i: (0, 0)),            # conv2/BN2 bias
            pl.BlockSpec((P2 * C2, FC_H), lambda i: (0, 0)),    # fc1 weight (pos-major)
            pl.BlockSpec((1, FC_H), lambda i: (0, 0)),          # fc1 bias
            pl.BlockSpec((FC_H, NCLS), lambda i: (0, 0)),       # fc2 weight
            pl.BlockSpec((1, NCLS), lambda i: (0, 0)),          # fc2 bias
        ],
        out_specs=pl.BlockSpec((tb, NCLS), lambda i: (i, 0)),
        scratch_shapes=[pltpu.VMEM((tb, P2 * C2), jnp.bfloat16)],   # FC1 relayout buffer
        compiler_params=pltpu.CompilerParams(
            dimension_semantics=("parallel",),
            vmem_limit_bytes=48 * 1024 * 1024,
        ),
    )(sp, kp["w1b"], kp["w2"], kp["b2"],
      kp["wfc1"], kp["bfc1"], kp["wfc2"], kp["bfc2"])
    return out[:B]


# ----------------------------------------------------------------------------
# Parameter init and pure-JAX (f32) reference for validation
# ----------------------------------------------------------------------------
def init_params(key):
    ks = jax.random.split(key, 16)
    p = {}
    p["w1"] = jax.random.normal(ks[0], (C1, 1, 3, 3), jnp.float32) * 0.1
    p["b1"] = jax.random.normal(ks[1], (C1,), jnp.float32) * 0.05
    p["bn1_gamma"] = 1.0 + 0.1 * jax.random.normal(ks[2], (C1,), jnp.float32)
    p["bn1_beta"] = 0.1 * jax.random.normal(ks[3], (C1,), jnp.float32)
    p["bn1_mean"] = 0.1 * jax.random.normal(ks[4], (C1,), jnp.float32)
    p["bn1_var"] = jax.random.uniform(ks[5], (C1,), jnp.float32, 0.5, 1.5)
    p["w2"] = jax.random.normal(ks[6], (C2, C1, 3, 3), jnp.float32) * 0.05
    p["b2"] = jax.random.normal(ks[7], (C2,), jnp.float32) * 0.05
    p["bn2_gamma"] = 1.0 + 0.1 * jax.random.normal(ks[8], (C2,), jnp.float32)
    p["bn2_beta"] = 0.1 * jax.random.normal(ks[9], (C2,), jnp.float32)
    p["bn2_mean"] = 0.1 * jax.random.normal(ks[10], (C2,), jnp.float32)
    p["bn2_var"] = jax.random.uniform(ks[11], (C2,), jnp.float32, 0.5, 1.5)
    p["fc1_w"] = jax.random.normal(ks[12], (FC_H, P2 * C2), jnp.float32) * 0.05
    p["fc1_b"] = jax.random.normal(ks[13], (FC_H,), jnp.float32) * 0.05
    p["fc2_w"] = jax.random.normal(ks[14], (NCLS, FC_H), jnp.float32) * 0.3
    p["fc2_b"] = jax.random.normal(ks[15], (NCLS,), jnp.float32) * 0.05
    return p


@jax.jit
def reference_forward(x, p):
    def conv_bn_relu(x, w, b, gamma, beta, mean, var):
        y = lax.conv_general_dilated(
            x, w, window_strides=(2, 2), padding=((1, 1), (1, 1)),
            dimension_numbers=("NCHW", "OIHW", "NCHW"))
        y = y + b[None, :, None, None]
        y = (y - mean[None, :, None, None]) * \
            (gamma / jnp.sqrt(var + EPS))[None, :, None, None] + beta[None, :, None, None]
        return jnp.maximum(y, 0.0)

    y = conv_bn_relu(x, p["w1"], p["b1"], p["bn1_gamma"], p["bn1_beta"],
                     p["bn1_mean"], p["bn1_var"])
    y = conv_bn_relu(y, p["w2"], p["b2"], p["bn2_gamma"], p["bn2_beta"],
                     p["bn2_mean"], p["bn2_var"])
    flat = y.reshape(y.shape[0], C2 * P2)                      # NCHW flatten (view)
    h = jnp.maximum(flat @ p["fc1_w"].T + p["fc1_b"], 0.0)
    logits = h @ p["fc2_w"].T + p["fc2_b"]
    return jax.nn.log_softmax(logits, axis=-1)


if __name__ == "__main__":
    key = jax.random.PRNGKey(0)
    k_x, k_x2, k_p = jax.random.split(key, 3)
    params = init_params(k_p)
    kparams = prepare_params(params)           # one-time weight folding / layout prep

    # Small demo batch (MNIST-shaped input: fc hard-codes 7*7*128 -> 28x28 images).
    x = jax.random.normal(k_x, (2, 1, 28, 28), jnp.float32)
    out = jax.block_until_ready(mnist_forward(x, kparams))
    assert out.shape == (2, NCLS)
    ref = jax.block_until_ready(reference_forward(x, params))
    err = float(jnp.max(jnp.abs(out - ref)))
    assert err < 0.1, f"max abs error vs f32 reference too large: {err}"
    assert bool(jnp.all(jnp.abs(jax.scipy.special.logsumexp(out, axis=1)) < 1e-3))

    # Larger batch exercising the TB=64, multi-grid-step (megacore-parallel) path.
    x2 = jax.random.normal(k_x2, (128, 1, 28, 28), jnp.float32)
    out2 = jax.block_until_ready(mnist_forward(x2, kparams))
    assert out2.shape == (128, NCLS)
    ref2 = jax.block_until_ready(reference_forward(x2, params))
    err2 = float(jnp.max(jnp.abs(out2 - ref2)))
    # looser bound: max over 1280 bf16-rounded logits; real indexing bugs are O(1).
    assert err2 < 0.2, f"max abs error (B=128) vs f32 reference too large: {err2}"
    assert bool(jnp.all(jnp.abs(jax.scipy.special.logsumexp(out2, axis=1)) < 1e-3))

    print("KERNEL_OK")
</pallas_src>

<mosaic_0001>
module attributes {stable_mosaic.version = 11 : i64} {
  func.func @_fused_mnist_kernel(%arg0: i32, %arg1: memref<392x90xbf16, #tpu.memory_space<vmem>>, %arg2: memref<90x576xbf16, #tpu.memory_space<vmem>>, %arg3: memref<576x128xbf16, #tpu.memory_space<vmem>>, %arg4: memref<1x128xf32, #tpu.memory_space<vmem>>, %arg5: memref<6272x64xbf16, #tpu.memory_space<vmem>>, %arg6: memref<1x64xf32, #tpu.memory_space<vmem>>, %arg7: memref<64x10xbf16, #tpu.memory_space<vmem>>, %arg8: memref<1x10xf32, #tpu.memory_space<vmem>>, %arg9: memref<8x10xf32, #tpu.memory_space<vmem>>, %arg10: memref<8x6272xbf16, #tpu.memory_space<vmem>>) attributes {dimension_semantics = [#tpu.dimension_semantics<parallel>], iteration_bounds = array<i64: 1>, scalar_prefetch = 0 : i64, scratch_operands = 1 : i64, tpu.core_type = #tpu.core_type<tc>, window_params = [{transform_indices = @transform_0, window_bounds = array<i64: 392, 90>}, {pipeline_mode = #tpu.pipeline_mode<synchronous>, transform_indices = @transform_1, window_bounds = array<i64: 90, 576>}, {pipeline_mode = #tpu.pipeline_mode<synchronous>, transform_indices = @transform_2, window_bounds = array<i64: 576, 128>}, {pipeline_mode = #tpu.pipeline_mode<synchronous>, transform_indices = @transform_3, window_bounds = array<i64: 1, 128>}, {pipeline_mode = #tpu.pipeline_mode<synchronous>, transform_indices = @transform_4, window_bounds = array<i64: 6272, 64>}, {pipeline_mode = #tpu.pipeline_mode<synchronous>, transform_indices = @transform_5, window_bounds = array<i64: 1, 64>}, {pipeline_mode = #tpu.pipeline_mode<synchronous>, transform_indices = @transform_6, window_bounds = array<i64: 64, 10>}, {pipeline_mode = #tpu.pipeline_mode<synchronous>, transform_indices = @transform_7, window_bounds = array<i64: 1, 10>}, {transform_indices = @transform_8, window_bounds = array<i64: 8, 10>}]} {
    %c0 = arith.constant 0 : index
    %c0_0 = arith.constant 0 : index
    %0 = vector.load %arg1[%c0, %c0_0] : memref<392x90xbf16, #tpu.memory_space<vmem>>, vector<392x90xbf16>
    %c0_1 = arith.constant 0 : index
    %c0_2 = arith.constant 0 : index
    %1 = vector.load %arg2[%c0_1, %c0_2] : memref<90x576xbf16, #tpu.memory_space<vmem>>, vector<90x576xbf16>
    %cst = arith.constant dense<0.000000e+00> : vector<392x576xf32>
    %2 = tpu.matmul %0, %1, %cst {dimension_numbers = #tpu.dot_dimension_numbers<[1], [0], [0], [1], [0, 0, 1, 1], [], []>} : vector<392x90xbf16>, vector<90x576xbf16>, vector<392x576xf32> -> vector<392x576xf32>
    %cst_3 = arith.constant 0.000000e+00 : f32
    %3 = vector.broadcast %cst_3 : f32 to vector<392x576xf32>
    %4 = arith.maximumf %2, %3 : vector<392x576xf32>
    %5 = arith.truncf %4 : vector<392x576xf32> to vector<392x576xbf16>
    %c0_4 = arith.constant 0 : index
    %c0_5 = arith.constant 0 : index
    %6 = vector.load %arg3[%c0_4, %c0_5] : memref<576x128xbf16, #tpu.memory_space<vmem>>, vector<576x128xbf16>
    %cst_6 = arith.constant dense<0.000000e+00> : vector<392x128xf32>
    %7 = tpu.matmul %5, %6, %cst_6 {dimension_numbers = #tpu.dot_dimension_numbers<[1], [0], [0], [1], [0, 0, 1, 1], [], []>} : vector<392x576xbf16>, vector<576x128xbf16>, vector<392x128xf32> -> vector<392x128xf32>
    %c0_7 = arith.constant 0 : index
    %c0_8 = arith.constant 0 : index
    %8 = vector.load %arg4[%c0_7, %c0_8] : memref<1x128xf32, #tpu.memory_space<vmem>>, vector<1x128xf32>
    %9 = vector.broadcast %8 : vector<1x128xf32> to vector<392x128xf32>
    %10 = arith.addf %7, %9 : vector<392x128xf32>
    %cst_9 = arith.constant 0.000000e+00 : f32
    %11 = vector.broadcast %cst_9 : f32 to vector<392x128xf32>
    %12 = arith.maximumf %10, %11 : vector<392x128xf32>
    %13 = arith.truncf %12 : vector<392x128xf32> to vector<392x128xbf16>
    %14 = vector.extract_strided_slice %13 {offsets = [0, 0], sizes = [8, 128], strides = [1, 1]} : vector<392x128xbf16> to vector<8x128xbf16>
    %c0_10 = arith.constant 0 : index
    %c0_11 = arith.constant 0 : index
    %15 = vector.load %arg10[%c0_10, %c0_11] : memref<8x6272xbf16, #tpu.memory_space<vmem>>, vector<8x128xbf16>
    tpu.vector_store %arg10[%c0_10, %c0_11], %14 {strides = array<i32>} : memref<8x6272xbf16, #tpu.memory_space<vmem>>, vector<8x128xbf16>,
    %16 = vector.extract_strided_slice %13 {offsets = [8, 0], sizes = [8, 128], strides = [1, 1]} : vector<392x128xbf16> to vector<8x128xbf16>
    %c0_12 = arith.constant 0 : index
    %c128 = arith.constant 128 : index
    %17 = vector.load %arg10[%c0_12, %c128] : memref<8x6272xbf16, #tpu.memory_space<vmem>>, vector<8x128xbf16>
    tpu.vector_store %arg10[%c0_12, %c128], %16 {strides = array<i32>} : memref<8x6272xbf16, #tpu.memory_space<vmem>>, vector<8x128xbf16>,
    %18 = vector.extract_strided_slice %13 {offsets = [16, 0], sizes = [8, 128], strides = [1, 1]} : vector<392x128xbf16> to vector<8x128xbf16>
    %c0_13 = arith.constant 0 : index
    %c256 = arith.constant 256 : index
    %19 = vector.load %arg10[%c0_13, %c256] : memref<8x6272xbf16, #tpu.memory_space<vmem>>, vector<8x128xbf16>
    tpu.vector_store %arg10[%c0_13, %c256], %18 {strides = array<i32>} : memref<8x6272xbf16, #tpu.memory_space<vmem>>, vector<8x128xbf16>,
    %20 = vector.extract_strided_slice %13 {offsets = [24, 0], sizes = [8, 128], strides = [1, 1]} : vector<392x128xbf16> to vector<8x128xbf16>
    %c0_14 = arith.constant 0 : index
    %c384 = arith.constant 384 : index
    %21 = vector.load %arg10[%c0_14, %c384] : memref<8x6272xbf16, #tpu.memory_space<vmem>>, vector<8x128xbf16>
    tpu.vector_store %arg10[%c0_14, %c384], %20 {strides = array<i32>} : memref<8x6272xbf16, #tpu.memory_space<vmem>>, vector<8x128xbf16>,
    %22 = vector.extract_strided_slice %13 {offsets = [32, 0], sizes = [8, 128], strides = [1, 1]} : vector<392x128xbf16> to vector<8x128xbf16>
    %c0_15 = arith.constant 0 : index
    %c512 = arith.constant 512 : index
    %23 = vector.load %arg10[%c0_15, %c512] : memref<8x6272xbf16, #tpu.memory_space<vmem>>, vector<8x128xbf16>
    tpu.vector_store %arg10[%c0_15, %c512], %22 {strides = array<i32>} : memref<8x6272xbf16, #tpu.memory_space<vmem>>, vector<8x128xbf16>,
    %24 = vector.extract_strided_slice %13 {offsets = [40, 0], sizes = [8, 128], strides = [1, 1]} : vector<392x128xbf16> to vector<8x128xbf16>
    %c0_16 = arith.constant 0 : index
    %c640 = arith.constant 640 : index
    %25 = vector.load %arg10[%c0_16, %c640] : memref<8x6272xbf16, #tpu.memory_space<vmem>>, vector<8x128xbf16>
    tpu.vector_store %arg10[%c0_16, %c640], %24 {strides = array<i32>} : memref<8x6272xbf16, #tpu.memory_space<vmem>>, vector<8x128xbf16>,
    %26 = vector.extract_strided_slice %13 {offsets = [48, 0], sizes = [8, 128], strides = [1, 1]} : vector<392x128xbf16> to vector<8x128xbf16>
    %c0_17 = arith.constant 0 : index
    %c768 = arith.constant 768 : index
    %27 = vector.load %arg10[%c0_17, %c768] : memref<8x6272xbf16, #tpu.memory_space<vmem>>, vector<8x128xbf16>
    tpu.vector_store %arg10[%c0_17, %c768], %26 {strides = array<i32>} : memref<8x6272xbf16, #tpu.memory_space<vmem>>, vector<8x128xbf16>,
    %28 = vector.extract_strided_slice %13 {offsets = [56, 0], sizes = [8, 128], strides = [1, 1]} : vector<392x128xbf16> to vector<8x128xbf16>
    %c0_18 = arith.constant 0 : index
    %c896 = arith.constant 896 : index
    %29 = vector.load %arg10[%c0_18, %c896] : memref<8x6272xbf16, #tpu.memory_space<vmem>>, vector<8x128xbf16>
    tpu.vector_store %arg10[%c0_18, %c896], %28 {strides = array<i32>} : memref<8x6272xbf16, #tpu.memory_space<vmem>>, vector<8x128xbf16>,
    %30 = vector.extract_strided_slice %13 {offsets = [64, 0], sizes = [8, 128], strides = [1, 1]} : vector<392x128xbf16> to vector<8x128xbf16>
    %c0_19 = arith.constant 0 : index
    %c1024 = arith.constant 1024 : index
    %31 = vector.load %arg10[%c0_19, %c1024] : memref<8x6272xbf16, #tpu.memory_space<vmem>>, vector<8x128xbf16>
    tpu.vector_store %arg10[%c0_19, %c1024], %30 {strides = array<i32>} : memref<8x6272xbf16, #tpu.memory_space<vmem>>, vector<8x128xbf16>,
    %32 = vector.extract_strided_slice %13 {offsets = [72, 0], sizes = [8, 128], strides = [1, 1]} : vector<392x128xbf16> to vector<8x128xbf16>
    %c0_20 = arith.constant 0 : index
    %c1152 = arith.constant 1152 : index
    %33 = vector.load %arg10[%c0_20, %c1152] : memref<8x6272xbf16, #tpu.memory_space<vmem>>, vector<8x128xbf16>
    tpu.vector_store %arg10[%c0_20, %c1152], %32 {strides = array<i32>} : memref<8x6272xbf16, #tpu.memory_space<vmem>>, vector<8x128xbf16>,
    %34 = vector.extract_strided_slice %13 {offsets = [80, 0], sizes = [8, 128], strides = [1, 1]} : vector<392x128xbf16> to vector<8x128xbf16>
    %c0_21 = arith.constant 0 : index
    %c1280 = arith.constant 1280 : index
    %35 = vector.load %arg10[%c0_21, %c1280] : memref<8x6272xbf16, #tpu.memory_space<vmem>>, vector<8x128xbf16>
    tpu.vector_store %arg10[%c0_21, %c1280], %34 {strides = array<i32>} : memref<8x6272xbf16, #tpu.memory_space<vmem>>, vector<8x128xbf16>,
    %36 = vector.extract_strided_slice %13 {offsets = [88, 0], sizes = [8, 128], strides = [1, 1]} : vector<392x128xbf16> to vector<8x128xbf16>
    %c0_22 = arith.constant 0 : index
    %c1408 = arith.constant 1408 : index
    %37 = vector.load %arg10[%c0_22, %c1408] : memref<8x6272xbf16, #tpu.memory_space<vmem>>, vector<8x128xbf16>
    tpu.vector_store %arg10[%c0_22, %c1408], %36 {strides = array<i32>} : memref<8x6272xbf16, #tpu.memory_space<vmem>>, vector<8x128xbf16>,
    %38 = vector.extract_strided_slice %13 {offsets = [96, 0], sizes = [8, 128], strides = [1, 1]} : vector<392x128xbf16> to vector<8x128xbf16>
    %c0_23 = arith.constant 0 : index
    %c1536 = arith.constant 1536 : index
    %39 = vector.load %arg10[%c0_23, %c1536] : memref<8x6272xbf16, #tpu.memory_space<vmem>>, vector<8x128xbf16>
    tpu.vector_store %arg10[%c0_23, %c1536], %38 {strides = array<i32>} : memref<8x6272xbf16, #tpu.memory_space<vmem>>, vector<8x128xbf16>,
    %40 = vector.extract_strided_slice %13 {offsets = [104, 0], sizes = [8, 128], strides = [1, 1]} : vector<392x128xbf16> to vector<8x128xbf16>
    %c0_24 = arith.constant 0 : index
    %c1664 = arith.constant 1664 : index
    %41 = vector.load %arg10[%c0_24, %c1664] : memref<8x6272xbf16, #tpu.memory_space<vmem>>, vector<8x128xbf16>
    tpu.vector_store %arg10[%c0_24, %c1664], %40 {strides = array<i32>} : memref<8x6272xbf16, #tpu.memory_space<vmem>>, vector<8x128xbf16>,
    %42 = vector.extract_strided_slice %13 {offsets = [112, 0], sizes = [8, 128], strides = [1, 1]} : vector<392x128xbf16> to vector<8x128xbf16>
    %c0_25 = arith.constant 0 : index
    %c1792 = arith.constant 1792 : index
    %43 = vector.load %arg10[%c0_25, %c1792] : memref<8x6272xbf16, #tpu.memory_space<vmem>>, vector<8x128xbf16>
    tpu.vector_store %arg10[%c0_25, %c1792], %42 {strides = array<i32>} : memref<8x6272xbf16, #tpu.memory_space<vmem>>, vector<8x128xbf16>,
    %44 = vector.extract_strided_slice %13 {offsets = [120, 0], sizes = [8, 128], strides = [1, 1]} : vector<392x128xbf16> to vector<8x128xbf16>
    %c0_26 = arith.constant 0 : index
    %c1920 = arith.constant 1920 : index
    %45 = vector.load %arg10[%c0_26, %c1920] : memref<8x6272xbf16, #tpu.memory_space<vmem>>, vector<8x128xbf16>
    tpu.vector_store %arg10[%c0_26, %c1920], %44 {strides = array<i32>} : memref<8x6272xbf16, #tpu.memory_space<vmem>>, vector<8x128xbf16>,
    %46 = vector.extract_strided_slice %13 {offsets = [128, 0], sizes = [8, 128], strides = [1, 1]} : vector<392x128xbf16> to vector<8x128xbf16>
    %c0_27 = arith.constant 0 : index
    %c2048 = arith.constant 2048 : index
    %47 = vector.load %arg10[%c0_27, %c2048] : memref<8x6272xbf16, #tpu.memory_space<vmem>>, vector<8x128xbf16>
    tpu.vector_store %arg10[%c0_27, %c2048], %46 {strides = array<i32>} : memref<8x6272xbf16, #tpu.memory_space<vmem>>, vector<8x128xbf16>,
    %48 = vector.extract_strided_slice %13 {offsets = [136, 0], sizes = [8, 128], strides = [1, 1]} : vector<392x128xbf16> to vector<8x128xbf16>
    %c0_28 = arith.constant 0 : index
    %c2176 = arith.constant 2176 : index
    %49 = vector.load %arg10[%c0_28, %c2176] : memref<8x6272xbf16, #tpu.memory_space<vmem>>, vector<8x128xbf16>
    tpu.vector_store %arg10[%c0_28, %c2176], %48 {strides = array<i32>} : memref<8x6272xbf16, #tpu.memory_space<vmem>>, vector<8x128xbf16>,
    %50 = vector.extract_strided_slice %13 {offsets = [144, 0], sizes = [8, 128], strides = [1, 1]} : vector<392x128xbf16> to vector<8x128xbf16>
    %c0_29 = arith.constant 0 : index
    %c2304 = arith.constant 2304 : index
    %51 = vector.load %arg10[%c0_29, %c2304] : memref<8x6272xbf16, #tpu.memory_space<vmem>>, vector<8x128xbf16>
    tpu.vector_store %arg10[%c0_29, %c2304], %50 {strides = array<i32>} : memref<8x6272xbf16, #tpu.memory_space<vmem>>, vector<8x128xbf16>,
    %52 = vector.extract_strided_slice %13 {offsets = [152, 0], sizes = [8, 128], strides = [1, 1]} : vector<392x128xbf16> to vector<8x128xbf16>
    %c0_30 = arith.constant 0 : index
    %c2432 = arith.constant 2432 : index
    %53 = vector.load %arg10[%c0_30, %c2432] : memref<8x6272xbf16, #tpu.memory_space<vmem>>, vector<8x128xbf16>
    tpu.vector_store %arg10[%c0_30, %c2432], %52 {strides = array<i32>} : memref<8x6272xbf16, #tpu.memory_space<vmem>>, vector<8x128xbf16>,
    %54 = vector.extract_strided_slice %13 {offsets = [160, 0], sizes = [8, 128], strides = [1, 1]} : vector<392x128xbf16> to vector<8x128xbf16>
    %c0_31 = arith.constant 0 : index
    %c2560 = arith.constant 2560 : index
    %55 = vector.load %arg10[%c0_31, %c2560] : memref<8x6272xbf16, #tpu.memory_space<vmem>>, vector<8x128xbf16>
    tpu.vector_store %arg10[%c0_31, %c2560], %54 {strides = array<i32>} : memref<8x6272xbf16, #tpu.memory_space<vmem>>, vector<8x128xbf16>,
    %56 = vector.extract_strided_slice %13 {offsets = [168, 0], sizes = [8, 128], strides = [1, 1]} : vector<392x128xbf16> to vector<8x128xbf16>
    %c0_32 = arith.constant 0 : index
    %c2688 = arith.constant 2688 : index
    %57 = vector.load %arg10[%c0_32, %c2688] : memref<8x6272xbf16, #tpu.memory_space<vmem>>, vector<8x128xbf16>
    tpu.vector_store %arg10[%c0_32, %c2688], %56 {strides = array<i32>} : memref<8x6272xbf16, #tpu.memory_space<vmem>>, vector<8x128xbf16>,
    %58 = vector.extract_strided_slice %13 {offsets = [176, 0], sizes = [8, 128], strides = [1, 1]} : vector<392x128xbf16> to vector<8x128xbf16>
    %c0_33 = arith.constant 0 : index
    %c2816 = arith.constant 2816 : index
    %59 = vector.load %arg10[%c0_33, %c2816] : memref<8x6272xbf16, #tpu.memory_space<vmem>>, vector<8x128xbf16>
    tpu.vector_store %arg10[%c0_33, %c2816], %58 {strides = array<i32>} : memref<8x6272xbf16, #tpu.memory_space<vmem>>, vector<8x128xbf16>,
    %60 = vector.extract_strided_slice %13 {offsets = [184, 0], sizes = [8, 128], strides = [1, 1]} : vector<392x128xbf16> to vector<8x128xbf16>
    %c0_34 = arith.constant 0 : index
    %c2944 = arith.constant 2944 : index
    %61 = vector.load %arg10[%c0_34, %c2944] : memref<8x6272xbf16, #tpu.memory_space<vmem>>, vector<8x128xbf16>
    tpu.vector_store %arg10[%c0_34, %c2944], %60 {strides = array<i32>} : memref<8x6272xbf16, #tpu.memory_space<vmem>>, vector<8x128xbf16>,
    %62 = vector.extract_strided_slice %13 {offsets = [192, 0], sizes = [8, 128], strides = [1, 1]} : vector<392x128xbf16> to vector<8x128xbf16>
    %c0_35 = arith.constant 0 : index
    %c3072 = arith.constant 3072 : index
    %63 = vector.load %arg10[%c0_35, %c3072] : memref<8x6272xbf16, #tpu.memory_space<vmem>>, vector<8x128xbf16>
    tpu.vector_store %arg10[%c0_35, %c3072], %62 {strides = array<i32>} : memref<8x6272xbf16, #tpu.memory_space<vmem>>, vector<8x128xbf16>,
    %64 = vector.extract_strided_slice %13 {offsets = [200, 0], sizes = [8, 128], strides = [1, 1]} : vector<392x128xbf16> to vector<8x128xbf16>
    %c0_36 = arith.constant 0 : index
    %c3200 = arith.constant 3200 : index
    %65 = vector.load %arg10[%c0_36, %c3200] : memref<8x6272xbf16, #tpu.memory_space<vmem>>, vector<8x128xbf16>
    tpu.vector_store %arg10[%c0_36, %c3200], %64 {strides = array<i32>} : memref<8x6272xbf16, #tpu.memory_space<vmem>>, vector<8x128xbf16>,
    %66 = vector.extract_strided_slice %13 {offsets = [208, 0], sizes = [8, 128], strides = [1, 1]} : vector<392x128xbf16> to vector<8x128xbf16>
    %c0_37 = arith.constant 0 : index
    %c3328 = arith.constant 3328 : index
    %67 = vector.load %arg10[%c0_37, %c3328] : memref<8x6272xbf16, #tpu.memory_space<vmem>>, vector<8x128xbf16>
    tpu.vector_store %arg10[%c0_37, %c3328], %66 {strides = array<i32>} : memref<8x6272xbf16, #tpu.memory_space<vmem>>, vector<8x128xbf16>,
    %68 = vector.extract_strided_slice %13 {offsets = [216, 0], sizes = [8, 128], strides = [1, 1]} : vector<392x128xbf16> to vector<8x128xbf16>
    %c0_38 = arith.constant 0 : index
    %c3456 = arith.constant 3456 : index
    %69 = vector.load %arg10[%c0_38, %c3456] : memref<8x6272xbf16, #tpu.memory_space<vmem>>, vector<8x128xbf16>
    tpu.vector_store %arg10[%c0_38, %c3456], %68 {strides = array<i32>} : memref<8x6272xbf16, #tpu.memory_space<vmem>>, vector<8x128xbf16>,
    %70 = vector.extract_strided_slice %13 {offsets = [224, 0], sizes = [8, 128], strides = [1, 1]} : vector<392x128xbf16> to vector<8x128xbf16>
    %c0_39 = arith.constant 0 : index
    %c3584 = arith.constant 3584 : index
    %71 = vector.load %arg10[%c0_39, %c3584] : memref<8x6272xbf16, #tpu.memory_space<vmem>>, vector<8x128xbf16>
    tpu.vector_store %arg10[%c0_39, %c3584], %70 {strides = array<i32>} : memref<8x6272xbf16, #tpu.memory_space<vmem>>, vector<8x128xbf16>,
    %72 = vector.extract_strided_slice %13 {offsets = [232, 0], sizes = [8, 128], strides = [1, 1]} : vector<392x128xbf16> to vector<8x128xbf16>
    %c0_40 = arith.constant 0 : index
    %c3712 = arith.constant 3712 : index
    %73 = vector.load %arg10[%c0_40, %c3712] : memref<8x6272xbf16, #tpu.memory_space<vmem>>, vector<8x128xbf16>
    tpu.vector_store %arg10[%c0_40, %c3712], %72 {strides = array<i32>} : memref<8x6272xbf16, #tpu.memory_space<vmem>>, vector<8x128xbf16>,
    %74 = vector.extract_strided_slice %13 {offsets = [240, 0], sizes = [8, 128], strides = [1, 1]} : vector<392x128xbf16> to vector<8x128xbf16>
    %c0_41 = arith.constant 0 : index
    %c3840 = arith.constant 3840 : index
    %75 = vector.load %arg10[%c0_41, %c3840] : memref<8x6272xbf16, #tpu.memory_space<vmem>>, vector<8x128xbf16>
    tpu.vector_store %arg10[%c0_41, %c3840], %74 {strides = array<i32>} : memref<8x6272xbf16, #tpu.memory_space<vmem>>, vector<8x128xbf16>,
    %76 = vector.extract_strided_slice %13 {offsets = [248, 0], sizes = [8, 128], strides = [1, 1]} : vector<392x128xbf16> to vector<8x128xbf16>
    %c0_42 = arith.constant 0 : index
    %c3968 = arith.constant 3968 : index
    %77 = vector.load %arg10[%c0_42, %c3968] : memref<8x6272xbf16, #tpu.memory_space<vmem>>, vector<8x128xbf16>
    tpu.vector_store %arg10[%c0_42, %c3968], %76 {strides = array<i32>} : memref<8x6272xbf16, #tpu.memory_space<vmem>>, vector<8x128xbf16>,
    %78 = vector.extract_strided_slice %13 {offsets = [256, 0], sizes = [8, 128], strides = [1, 1]} : vector<392x128xbf16> to vector<8x128xbf16>
    %c0_43 = arith.constant 0 : index
    %c4096 = arith.constant 4096 : index
    %79 = vector.load %arg10[%c0_43, %c4096] : memref<8x6272xbf16, #tpu.memory_space<vmem>>, vector<8x128xbf16>
    tpu.vector_store %arg10[%c0_43, %c4096], %78 {strides = array<i32>} : memref<8x6272xbf16, #tpu.memory_space<vmem>>, vector<8x128xbf16>,
    %80 = vector.extract_strided_slice %13 {offsets = [264, 0], sizes = [8, 128], strides = [1, 1]} : vector<392x128xbf16> to vector<8x128xbf16>
    %c0_44 = arith.constant 0 : index
    %c4224 = arith.constant 4224 : index
    %81 = vector.load %arg10[%c0_44, %c4224] : memref<8x6272xbf16, #tpu.memory_space<vmem>>, vector<8x128xbf16>
    tpu.vector_store %arg10[%c0_44, %c4224], %80 {strides = array<i32>} : memref<8x6272xbf16, #tpu.memory_space<vmem>>, vector<8x128xbf16>,
    %82 = vector.extract_strided_slice %13 {offsets = [272, 0], sizes = [8, 128], strides = [1, 1]} : vector<392x128xbf16> to vector<8x128xbf16>
    %c0_45 = arith.constant 0 : index
    %c4352 = arith.constant 4352 : index
    %83 = vector.load %arg10[%c0_45, %c4352] : memref<8x6272xbf16, #tpu.memory_space<vmem>>, vector<8x128xbf16>
    tpu.vector_store %arg10[%c0_45, %c4352], %82 {strides = array<i32>} : memref<8x6272xbf16, #tpu.memory_space<vmem>>, vector<8x128xbf16>,
    %84 = vector.extract_strided_slice %13 {offsets = [280, 0], sizes = [8, 128], strides = [1, 1]} : vector<392x128xbf16> to vector<8x128xbf16>
    %c0_46 = arith.constant 0 : index
    %c4480 = arith.constant 4480 : index
    %85 = vector.load %arg10[%c0_46, %c4480] : memref<8x6272xbf16, #tpu.memory_space<vmem>>, vector<8x128xbf16>
    tpu.vector_store %arg10[%c0_46, %c4480], %84 {strides = array<i32>} : memref<8x6272xbf16, #tpu.memory_space<vmem>>, vector<8x128xbf16>,
    %86 = vector.extract_strided_slice %13 {offsets = [288, 0], sizes = [8, 128], strides = [1, 1]} : vector<392x128xbf16> to vector<8x128xbf16>
    %c0_47 = arith.constant 0 : index
    %c4608 = arith.constant 4608 : index
    %87 = vector.load %arg10[%c0_47, %c4608] : memref<8x6272xbf16, #tpu.memory_space<vmem>>, vector<8x128xbf16>
    tpu.vector_store %arg10[%c0_47, %c4608], %86 {strides = array<i32>} : memref<8x6272xbf16, #tpu.memory_space<vmem>>, vector<8x128xbf16>,
    %88 = vector.extract_strided_slice %13 {offsets = [296, 0], sizes = [8, 128], strides = [1, 1]} : vector<392x128xbf16> to vector<8x128xbf16>
    %c0_48 = arith.constant 0 : index
    %c4736 = arith.constant 4736 : index
    %89 = vector.load %arg10[%c0_48, %c4736] : memref<8x6272xbf16, #tpu.memory_space<vmem>>, vector<8x128xbf16>
    tpu.vector_store %arg10[%c0_48, %c4736], %88 {strides = array<i32>} : memref<8x6272xbf16, #tpu.memory_space<vmem>>, vector<8x128xbf16>,
    %90 = vector.extract_strided_slice %13 {offsets = [304, 0], sizes = [8, 128], strides = [1, 1]} : vector<392x128xbf16> to vector<8x128xbf16>
    %c0_49 = arith.constant 0 : index
    %c4864 = arith.constant 4864 : index
    %91 = vector.load %arg10[%c0_49, %c4864] : memref<8x6272xbf16, #tpu.memory_space<vmem>>, vector<8x128xbf16>
    tpu.vector_store %arg10[%c0_49, %c4864], %90 {strides = array<i32>} : memref<8x6272xbf16, #tpu.memory_space<vmem>>, vector<8x128xbf16>,
    %92 = vector.extract_strided_slice %13 {offsets = [312, 0], sizes = [8, 128], strides = [1, 1]} : vector<392x128xbf16> to vector<8x128xbf16>
    %c0_50 = arith.constant 0 : index
    %c4992 = arith.constant 4992 : index
    %93 = vector.load %arg10[%c0_50, %c4992] : memref<8x6272xbf16, #tpu.memory_space<vmem>>, vector<8x128xbf16>
    tpu.vector_store %arg10[%c0_50, %c4992], %92 {strides = array<i32>} : memref<8x6272xbf16, #tpu.memory_space<vmem>>, vector<8x128xbf16>,
    %94 = vector.extract_strided_slice %13 {offsets = [320, 0], sizes = [8, 128], strides = [1, 1]} : vector<392x128xbf16> to vector<8x128xbf16>
    %c0_51 = arith.constant 0 : index
    %c5120 = arith.constant 5120 : index
    %95 = vector.load %arg10[%c0_51, %c5120] : memref<8x6272xbf16, #tpu.memory_space<vmem>>, vector<8x128xbf16>
    tpu.vector_store %arg10[%c0_51, %c5120], %94 {strides = array<i32>} : memref<8x6272xbf16, #tpu.memory_space<vmem>>, vector<8x128xbf16>,
    %96 = vector.extract_strided_slice %13 {offsets = [328, 0], sizes = [8, 128], strides = [1, 1]} : vector<392x128xbf16> to vector<8x128xbf16>
    %c0_52 = arith.constant 0 : index
    %c5248 = arith.constant 5248 : index
    %97 = vector.load %arg10[%c0_52, %c5248] : memref<8x6272xbf16, #tpu.memory_space<vmem>>, vector<8x128xbf16>
    tpu.vector_store %arg10[%c0_52, %c5248], %96 {strides = array<i32>} : memref<8x6272xbf16, #tpu.memory_space<vmem>>, vector<8x128xbf16>,
    %98 = vector.extract_strided_slice %13 {offsets = [336, 0], sizes = [8, 128], strides = [1, 1]} : vector<392x128xbf16> to vector<8x128xbf16>
    %c0_53 = arith.constant 0 : index
    %c5376 = arith.constant 5376 : index
    %99 = vector.load %arg10[%c0_53, %c5376] : memref<8x6272xbf16, #tpu.memory_space<vmem>>, vector<8x128xbf16>
    tpu.vector_store %arg10[%c0_53, %c5376], %98 {strides = array<i32>} : memref<8x6272xbf16, #tpu.memory_space<vmem>>, vector<8x128xbf16>,
    %100 = vector.extract_strided_slice %13 {offsets = [344, 0], sizes = [8, 128], strides = [1, 1]} : vector<392x128xbf16> to vector<8x128xbf16>
    %c0_54 = arith.constant 0 : index
    %c5504 = arith.constant 5504 : index
    %101 = vector.load %arg10[%c0_54, %c5504] : memref<8x6272xbf16, #tpu.memory_space<vmem>>, vector<8x128xbf16>
    tpu.vector_store %arg10[%c0_54, %c5504], %100 {strides = array<i32>} : memref<8x6272xbf16, #tpu.memory_space<vmem>>, vector<8x128xbf16>,
    %102 = vector.extract_strided_slice %13 {offsets = [352, 0], sizes = [8, 128], strides = [1, 1]} : vector<392x128xbf16> to vector<8x128xbf16>
    %c0_55 = arith.constant 0 : index
    %c5632 = arith.constant 5632 : index
    %103 = vector.load %arg10[%c0_55, %c5632] : memref<8x6272xbf16, #tpu.memory_space<vmem>>, vector<8x128xbf16>
    tpu.vector_store %arg10[%c0_55, %c5632], %102 {strides = array<i32>} : memref<8x6272xbf16, #tpu.memory_space<vmem>>, vector<8x128xbf16>,
    %104 = vector.extract_strided_slice %13 {offsets = [360, 0], sizes = [8, 128], strides = [1, 1]} : vector<392x128xbf16> to vector<8x128xbf16>
    %c0_56 = arith.constant 0 : index
    %c5760 = arith.constant 5760 : index
    %105 = vector.load %arg10[%c0_56, %c5760] : memref<8x6272xbf16, #tpu.memory_space<vmem>>, vector<8x128xbf16>
    tpu.vector_store %arg10[%c0_56, %c5760], %104 {strides = array<i32>} : memref<8x6272xbf16, #tpu.memory_space<vmem>>, vector<8x128xbf16>,
    %106 = vector.extract_strided_slice %13 {offsets = [368, 0], sizes = [8, 128], strides = [1, 1]} : vector<392x128xbf16> to vector<8x128xbf16>
    %c0_57 = arith.constant 0 : index
    %c5888 = arith.constant 5888 : index
    %107 = vector.load %arg10[%c0_57, %c5888] : memref<8x6272xbf16, #tpu.memory_space<vmem>>, vector<8x128xbf16>
    tpu.vector_store %arg10[%c0_57, %c5888], %106 {strides = array<i32>} : memref<8x6272xbf16, #tpu.memory_space<vmem>>, vector<8x128xbf16>,
    %108 = vector.extract_strided_slice %13 {offsets = [376, 0], sizes = [8, 128], strides = [1, 1]} : vector<392x128xbf16> to vector<8x128xbf16>
    %c0_58 = arith.constant 0 : index
    %c6016 = arith.constant 6016 : index
    %109 = vector.load %arg10[%c0_58, %c6016] : memref<8x6272xbf16, #tpu.memory_space<vmem>>, vector<8x128xbf16>
    tpu.vector_store %arg10[%c0_58, %c6016], %108 {strides = array<i32>} : memref<8x6272xbf16, #tpu.memory_space<vmem>>, vector<8x128xbf16>,
    %110 = vector.extract_strided_slice %13 {offsets = [384, 0], sizes = [8, 128], strides = [1, 1]} : vector<392x128xbf16> to vector<8x128xbf16>
    %c0_59 = arith.constant 0 : index
    %c6144 = arith.constant 6144 : index
    %111 = vector.load %arg10[%c0_59, %c6144] : memref<8x6272xbf16, #tpu.memory_space<vmem>>, vector<8x128xbf16>
    tpu.vector_store %arg10[%c0_59, %c6144], %110 {strides = array<i32>} : memref<8x6272xbf16, #tpu.memory_space<vmem>>, vector<8x128xbf16>,
    %c0_60 = arith.constant 0 : index
    %c0_61 = arith.constant 0 : index
    %112 = vector.load %arg10[%c0_60, %c0_61] : memref<8x6272xbf16, #tpu.memory_space<vmem>>, vector<8x6272xbf16>
    %c0_62 = arith.constant 0 : index
    %c0_63 = arith.constant 0 : index
    %113 = vector.load %arg5[%c0_62, %c0_63] : memref<6272x64xbf16, #tpu.memory_space<vmem>>, vector<6272x64xbf16>
    %cst_64 = arith.constant dense<0.000000e+00> : vector<8x64xf32>
    %114 = tpu.matmul %112, %113, %cst_64 {dimension_numbers = #tpu.dot_dimension_numbers<[1], [0], [0], [1], [0, 0, 1, 1], [], []>} : vector<8x6272xbf16>, vector<6272x64xbf16>, vector<8x64xf32> -> vector<8x64xf32>
    %c0_65 = arith.constant 0 : index
    %c0_66 = arith.constant 0 : index
    %115 = vector.load %arg6[%c0_65, %c0_66] : memref<1x64xf32, #tpu.memory_space<vmem>>, vector<1x64xf32>
    %116 = vector.broadcast %115 : vector<1x64xf32> to vector<8x64xf32>
    %117 = arith.addf %114, %116 : vector<8x64xf32>
    %cst_67 = arith.constant 0.000000e+00 : f32
    %118 = vector.broadcast %cst_67 : f32 to vector<8x64xf32>
    %119 = arith.maximumf %117, %118 : vector<8x64xf32>
    %120 = arith.truncf %119 : vector<8x64xf32> to vector<8x64xbf16>
    %c0_68 = arith.constant 0 : index
    %c0_69 = arith.constant 0 : index
    %121 = vector.load %arg7[%c0_68, %c0_69] : memref<64x10xbf16, #tpu.memory_space<vmem>>, vector<64x10xbf16>
    %cst_70 = arith.constant dense<0.000000e+00> : vector<8x10xf32>
    %122 = tpu.matmul %120, %121, %cst_70 {dimension_numbers = #tpu.dot_dimension_numbers<[1], [0], [0], [1], [0, 0, 1, 1], [], []>} : vector<8x64xbf16>, vector<64x10xbf16>, vector<8x10xf32> -> vector<8x10xf32>
    %c0_71 = arith.constant 0 : index
    %c0_72 = arith.constant 0 : index
    %123 = vector.load %arg8[%c0_71, %c0_72] : memref<1x10xf32, #tpu.memory_space<vmem>>, vector<1x10xf32>
    %124 = vector.broadcast %123 : vector<1x10xf32> to vector<8x10xf32>
    %125 = arith.addf %122, %124 : vector<8x10xf32>
    %cst_73 = arith.constant dense<0xFF800000> : vector<8xf32>
    %126 = vector.multi_reduction <maximumf>, %125, %cst_73 [1] : vector<8x10xf32> to vector<8xf32>
    %127 = vector.shape_cast %126 : vector<8xf32> to vector<8x1xf32>
    %128 = vector.broadcast %127 : vector<8x1xf32> to vector<8x10xf32>
    %129 = arith.subf %125, %128 : vector<8x10xf32>
    %130 = math.exp %129 : vector<8x10xf32>
    %cst_74 = arith.constant dense<0.000000e+00> : vector<8xf32>
    %131 = vector.multi_reduction <add>, %130, %cst_74 [1] : vector<8x10xf32> to vector<8xf32>
    %132 = vector.shape_cast %131 : vector<8xf32> to vector<8x1xf32>
    %133 = math.log %132 : vector<8x1xf32>
    %134 = vector.broadcast %133 : vector<8x1xf32> to vector<8x10xf32>
    %135 = arith.subf %129, %134 : vector<8x10xf32>
    %c0_75 = arith.constant 0 : index
    %c0_76 = arith.constant 0 : index
    %136 = vector.load %arg9[%c0_75, %c0_76] : memref<8x10xf32, #tpu.memory_space<vmem>>, vector<8x10xf32>
    tpu.vector_store %arg9[%c0_75, %c0_76], %135 {strides = array<i32>} : memref<8x10xf32, #tpu.memory_space<vmem>>, vector<8x10xf32>,
    return
  }
  func.func @transform_0(%arg0: i32) -> (i32, i32) {
    %c0_i32 = arith.constant 0 : i32
    %c0_i32_0 = arith.constant 0 : i32
    return %arg0, %c0_i32 : i32, i32
  }
  func.func @transform_1(%arg0: i32) -> (i32, i32) {
    %c0_i32 = arith.constant 0 : i32
    %c0_i32_0 = arith.constant 0 : i32
    %c0_i32_1 = arith.constant 0 : i32
    return %c0_i32, %c0_i32_0 : i32, i32
  }
  func.func @transform_2(%arg0: i32) -> (i32, i32) {
    %c0_i32 = arith.constant 0 : i32
    %c0_i32_0 = arith.constant 0 : i32
    %c0_i32_1 = arith.constant 0 : i32
    return %c0_i32, %c0_i32_0 : i32, i32
  }
  func.func @transform_3(%arg0: i32) -> (i32, i32) {
    %c0_i32 = arith.constant 0 : i32
    %c0_i32_0 = arith.constant 0 : i32
    %c0_i32_1 = arith.constant 0 : i32
    return %c0_i32, %c0_i32_0 : i32, i32
  }
  func.func @transform_4(%arg0: i32) -> (i32, i32) {
    %c0_i32 = arith.constant 0 : i32
    %c0_i32_0 = arith.constant 0 : i32
    %c0_i32_1 = arith.constant 0 : i32
    return %c0_i32, %c0_i32_0 : i32, i32
  }
  func.func @transform_5(%arg0: i32) -> (i32, i32) {
    %c0_i32 = arith.constant 0 : i32
    %c0_i32_0 = arith.constant 0 : i32
    %c0_i32_1 = arith.constant 0 : i32
    return %c0_i32, %c0_i32_0 : i32, i32
  }
  func.func @transform_6(%arg0: i32) -> (i32, i32) {
    %c0_i32 = arith.constant 0 : i32
    %c0_i32_0 = arith.constant 0 : i32
    %c0_i32_1 = arith.constant 0 : i32
    return %c0_i32, %c0_i32_0 : i32, i32
  }
  func.func @transform_7(%arg0: i32) -> (i32, i32) {
    %c0_i32 = arith.constant 0 : i32
    %c0_i32_0 = arith.constant 0 : i32
    %c0_i32_1 = arith.constant 0 : i32
    return %c0_i32, %c0_i32_0 : i32, i32
  }
  func.func @transform_8(%arg0: i32) -> (i32, i32) {
    %c0_i32 = arith.constant 0 : i32
    %c0_i32_0 = arith.constant 0 : i32
    return %arg0, %c0_i32 : i32, i32
  }
}

</mosaic_0001>

<llo_original>
// kernel: mnist_forward.1
$region0: #{mnist_forward.1}
  #allocation0 [shape = 'u32[]', space=smem, size = 0x4, offset = 0x4, fixed_abs, tag = 'smem constant byte address 0x4 - core index']
  #allocation1 [shape = 'u32[72,128]{1,0:T(1,128)}', space=vmem, size = 0x9000, scoped, tag = 'internal scratch']
  #allocation2 [shape = 'bf16[8,6272]{1,0:T(8,128)(2,1)}', space=vmem, size = 0x18800, scoped, tag = 'scratch operand']
  %s0 = inlined_call_operand.vmem [shape: bf16[392,90], index: 0, kind: input, shape index: {}]
  %s1 = inlined_call_operand.vmem [shape: bf16[90,576], index: 1, kind: input, shape index: {}]
  %s2 = inlined_call_operand.vmem [shape: bf16[576,128], index: 2, kind: input, shape index: {}]
  %s3 = inlined_call_operand.vmem [shape: f32[1,128], index: 3, kind: input, shape index: {}]
  %s4 = inlined_call_operand.vmem [shape: bf16[6272,64], index: 4, kind: input, shape index: {}]
  %s5 = inlined_call_operand.vmem [shape: f32[1,64], index: 5, kind: input, shape index: {}]
  %s6 = inlined_call_operand.vmem [shape: bf16[64,10], index: 6, kind: input, shape index: {}]
  %s7 = inlined_call_operand.vmem [shape: f32[1,10], index: 7, kind: input, shape index: {}]
  %s8 = inlined_call_operand.vmem [shape: f32[8,10], index: 8, kind: output, shape index: {}]
  %s9 = sld [smem:[#allocation0]]
  $region42: #{mnist_forward.1} parent=0
    _
  %s11 = ssub.s32 1, %s9
  %s12 = scalar_select 0, %s11, %s9
  // Predicated region
  $region2: #{mnist_forward.1} parent=0 // pred_check
    _
  $region3: #{mnist_forward.1} parent=0 // pred_check_branch
    %14 = sbr.rel (0) target = $region5
  $region4: #{mnist_forward.1} parent=0 // pred_region
    _
  $region5: #{mnist_forward.1} parent=0 // pred_fallthru
    _
  // Predicated region
  $region6: #{mnist_forward.1} parent=0 // pred_check
    _
  $region7: #{mnist_forward.1} parent=0 // pred_check_branch
    %16 = sbr.rel (0) target = $region9
  $region8: #{mnist_forward.1} parent=0 // pred_region
    _
  $region9: #{mnist_forward.1} parent=0 // pred_fallthru
    _
  // Predicated region
  $region10: #{mnist_forward.1} parent=0 // pred_check
    _
  $region11: #{mnist_forward.1} parent=0 // pred_check_branch
    %18 = sbr.rel (0) target = $region13
  $region12: #{mnist_forward.1} parent=0 // pred_region
    _
  $region13: #{mnist_forward.1} parent=0 // pred_fallthru
    _
  // Predicated region
  $region14: #{mnist_forward.1} parent=0 // pred_check
    _
  $region15: #{mnist_forward.1} parent=0 // pred_check_branch
    %20 = sbr.rel (0) target = $region17
  $region16: #{mnist_forward.1} parent=0 // pred_region
    _
  $region17: #{mnist_forward.1} parent=0 // pred_fallthru
    _
  // Predicated region
  $region18: #{mnist_forward.1} parent=0 // pred_check
    _
  $region19: #{mnist_forward.1} parent=0 // pred_check_branch
    %22 = sbr.rel (0) target = $region21
  $region20: #{mnist_forward.1} parent=0 // pred_region
    _
  $region21: #{mnist_forward.1} parent=0 // pred_fallthru
    _
  // Predicated region
  $region22: #{mnist_forward.1} parent=0 // pred_check
    _
  $region23: #{mnist_forward.1} parent=0 // pred_check_branch
    %24 = sbr.rel (0) target = $region25
  $region24: #{mnist_forward.1} parent=0 // pred_region
    _
  $region25: #{mnist_forward.1} parent=0 // pred_fallthru
    _
  // Predicated region
  $region26: #{mnist_forward.1} parent=0 // pred_check
    _
  $region27: #{mnist_forward.1} parent=0 // pred_check_branch
    %26 = sbr.rel (0) target = $region29
  $region28: #{mnist_forward.1} parent=0 // pred_region
    _
  $region29: #{mnist_forward.1} parent=0 // pred_fallthru
    _
  // Predicated region
  $region30: #{mnist_forward.1} parent=0 // pred_check
    _
  $region31: #{mnist_forward.1} parent=0 // pred_check_branch
    %28 = sbr.rel (0) target = $region33
  $region32: #{mnist_forward.1} parent=0 // pred_region
    _
  $region33: #{mnist_forward.1} parent=0 // pred_fallthru
    _
  %v30 = vld [vmem:[%s0] sm:$0xf]
  %v31 = vld [vmem:[%s0 + $0x4] sm:$0xf]
  %v32 = vld [vmem:[%s0 + $0x8] sm:$0xf]
  %v33 = vld [vmem:[%s0 + $0xc] sm:$0xf]
  %v34 = vld [vmem:[%s0 + $0x10] sm:$0xf]
  %v35 = vld [vmem:[%s0 + $0x14] sm:$0xf]
  %v36 = vld [vmem:[%s0 + $0x18] sm:$0xf]
  %v37 = vld [vmem:[%s0 + $0x1c] sm:$0xf]
  %v38 = vld [vmem:[%s0 + $0x20] sm:$0xf]
  %v39 = vld [vmem:[%s0 + $0x24] sm:$0xf]
  %v40 = vld [vmem:[%s0 + $0x28] sm:$0xf]
  %v41 = vld [vmem:[%s0 + $0x2c] sm:$0xf]
  %v42 = vld [vmem:[%s0 + $0x30] sm:$0xf]
  %v43 = vld [vmem:[%s0 + $0x34] sm:$0xf]
  %v44 = vld [vmem:[%s0 + $0x38] sm:$0xf]
  %v45 = vld [vmem:[%s0 + $0x3c] sm:$0xf]
  %v46 = vld [vmem:[%s0 + $0x40] sm:$0xf]
  %v47 = vld [vmem:[%s0 + $0x44] sm:$0xf]
  %v48 = vld [vmem:[%s0 + $0x48] sm:$0xf]
  %v49 = vld [vmem:[%s0 + $0x4c] sm:$0xf]
  %v50 = vld [vmem:[%s0 + $0x50] sm:$0xf]
  %v51 = vld [vmem:[%s0 + $0x54] sm:$0xf]
  %v52 = vld [vmem:[%s0 + $0x58] sm:$0xf]
  %v53 = vld [vmem:[%s0 + $0x5c] sm:$0xf]
  %v54 = vld [vmem:[%s0 + $0x60] sm:$0xf]
  %v55 = vld [vmem:[%s0 + $0x64] sm:$0xf]
  %v56 = vld [vmem:[%s0 + $0x68] sm:$0xf]
  %v57 = vld [vmem:[%s0 + $0x6c] sm:$0xf]
  %v58 = vld [vmem:[%s0 + $0x70] sm:$0xf]
  %v59 = vld [vmem:[%s0 + $0x74] sm:$0xf]
  %v60 = vld [vmem:[%s0 + $0x78] sm:$0xf]
  %v61 = vld [vmem:[%s0 + $0x7c] sm:$0xf]
  %v62 = vld [vmem:[%s0 + $0x80] sm:$0xf]
  %v63 = vld [vmem:[%s0 + $0x84] sm:$0xf]
  %v64 = vld [vmem:[%s0 + $0x88] sm:$0xf]
  %v65 = vld [vmem:[%s0 + $0x8c] sm:$0xf]
  %v66 = vld [vmem:[%s0 + $0x90] sm:$0xf]
  %v67 = vld [vmem:[%s0 + $0x94] sm:$0xf]
  %v68 = vld [vmem:[%s0 + $0x98] sm:$0xf]
  %v69 = vld [vmem:[%s0 + $0x9c] sm:$0xf]
  %v70 = vld [vmem:[%s0 + $0xa0] sm:$0xf]
  %v71 = vld [vmem:[%s0 + $0xa4] sm:$0xf]
  %v72 = vld [vmem:[%s0 + $0xa8] sm:$0xf]
  %v73 = vld [vmem:[%s0 + $0xac] sm:$0xf]
  %v74 = vld [vmem:[%s0 + $0xb0] sm:$0xf]
  %v75 = vld [vmem:[%s0 + $0xb4] sm:$0xf]
  %v76 = vld [vmem:[%s0 + $0xb8] sm:$0xf]
  %v77 = vld [vmem:[%s0 + $0xbc] sm:$0xf]
  %v78 = vld [vmem:[%s0 + $0xc0] sm:$0xf]
  %v79 = vld [vmem:[%s1] sm:$0xff]
  %v80 = vld [vmem:[%s1 + $0x8] sm:$0xff]
  %v81 = vld [vmem:[%s1 + $0x10] sm:$0xf]
  %v82 = vld [vmem:[%s1 + $0x14] sm:$0xff]
  %v83 = vld [vmem:[%s1 + $0x1c] sm:$0xff]
  %v84 = vld [vmem:[%s1 + $0x24] sm:$0xf]
  %v85 = vld [vmem:[%s1 + $0x28] sm:$0xff]
  %v86 = vld [vmem:[%s1 + $0x30] sm:$0xff]
  %v87 = vld [vmem:[%s1 + $0x38] sm:$0xf]
  %v88 = vld [vmem:[%s1 + $0x3c] sm:$0xff]
  %v89 = vld [vmem:[%s1 + $0x44] sm:$0xff]
  %v90 = vld [vmem:[%s1 + $0x4c] sm:$0xf]
  %v91 = vld [vmem:[%s1 + $0x50] sm:$0xff]
  %v92 = vld [vmem:[%s1 + $0x58] sm:$0xff]
  %v93 = vld [vmem:[%s1 + $0x60] sm:$0xf]
  %v94 = vld [vmem:[%s1 + $0x64] sm:$0xff]
  %v95 = vld [vmem:[%s1 + $0x6c] sm:$0xff]
  %v96 = vld [vmem:[%s1 + $0x74] sm:$0xf]
  %v97 = vld [vmem:[%s1 + $0x78] sm:$0xff]
  %v98 = vld [vmem:[%s1 + $0x80] sm:$0xff]
  %v99 = vld [vmem:[%s1 + $0x88] sm:$0xf]
  %v100 = vld [vmem:[%s1 + $0x8c] sm:$0xff]
  %v101 = vld [vmem:[%s1 + $0x94] sm:$0xff]
  %v102 = vld [vmem:[%s1 + $0x9c] sm:$0xf]
  %v103 = vld [vmem:[%s1 + $0xa0] sm:$0xff]
  %v104 = vld [vmem:[%s1 + $0xa8] sm:$0xff]
  %v105 = vld [vmem:[%s1 + $0xb0] sm:$0xf]
  %v106 = vld [vmem:[%s1 + $0xb4] sm:$0xff]
  %v107 = vld [vmem:[%s1 + $0xbc] sm:$0xff]
  %v108 = vld [vmem:[%s1 + $0xc4] sm:$0xf]
  %v109 = vld [vmem:[%s1 + $0xc8] sm:$0xff]
  %v110 = vld [vmem:[%s1 + $0xd0] sm:$0xff]
  %v111 = vld [vmem:[%s1 + $0xd8] sm:$0xf]
  %v112 = vld [vmem:[%s1 + $0xdc] sm:$0x11]
  %v113 = vld [vmem:[%s1 + $0xe4] sm:$0x11]
  %v114 = vld [vmem:[%s1 + $0xec] sm:$0x1]
  %v164 = vunpack.c.l.b16 %v30
  %v165 = vunpack.c.l.b16 %v31
  %v166 = vunpack.c.l.b16 %v32
  %v167 = vunpack.c.l.b16 %v33
  %v168 = vunpack.c.l.b16 %v34
  %v169 = vunpack.c.l.b16 %v35
  %v170 = vunpack.c.l.b16 %v36
  %v171 = vunpack.c.l.b16 %v37
  %v172 = vunpack.c.l.b16 %v38
  %v173 = vunpack.c.l.b16 %v39
  %v174 = vunpack.c.l.b16 %v40
  %v175 = vunpack.c.l.b16 %v41
  %v176 = vunpack.c.l.b16 %v42
  %v177 = vunpack.c.l.b16 %v43
  %v178 = vunpack.c.l.b16 %v44
  %v179 = vunpack.c.l.b16 %v45
  %v180 = vunpack.c.l.b16 %v46
  %v181 = vunpack.c.l.b16 %v47
  %v182 = vunpack.c.l.b16 %v48
  %v183 = vunpack.c.l.b16 %v49
  %v184 = vunpack.c.l.b16 %v50
  %v185 = vunpack.c.l.b16 %v51
  %v186 = vunpack.c.l.b16 %v52
  %v187 = vunpack.c.l.b16 %v53
  %v188 = vunpack.c.l.b16 %v54
  %v189 = vunpack.c.l.b16 %v55
  %v190 = vunpack.c.l.b16 %v56
  %v191 = vunpack.c.l.b16 %v57
  %v192 = vunpack.c.l.b16 %v58
  %v193 = vunpack.c.l.b16 %v59
  %v194 = vunpack.c.l.b16 %v60
  %v195 = vunpack.c.l.b16 %v61
  %v196 = vunpack.c.l.b16 %v62
  %v197 = vunpack.c.l.b16 %v63
  %v198 = vunpack.c.l.b16 %v64
  %v199 = vunpack.c.l.b16 %v65
  %v200 = vunpack.c.l.b16 %v66
  %v201 = vunpack.c.l.b16 %v67
  %v202 = vunpack.c.l.b16 %v68
  %v203 = vunpack.c.l.b16 %v69
  %v204 = vunpack.c.l.b16 %v70
  %v205 = vunpack.c.l.b16 %v71
  %v206 = vunpack.c.l.b16 %v72
  %v207 = vunpack.c.l.b16 %v73
  %v208 = vunpack.c.l.b16 %v74
  %v209 = vunpack.c.l.b16 %v75
  %v210 = vunpack.c.l.b16 %v76
  %v211 = vunpack.c.l.b16 %v77
  %v212 = vunpack.c.l.b16 %v78
  %v213 = vpack.c.b16 %v165, %v164
  %v214 = vpack.c.b16 %v167, %v166
  %v215 = vpack.c.b16 %v169, %v168
  %v216 = vpack.c.b16 %v171, %v170
  %v217 = vpack.c.b16 %v173, %v172
  %v218 = vpack.c.b16 %v175, %v174
  %v219 = vpack.c.b16 %v177, %v176
  %v220 = vpack.c.b16 %v179, %v178
  %v221 = vpack.c.b16 %v181, %v180
  %v222 = vpack.c.b16 %v183, %v182
  %v223 = vpack.c.b16 %v185, %v184
  %v224 = vpack.c.b16 %v187, %v186
  %v225 = vpack.c.b16 %v189, %v188
  %v226 = vpack.c.b16 %v191, %v190
  %v227 = vpack.c.b16 %v193, %v192
  %v228 = vpack.c.b16 %v195, %v194
  %v229 = vpack.c.b16 %v197, %v196
  %v230 = vpack.c.b16 %v199, %v198
  %v231 = vpack.c.b16 %v201, %v200
  %v232 = vpack.c.b16 %v203, %v202
  %v233 = vpack.c.b16 %v205, %v204
  %v234 = vpack.c.b16 %v207, %v206
  %v235 = vpack.c.b16 %v209, %v208
  %v236 = vpack.c.b16 %v211, %v210
  %v237 = vpack.c.b16 %v212, %v212
  %v274 = vunpack.c.l.b16 %v79
  %v275 = vunpack.c.h.b16 %v79
  %v276 = vunpack.c.l.b16 %v80
  %v277 = vunpack.c.h.b16 %v80
  %v278 = vunpack.c.l.b16 %v81
  %v279 = vunpack.c.l.b16 %v82
  %v280 = vunpack.c.h.b16 %v82
  %v281 = vunpack.c.l.b16 %v83
  %v282 = vunpack.c.h.b16 %v83
  %v283 = vunpack.c.l.b16 %v84
  %v284 = vunpack.c.l.b16 %v85
  %v285 = vunpack.c.h.b16 %v85
  %v286 = vunpack.c.l.b16 %v86
  %v287 = vunpack.c.h.b16 %v86
  %v288 = vunpack.c.l.b16 %v87
  %v289 = vunpack.c.l.b16 %v88
  %v290 = vunpack.c.h.b16 %v88
  %v291 = vunpack.c.l.b16 %v89
  %v292 = vunpack.c.h.b16 %v89
  %v293 = vunpack.c.l.b16 %v90
  %v294 = vunpack.c.l.b16 %v91
  %v295 = vunpack.c.h.b16 %v91
  %v296 = vunpack.c.l.b16 %v92
  %v297 = vunpack.c.h.b16 %v92
  %v298 = vunpack.c.l.b16 %v93
  %v299 = vunpack.c.l.b16 %v94
  %v300 = vunpack.c.h.b16 %v94
  %v301 = vunpack.c.l.b16 %v95
  %v302 = vunpack.c.h.b16 %v95
  %v303 = vunpack.c.l.b16 %v96
  %v304 = vunpack.c.l.b16 %v97
  %v305 = vunpack.c.h.b16 %v97
  %v306 = vunpack.c.l.b16 %v98
  %v307 = vunpack.c.h.b16 %v98
  %v308 = vunpack.c.l.b16 %v99
  %v309 = vunpack.c.l.b16 %v100
  %v310 = vunpack.c.h.b16 %v100
  %v311 = vunpack.c.l.b16 %v101
  %v312 = vunpack.c.h.b16 %v101
  %v313 = vunpack.c.l.b16 %v102
  %v314 = vunpack.c.l.b16 %v103
  %v315 = vunpack.c.h.b16 %v103
  %v316 = vunpack.c.l.b16 %v104
  %v317 = vunpack.c.h.b16 %v104
  %v318 = vunpack.c.l.b16 %v105
  %v319 = vunpack.c.l.b16 %v106
  %v320 = vunpack.c.h.b16 %v106
  %v321 = vunpack.c.l.b16 %v107
  %v322 = vunpack.c.h.b16 %v107
  %v323 = vunpack.c.l.b16 %v108
  %v324 = vunpack.c.l.b16 %v109
  %v325 = vunpack.c.h.b16 %v109
  %v326 = vunpack.c.l.b16 %v110
  %v327 = vunpack.c.h.b16 %v110
  %v328 = vunpack.c.l.b16 %v111
  %v329 = vunpack.c.l.b16 %v112
  %v330 = vunpack.c.h.b16 %v112
  %v331 = vunpack.c.l.b16 %v113
  %v332 = vunpack.c.h.b16 %v113
  %v333 = vunpack.c.l.b16 %v114
  %v334 = vpack.c.b16 %v279, %v274
  %v335 = vpack.c.b16 %v280, %v275
  %v336 = vpack.c.b16 %v281, %v276
  %v337 = vpack.c.b16 %v282, %v277
  %v338 = vpack.c.b16 %v283, %v278
  %v339 = vpack.c.b16 %v289, %v284
  %v340 = vpack.c.b16 %v290, %v285
  %v341 = vpack.c.b16 %v291, %v286
  %v342 = vpack.c.b16 %v292, %v287
  %v343 = vpack.c.b16 %v293, %v288
  %v344 = vpack.c.b16 %v299, %v294
  %v345 = vpack.c.b16 %v300, %v295
  %v346 = vpack.c.b16 %v301, %v296
  %v347 = vpack.c.b16 %v302, %v297
  %v348 = vpack.c.b16 %v303, %v298
  %v349 = vpack.c.b16 %v309, %v304
  %v350 = vpack.c.b16 %v310, %v305
  %v351 = vpack.c.b16 %v311, %v306
  %v352 = vpack.c.b16 %v312, %v307
  %v353 = vpack.c.b16 %v313, %v308
  %v354 = vpack.c.b16 %v319, %v314
  %v355 = vpack.c.b16 %v320, %v315
  %v356 = vpack.c.b16 %v321, %v316
  %v357 = vpack.c.b16 %v322, %v317
  %v358 = vpack.c.b16 %v323, %v318
  %v359 = vpack.c.b16 %v329, %v324
  %v360 = vpack.c.b16 %v330, %v325
  %v361 = vpack.c.b16 %v331, %v326
  %v362 = vpack.c.b16 %v332, %v327
  %v363 = vpack.c.b16 %v333, %v328
  %vm389 = vcmask 736256
  %v391 = vsel %vm389, %v213, 0
  %v394 = vsel %vm389, %v214, 0
  %v397 = vsel %vm389, %v215, 0
  %v400 = vsel %vm389, %v216, 0
  %v403 = vsel %vm389, %v217, 0
  %v406 = vsel %vm389, %v218, 0
  %v409 = vsel %vm389, %v219, 0
  %v412 = vsel %vm389, %v220, 0
  %v415 = vsel %vm389, %v221, 0
  %v418 = vsel %vm389, %v222, 0
  %v421 = vsel %vm389, %v223, 0
  %v424 = vsel %vm389, %v224, 0
  %v427 = vsel %vm389, %v225, 0
  %v430 = vsel %vm389, %v226, 0
  %v433 = vsel %vm389, %v227, 0
  %v436 = vsel %vm389, %v228, 0
  %v439 = vsel %vm389, %v229, 0
  %v442 = vsel %vm389, %v230, 0
  %v445 = vsel %vm389, %v231, 0
  %v448 = vsel %vm389, %v232, 0
  %v451 = vsel %vm389, %v233, 0
  %v454 = vsel %vm389, %v234, 0
  %v457 = vsel %vm389, %v235, 0
  %v460 = vsel %vm389, %v236, 0
  %v463 = vsel %vm389, %v237, 0
  %vm465 = vcmask 1044480
  %v467 = vsel %vm465, %v359, 0
  %v470 = vsel %vm465, %v360, 0
  %v473 = vsel %vm465, %v361, 0
  %v476 = vsel %vm465, %v362, 0
  %v479 = vsel %vm465, %v363, 0
  %481 = vmatpush.bf16.msra.mxu0 0
  %482 = vmatpush.bf16.msra.mxu0 0
  %483 = vmatpush.bf16.msra.mxu0 %v467
  %484 = vmatpush.bf16.msra.mxu0 %v354
  %485 = vmatpush.bf16.msra.mxu0 %v349
  %486 = vmatpush.bf16.msra.mxu0 %v344
  %487 = vmatpush.bf16.msra.mxu0 %v339
  %488 = vmatpush.bf16.msra.mxu0 %v334
  %489 = vmatmul.bf16.gmra.mxu0 %v391
  %v490 = vpop.f32.mrf.mxu0
  %v491 = vadd.f32 0.0, %v490
  %v492 = vpop.f32.mrf.mxu0
  %v493 = vadd.f32 0.0, %v492
  %494 = vmatmul.bf16.gmra.mxu0 %v394
  %v495 = vpop.f32.mrf.mxu0
  %v496 = vadd.f32 0.0, %v495
  %v497 = vpop.f32.mrf.mxu0
  %v498 = vadd.f32 0.0, %v497
  %499 = vmatmul.bf16.gmra.mxu0 %v397
  %v500 = vpop.f32.mrf.mxu0
  %v501 = vadd.f32 0.0, %v500
  %v502 = vpop.f32.mrf.mxu0
  %v503 = vadd.f32 0.0, %v502
  %504 = vmatmul.bf16.gmra.mxu0 %v400
  %v505 = vpop.f32.mrf.mxu0
  %v506 = vadd.f32 0.0, %v505
  %v507 = vpop.f32.mrf.mxu0
  %v508 = vadd.f32 0.0, %v507
  %509 = vmatmul.bf16.gmra.mxu0 %v403
  %v510 = vpop.f32.mrf.mxu0
  %v511 = vadd.f32 0.0, %v510
  %v512 = vpop.f32.mrf.mxu0
  %v513 = vadd.f32 0.0, %v512
  %514 = vmatmul.bf16.gmra.mxu0 %v406
  %v515 = vpop.f32.mrf.mxu0
  %v516 = vadd.f32 0.0, %v515
  %v517 = vpop.f32.mrf.mxu0
  %v518 = vadd.f32 0.0, %v517
  %519 = vmatmul.bf16.gmra.mxu0 %v409
  %v520 = vpop.f32.mrf.mxu0
  %v521 = vadd.f32 0.0, %v520
  %v522 = vpop.f32.mrf.mxu0
  %v523 = vadd.f32 0.0, %v522
  %524 = vmatmul.bf16.gmra.mxu0 %v412
  %v525 = vpop.f32.mrf.mxu0
  %v526 = vadd.f32 0.0, %v525
  %v527 = vpop.f32.mrf.mxu0
  %v528 = vadd.f32 0.0, %v527
  %529 = vmatmul.bf16.gmra.mxu0 %v415
  %v530 = vpop.f32.mrf.mxu0
  %v531 = vadd.f32 0.0, %v530
  %v532 = vpop.f32.mrf.mxu0
  %v533 = vadd.f32 0.0, %v532
  %534 = vmatmul.bf16.gmra.mxu0 %v418
  %v535 = vpop.f32.mrf.mxu0
  %v536 = vadd.f32 0.0, %v535
  %v537 = vpop.f32.mrf.mxu0
  %v538 = vadd.f32 0.0, %v537
  %539 = vmatmul.bf16.gmra.mxu0 %v421
  %v540 = vpop.f32.mrf.mxu0
  %v541 = vadd.f32 0.0, %v540
  %v542 = vpop.f32.mrf.mxu0
  %v543 = vadd.f32 0.0, %v542
  %544 = vmatmul.bf16.gmra.mxu0 %v424
  %v545 = vpop.f32.mrf.mxu0
  %v546 = vadd.f32 0.0, %v545
  %v547 = vpop.f32.mrf.mxu0
  %v548 = vadd.f32 0.0, %v547
  %549 = vmatmul.bf16.gmra.mxu0 %v427
  %v550 = vpop.f32.mrf.mxu0
  %v551 = vadd.f32 0.0, %v550
  %v552 = vpop.f32.mrf.mxu0
  %v553 = vadd.f32 0.0, %v552
  %554 = vmatmul.bf16.gmra.mxu0 %v430
  %v555 = vpop.f32.mrf.mxu0
  %v556 = vadd.f32 0.0, %v555
  %v557 = vpop.f32.mrf.mxu0
  %v558 = vadd.f32 0.0, %v557
  %559 = vmatmul.bf16.gmra.mxu0 %v433
  %v560 = vpop.f32.mrf.mxu0
  %v561 = vadd.f32 0.0, %v560
  %v562 = vpop.f32.mrf.mxu0
  %v563 = vadd.f32 0.0, %v562
  %564 = vmatmul.bf16.gmra.mxu0 %v436
  %v565 = vpop.f32.mrf.mxu0
  %v566 = vadd.f32 0.0, %v565
  %v567 = vpop.f32.mrf.mxu0
  %v568 = vadd.f32 0.0, %v567
  %569 = vmatmul.bf16.gmra.mxu0 %v439
  %v570 = vpop.f32.mrf.mxu0
  %v571 = vadd.f32 0.0, %v570
  %v572 = vpop.f32.mrf.mxu0
  %v573 = vadd.f32 0.0, %v572
  %574 = vmatmul.bf16.gmra.mxu0 %v442
  %v575 = vpop.f32.mrf.mxu0
  %v576 = vadd.f32 0.0, %v575
  %v577 = vpop.f32.mrf.mxu0
  %v578 = vadd.f32 0.0, %v577
  %579 = vmatmul.bf16.gmra.mxu0 %v445
  %v580 = vpop.f32.mrf.mxu0
  %v581 = vadd.f32 0.0, %v580
  %v582 = vpop.f32.mrf.mxu0
  %v583 = vadd.f32 0.0, %v582
  %584 = vmatmul.bf16.gmra.mxu0 %v448
  %v585 = vpop.f32.mrf.mxu0
  %v586 = vadd.f32 0.0, %v585
  %v587 = vpop.f32.mrf.mxu0
  %v588 = vadd.f32 0.0, %v587
  %589 = vmatmul.bf16.gmra.mxu0 %v451
  %v590 = vpop.f32.mrf.mxu0
  %v591 = vadd.f32 0.0, %v590
  %v592 = vpop.f32.mrf.mxu0
  %v593 = vadd.f32 0.0, %v592
  %594 = vmatmul.bf16.gmra.mxu0 %v454
  %v595 = vpop.f32.mrf.mxu0
  %v596 = vadd.f32 0.0, %v595
  %v597 = vpop.f32.mrf.mxu0
  %v598 = vadd.f32 0.0, %v597
  %599 = vmatmul.bf16.gmra.mxu0 %v457
  %v600 = vpop.f32.mrf.mxu0
  %v601 = vadd.f32 0.0, %v600
  %v602 = vpop.f32.mrf.mxu0
  %v603 = vadd.f32 0.0, %v602
  %604 = vmatmul.bf16.gmra.mxu0 %v460
  %v605 = vpop.f32.mrf.mxu0
  %v606 = vadd.f32 0.0, %v605
  %v607 = vpop.f32.mrf.mxu0
  %v608 = vadd.f32 0.0, %v607
  %609 = vmatmul.bf16.gmra.mxu0 %v463
  %v610 = vpop.f32.mrf.mxu0
  %v611 = vadd.f32 0.0, %v610
  %v612 = vpop.f32.mrf.mxu0
  %613 = vdwg.mxu0
  %614 = vmatpush.bf16.msra.mxu0 0
  %615 = vmatpush.bf16.msra.mxu0 0
  %616 = vmatpush.bf16.msra.mxu0 %v470
  %617 = vmatpush.bf16.msra.mxu0 %v355
  %618 = vmatpush.bf16.msra.mxu0 %v350
  %619 = vmatpush.bf16.msra.mxu0 %v345
  %620 = vmatpush.bf16.msra.mxu0 %v340
  %621 = vmatpush.bf16.msra.mxu0 %v335
  %622 = vmatmul.bf16.gmra.mxu0 %v391
  %v623 = vpop.f32.mrf.mxu0
  %v624 = vadd.f32 0.0, %v623
  %v625 = vpop.f32.mrf.mxu0
  %v626 = vadd.f32 0.0, %v625
  %627 = vmatmul.bf16.gmra.mxu0 %v394
  %v628 = vpop.f32.mrf.mxu0
  %v629 = vadd.f32 0.0, %v628
  %v630 = vpop.f32.mrf.mxu0
  %v631 = vadd.f32 0.0, %v630
  %632 = vmatmul.bf16.gmra.mxu0 %v397
  %v633 = vpop.f32.mrf.mxu0
  %v634 = vadd.f32 0.0, %v633
  %v635 = vpop.f32.mrf.mxu0
  %v636 = vadd.f32 0.0, %v635
  %637 = vmatmul.bf16.gmra.mxu0 %v400
  %v638 = vpop.f32.mrf.mxu0
  %v639 = vadd.f32 0.0, %v638
  %v640 = vpop.f32.mrf.mxu0
  %v641 = vadd.f32 0.0, %v640
  %642 = vmatmul.bf16.gmra.mxu0 %v403
  %v643 = vpop.f32.mrf.mxu0
  %v644 = vadd.f32 0.0, %v643
  %v645 = vpop.f32.mrf.mxu0
  %v646 = vadd.f32 0.0, %v645
  %647 = vmatmul.bf16.gmra.mxu0 %v406
  %v648 = vpop.f32.mrf.mxu0
  %v649 = vadd.f32 0.0, %v648
  %v650 = vpop.f32.mrf.mxu0
  %v651 = vadd.f32 0.0, %v650
  %652 = vmatmul.bf16.gmra.mxu0 %v409
  %v653 = vpop.f32.mrf.mxu0
  %v654 = vadd.f32 0.0, %v653
  %v655 = vpop.f32.mrf.mxu0
  %v656 = vadd.f32 0.0, %v655
  %657 = vmatmul.bf16.gmra.mxu0 %v412
  %v658 = vpop.f32.mrf.mxu0
  %v659 = vadd.f32 0.0, %v658
  %v660 = vpop.f32.mrf.mxu0
  %v661 = vadd.f32 0.0, %v660
  %662 = vmatmul.bf16.gmra.mxu0 %v415
  %v663 = vpop.f32.mrf.mxu0
  %v664 = vadd.f32 0.0, %v663
  %v665 = vpop.f32.mrf.mxu0
  %v666 = vadd.f32 0.0, %v665
  %667 = vmatmul.bf16.gmra.mxu0 %v418
  %v668 = vpop.f32.mrf.mxu0
  %v669 = vadd.f32 0.0, %v668
  %v670 = vpop.f32.mrf.mxu0
  %v671 = vadd.f32 0.0, %v670
  %672 = vmatmul.bf16.gmra.mxu0 %v421
  %v673 = vpop.f32.mrf.mxu0
  %v674 = vadd.f32 0.0, %v673
  %v675 = vpop.f32.mrf.mxu0
  %v676 = vadd.f32 0.0, %v675
  %677 = vmatmul.bf16.gmra.mxu0 %v424
  %v678 = vpop.f32.mrf.mxu0
  %v679 = vadd.f32 0.0, %v678
  %v680 = vpop.f32.mrf.mxu0
  %v681 = vadd.f32 0.0, %v680
  %682 = vmatmul.bf16.gmra.mxu0 %v427
  %v683 = vpop.f32.mrf.mxu0
  %v684 = vadd.f32 0.0, %v683
  %v685 = vpop.f32.mrf.mxu0
  %v686 = vadd.f32 0.0, %v685
  %687 = vmatmul.bf16.gmra.mxu0 %v430
  %v688 = vpop.f32.mrf.mxu0
  %v689 = vadd.f32 0.0, %v688
  %v690 = vpop.f32.mrf.mxu0
  %v691 = vadd.f32 0.0, %v690
  %692 = vmatmul.bf16.gmra.mxu0 %v433
  %v693 = vpop.f32.mrf.mxu0
  %v694 = vadd.f32 0.0, %v693
  %v695 = vpop.f32.mrf.mxu0
  %v696 = vadd.f32 0.0, %v695
  %697 = vmatmul.bf16.gmra.mxu0 %v436
  %v698 = vpop.f32.mrf.mxu0
  %v699 = vadd.f32 0.0, %v698
  %v700 = vpop.f32.mrf.mxu0
  %v701 = vadd.f32 0.0, %v700
  %702 = vmatmul.bf16.gmra.mxu0 %v439
  %v703 = vpop.f32.mrf.mxu0
  %v704 = vadd.f32 0.0, %v703
  %v705 = vpop.f32.mrf.mxu0
  %v706 = vadd.f32 0.0, %v705
  %707 = vmatmul.bf16.gmra.mxu0 %v442
  %v708 = vpop.f32.mrf.mxu0
  %v709 = vadd.f32 0.0, %v708
  %v710 = vpop.f32.mrf.mxu0
  %v711 = vadd.f32 0.0, %v710
  %712 = vmatmul.bf16.gmra.mxu0 %v445
  %v713 = vpop.f32.mrf.mxu0
  %v714 = vadd.f32 0.0, %v713
  %v715 = vpop.f32.mrf.mxu0
  %v716 = vadd.f32 0.0, %v715
  %717 = vmatmul.bf16.gmra.mxu0 %v448
  %v718 = vpop.f32.mrf.mxu0
  %v719 = vadd.f32 0.0, %v718
  %v720 = vpop.f32.mrf.mxu0
  %v721 = vadd.f32 0.0, %v720
  %722 = vmatmul.bf16.gmra.mxu0 %v451
  %v723 = vpop.f32.mrf.mxu0
  %v724 = vadd.f32 0.0, %v723
  %v725 = vpop.f32.mrf.mxu0
  %v726 = vadd.f32 0.0, %v725
  %727 = vmatmul.bf16.gmra.mxu0 %v454
  %v728 = vpop.f32.mrf.mxu0
  %v729 = vadd.f32 0.0, %v728
  %v730 = vpop.f32.mrf.mxu0
  %v731 = vadd.f32 0.0, %v730
  %732 = vmatmul.bf16.gmra.mxu0 %v457
  %v733 = vpop.f32.mrf.mxu0
  %v734 = vadd.f32 0.0, %v733
  %v735 = vpop.f32.mrf.mxu0
  %v736 = vadd.f32 0.0, %v735
  %737 = vmatmul.bf16.gmra.mxu0 %v460
  %v738 = vpop.f32.mrf.mxu0
  %v739 = vadd.f32 0.0, %v738
  %v740 = vpop.f32.mrf.mxu0
  %v741 = vadd.f32 0.0, %v740
  %742 = vmatmul.bf16.gmra.mxu0 %v463
  %v743 = vpop.f32.mrf.mxu0
  %v744 = vadd.f32 0.0, %v743
  %v745 = vpop.f32.mrf.mxu0
  %746 = vdwg.mxu0
  %747 = vmatpush.bf16.msra.mxu0 0
  %748 = vmatpush.bf16.msra.mxu0 0
  %749 = vmatpush.bf16.msra.mxu0 %v473
  %750 = vmatpush.bf16.msra.mxu0 %v356
  %751 = vmatpush.bf16.msra.mxu0 %v351
  %752 = vmatpush.bf16.msra.mxu0 %v346
  %753 = vmatpush.bf16.msra.mxu0 %v341
  %754 = vmatpush.bf16.msra.mxu0 %v336
  %755 = vmatmul.bf16.gmra.mxu0 %v391
  %v756 = vpop.f32.mrf.mxu0
  %v757 = vadd.f32 0.0, %v756
  %v758 = vpop.f32.mrf.mxu0
  %v759 = vadd.f32 0.0, %v758
  %760 = vmatmul.bf16.gmra.mxu0 %v394
  %v761 = vpop.f32.mrf.mxu0
  %v762 = vadd.f32 0.0, %v761
  %v763 = vpop.f32.mrf.mxu0
  %v764 = vadd.f32 0.0, %v763
  %765 = vmatmul.bf16.gmra.mxu0 %v397
  %v766 = vpop.f32.mrf.mxu0
  %v767 = vadd.f32 0.0, %v766
  %v768 = vpop.f32.mrf.mxu0
  %v769 = vadd.f32 0.0, %v768
  %770 = vmatmul.bf16.gmra.mxu0 %v400
  %v771 = vpop.f32.mrf.mxu0
  %v772 = vadd.f32 0.0, %v771
  %v773 = vpop.f32.mrf.mxu0
  %v774 = vadd.f32 0.0, %v773
  %775 = vmatmul.bf16.gmra.mxu0 %v403
  %v776 = vpop.f32.mrf.mxu0
  %v777 = vadd.f32 0.0, %v776
  %v778 = vpop.f32.mrf.mxu0
  %v779 = vadd.f32 0.0, %v778
  %780 = vmatmul.bf16.gmra.mxu0 %v406
  %v781 = vpop.f32.mrf.mxu0
  %v782 = vadd.f32 0.0, %v781
  %v783 = vpop.f32.mrf.mxu0
  %v784 = vadd.f32 0.0, %v783
  %785 = vmatmul.bf16.gmra.mxu0 %v409
  %v786 = vpop.f32.mrf.mxu0
  %v787 = vadd.f32 0.0, %v786
  %v788 = vpop.f32.mrf.mxu0
  %v789 = vadd.f32 0.0, %v788
  %790 = vmatmul.bf16.gmra.mxu0 %v412
  %v791 = vpop.f32.mrf.mxu0
  %v792 = vadd.f32 0.0, %v791
  %v793 = vpop.f32.mrf.mxu0
  %v794 = vadd.f32 0.0, %v793
  %795 = vmatmul.bf16.gmra.mxu0 %v415
  %v796 = vpop.f32.mrf.mxu0
  %v797 = vadd.f32 0.0, %v796
  %v798 = vpop.f32.mrf.mxu0
  %v799 = vadd.f32 0.0, %v798
  %800 = vmatmul.bf16.gmra.mxu0 %v418
  %v801 = vpop.f32.mrf.mxu0
  %v802 = vadd.f32 0.0, %v801
  %v803 = vpop.f32.mrf.mxu0
  %v804 = vadd.f32 0.0, %v803
  %805 = vmatmul.bf16.gmra.mxu0 %v421
  %v806 = vpop.f32.mrf.mxu0
  %v807 = vadd.f32 0.0, %v806
  %v808 = vpop.f32.mrf.mxu0
  %v809 = vadd.f32 0.0, %v808
  %810 = vmatmul.bf16.gmra.mxu0 %v424
  %v811 = vpop.f32.mrf.mxu0
  %v812 = vadd.f32 0.0, %v811
  %v813 = vpop.f32.mrf.mxu0
  %v814 = vadd.f32 0.0, %v813
  %815 = vmatmul.bf16.gmra.mxu0 %v427
  %v816 = vpop.f32.mrf.mxu0
  %v817 = vadd.f32 0.0, %v816
  %v818 = vpop.f32.mrf.mxu0
  %v819 = vadd.f32 0.0, %v818
  %820 = vmatmul.bf16.gmra.mxu0 %v430
  %v821 = vpop.f32.mrf.mxu0
  %v822 = vadd.f32 0.0, %v821
  %v823 = vpop.f32.mrf.mxu0
  %v824 = vadd.f32 0.0, %v823
  %825 = vmatmul.bf16.gmra.mxu0 %v433
  %v826 = vpop.f32.mrf.mxu0
  %v827 = vadd.f32 0.0, %v826
  %v828 = vpop.f32.mrf.mxu0
  %v829 = vadd.f32 0.0, %v828
  %830 = vmatmul.bf16.gmra.mxu0 %v436
  %v831 = vpop.f32.mrf.mxu0
  %v832 = vadd.f32 0.0, %v831
  %v833 = vpop.f32.mrf.mxu0
  %v834 = vadd.f32 0.0, %v833
  %835 = vmatmul.bf16.gmra.mxu0 %v439
  %v836 = vpop.f32.mrf.mxu0
  %v837 = vadd.f32 0.0, %v836
  %v838 = vpop.f32.mrf.mxu0
  %v839 = vadd.f32 0.0, %v838
  %840 = vmatmul.bf16.gmra.mxu0 %v442
  %v841 = vpop.f32.mrf.mxu0
  %v842 = vadd.f32 0.0, %v841
  %v843 = vpop.f32.mrf.mxu0
  %v844 = vadd.f32 0.0, %v843
  %845 = vmatmul.bf16.gmra.mxu0 %v445
  %v846 = vpop.f32.mrf.mxu0
  %v847 = vadd.f32 0.0, %v846
  %v848 = vpop.f32.mrf.mxu0
  %v849 = vadd.f32 0.0, %v848
  %850 = vmatmul.bf16.gmra.mxu0 %v448
  %v851 = vpop.f32.mrf.mxu0
  %v852 = vadd.f32 0.0, %v851
  %v853 = vpop.f32.mrf.mxu0
  %v854 = vadd.f32 0.0, %v853
  %855 = vmatmul.bf16.gmra.mxu0 %v451
  %v856 = vpop.f32.mrf.mxu0
  %v857 = vadd.f32 0.0, %v856
  %v858 = vpop.f32.mrf.mxu0
  %v859 = vadd.f32 0.0, %v858
  %860 = vmatmul.bf16.gmra.mxu0 %v454
  %v861 = vpop.f32.mrf.mxu0
  %v862 = vadd.f32 0.0, %v861
  %v863 = vpop.f32.mrf.mxu0
  %v864 = vadd.f32 0.0, %v863
  %865 = vmatmul.bf16.gmra.mxu0 %v457
  %v866 = vpop.f32.mrf.mxu0
  %v867 = vadd.f32 0.0, %v866
  %v868 = vpop.f32.mrf.mxu0
  %v869 = vadd.f32 0.0, %v868
  %870 = vmatmul.bf16.gmra.mxu0 %v460
  %v871 = vpop.f32.mrf.mxu0
  %v872 = vadd.f32 0.0, %v871
  %v873 = vpop.f32.mrf.mxu0
  %v874 = vadd.f32 0.0, %v873
  %875 = vmatmul.bf16.gmra.mxu0 %v463
  %v876 = vpop.f32.mrf.mxu0
  %v877 = vadd.f32 0.0, %v876
  %v878 = vpop.f32.mrf.mxu0
  %879 = vdwg.mxu0
  %880 = vmatpush.bf16.msra.mxu0 0
  %881 = vmatpush.bf16.msra.mxu0 0
  %882 = vmatpush.bf16.msra.mxu0 %v476
  %883 = vmatpush.bf16.msra.mxu0 %v357
  %884 = vmatpush.bf16.msra.mxu0 %v352
  %885 = vmatpush.bf16.msra.mxu0 %v347
  %886 = vmatpush.bf16.msra.mxu0 %v342
  %887 = vmatpush.bf16.msra.mxu0 %v337
  %888 = vmatmul.bf16.gmra.mxu0 %v391
  %v889 = vpop.f32.mrf.mxu0
  %v890 = vadd.f32 0.0, %v889
  %v891 = vpop.f32.mrf.mxu0
  %v892 = vadd.f32 0.0, %v891
  %893 = vmatmul.bf16.gmra.mxu0 %v394
  %v894 = vpop.f32.mrf.mxu0
  %v895 = vadd.f32 0.0, %v894
  %v896 = vpop.f32.mrf.mxu0
  %v897 = vadd.f32 0.0, %v896
  %898 = vmatmul.bf16.gmra.mxu0 %v397
  %v899 = vpop.f32.mrf.mxu0
  %v900 = vadd.f32 0.0, %v899
  %v901 = vpop.f32.mrf.mxu0
  %v902 = vadd.f32 0.0, %v901
  %903 = vmatmul.bf16.gmra.mxu0 %v400
  %v904 = vpop.f32.mrf.mxu0
  %v905 = vadd.f32 0.0, %v904
  %v906 = vpop.f32.mrf.mxu0
  %v907 = vadd.f32 0.0, %v906
  %908 = vmatmul.bf16.gmra.mxu0 %v403
  %v909 = vpop.f32.mrf.mxu0
  %v910 = vadd.f32 0.0, %v909
  %v911 = vpop.f32.mrf.mxu0
  %v912 = vadd.f32 0.0, %v911
  %913 = vmatmul.bf16.gmra.mxu0 %v406
  %v914 = vpop.f32.mrf.mxu0
  %v915 = vadd.f32 0.0, %v914
  %v916 = vpop.f32.mrf.mxu0
  %v917 = vadd.f32 0.0, %v916
  %918 = vmatmul.bf16.gmra.mxu0 %v409
  %v919 = vpop.f32.mrf.mxu0
  %v920 = vadd.f32 0.0, %v919
  %v921 = vpop.f32.mrf.mxu0
  %v922 = vadd.f32 0.0, %v921
  %923 = vmatmul.bf16.gmra.mxu0 %v412
  %v924 = vpop.f32.mrf.mxu0
  %v925 = vadd.f32 0.0, %v924
  %v926 = vpop.f32.mrf.mxu0
  %v927 = vadd.f32 0.0, %v926
  %928 = vmatmul.bf16.gmra.mxu0 %v415
  %v929 = vpop.f32.mrf.mxu0
  %v930 = vadd.f32 0.0, %v929
  %v931 = vpop.f32.mrf.mxu0
  %v932 = vadd.f32 0.0, %v931
  %933 = vmatmul.bf16.gmra.mxu0 %v418
  %v934 = vpop.f32.mrf.mxu0
  %v935 = vadd.f32 0.0, %v934
  %v936 = vpop.f32.mrf.mxu0
  %v937 = vadd.f32 0.0, %v936
  %938 = vmatmul.bf16.gmra.mxu0 %v421
  %v939 = vpop.f32.mrf.mxu0
  %v940 = vadd.f32 0.0, %v939
  %v941 = vpop.f32.mrf.mxu0
  %v942 = vadd.f32 0.0, %v941
  %943 = vmatmul.bf16.gmra.mxu0 %v424
  %v944 = vpop.f32.mrf.mxu0
  %v945 = vadd.f32 0.0, %v944
  %v946 = vpop.f32.mrf.mxu0
  %v947 = vadd.f32 0.0, %v946
  %948 = vmatmul.bf16.gmra.mxu0 %v427
  %v949 = vpop.f32.mrf.mxu0
  %v950 = vadd.f32 0.0, %v949
  %v951 = vpop.f32.mrf.mxu0
  %v952 = vadd.f32 0.0, %v951
  %953 = vmatmul.bf16.gmra.mxu0 %v430
  %v954 = vpop.f32.mrf.mxu0
  %v955 = vadd.f32 0.0, %v954
  %v956 = vpop.f32.mrf.mxu0
  %v957 = vadd.f32 0.0, %v956
  %958 = vmatmul.bf16.gmra.mxu0 %v433
  %v959 = vpop.f32.mrf.mxu0
  %v960 = vadd.f32 0.0, %v959
  %v961 = vpop.f32.mrf.mxu0
  %v962 = vadd.f32 0.0, %v961
  %963 = vmatmul.bf16.gmra.mxu0 %v436
  %v964 = vpop.f32.mrf.mxu0
  %v965 = vadd.f32 0.0, %v964
  %v966 = vpop.f32.mrf.mxu0
  %v967 = vadd.f32 0.0, %v966
  %968 = vmatmul.bf16.gmra.mxu0 %v439
  %v969 = vpop.f32.mrf.mxu0
  %v970 = vadd.f32 0.0, %v969
  %v971 = vpop.f32.mrf.mxu0
  %v972 = vadd.f32 0.0, %v971
  %973 = vmatmul.bf16.gmra.mxu0 %v442
  %v974 = vpop.f32.mrf.mxu0
  %v975 = vadd.f32 0.0, %v974
  %v976 = vpop.f32.mrf.mxu0
  %v977 = vadd.f32 0.0, %v976
  %978 = vmatmul.bf16.gmra.mxu0 %v445
  %v979 = vpop.f32.mrf.mxu0
  %v980 = vadd.f32 0.0, %v979
  %v981 = vpop.f32.mrf.mxu0
  %v982 = vadd.f32 0.0, %v981
  %983 = vmatmul.bf16.gmra.mxu0 %v448
  %v984 = vpop.f32.mrf.mxu0
  %v985 = vadd.f32 0.0, %v984
  %v986 = vpop.f32.mrf.mxu0
  %v987 = vadd.f32 0.0, %v986
  %988 = vmatmul.bf16.gmra.mxu0 %v451
  %v989 = vpop.f32.mrf.mxu0
  %v990 = vadd.f32 0.0, %v989
  %v991 = vpop.f32.mrf.mxu0
  %v992 = vadd.f32 0.0, %v991
  %993 = vmatmul.bf16.gmra.mxu0 %v454
  %v994 = vpop.f32.mrf.mxu0
  %v995 = vadd.f32 0.0, %v994
  %v996 = vpop.f32.mrf.mxu0
  %v997 = vadd.f32 0.0, %v996
  %998 = vmatmul.bf16.gmra.mxu0 %v457
  %v999 = vpop.f32.mrf.mxu0
  %v1000 = vadd.f32 0.0, %v999
  %v1001 = vpop.f32.mrf.mxu0
  %v1002 = vadd.f32 0.0, %v1001
  %1003 = vmatmul.bf16.gmra.mxu0 %v460
  %v1004 = vpop.f32.mrf.mxu0
  %v1005 = vadd.f32 0.0, %v1004
  %v1006 = vpop.f32.mrf.mxu0
  %v1007 = vadd.f32 0.0, %v1006
  %1008 = vmatmul.bf16.gmra.mxu0 %v463
  %v1009 = vpop.f32.mrf.mxu0
  %v1010 = vadd.f32 0.0, %v1009
  %v1011 = vpop.f32.mrf.mxu0
  %1012 = vdwg.mxu0
  %1013 = vmatpush.bf16.msra.mxu0 0
  %1014 = vmatpush.bf16.msra.mxu0 0
  %1015 = vmatpush.bf16.msra.mxu0 %v479
  %1016 = vmatpush.bf16.msra.mxu0 %v358
  %1017 = vmatpush.bf16.msra.mxu0 %v353
  %1018 = vmatpush.bf16.msra.mxu0 %v348
  %1019 = vmatpush.bf16.msra.mxu0 %v343
  %1020 = vmatpush.bf16.msra.mxu0 %v338
  %1021 = vmatmul.bf16.gmra.mxu0 %v391
  %v1022 = vpop.f32.mrf.mxu0
  %v1023 = vadd.f32 0.0, %v1022
  %v1024 = vpop.f32.mrf.mxu0
  %v1025 = vadd.f32 0.0, %v1024
  %1026 = vmatmul.bf16.gmra.mxu0 %v394
  %v1027 = vpop.f32.mrf.mxu0
  %v1028 = vadd.f32 0.0, %v1027
  %v1029 = vpop.f32.mrf.mxu0
  %v1030 = vadd.f32 0.0, %v1029
  %1031 = vmatmul.bf16.gmra.mxu0 %v397
  %v1032 = vpop.f32.mrf.mxu0
  %v1033 = vadd.f32 0.0, %v1032
  %v1034 = vpop.f32.mrf.mxu0
  %v1035 = vadd.f32 0.0, %v1034
  %1036 = vmatmul.bf16.gmra.mxu0 %v400
  %v1037 = vpop.f32.mrf.mxu0
  %v1038 = vadd.f32 0.0, %v1037
  %v1039 = vpop.f32.mrf.mxu0
  %v1040 = vadd.f32 0.0, %v1039
  %1041 = vmatmul.bf16.gmra.mxu0 %v403
  %v1042 = vpop.f32.mrf.mxu0
  %v1043 = vadd.f32 0.0, %v1042
  %v1044 = vpop.f32.mrf.mxu0
  %v1045 = vadd.f32 0.0, %v1044
  %1046 = vmatmul.bf16.gmra.mxu0 %v406
  %v1047 = vpop.f32.mrf.mxu0
  %v1048 = vadd.f32 0.0, %v1047
  %v1049 = vpop.f32.mrf.mxu0
  %v1050 = vadd.f32 0.0, %v1049
  %1051 = vmatmul.bf16.gmra.mxu0 %v409
  %v1052 = vpop.f32.mrf.mxu0
  %v1053 = vadd.f32 0.0, %v1052
  %v1054 = vpop.f32.mrf.mxu0
  %v1055 = vadd.f32 0.0, %v1054
  %1056 = vmatmul.bf16.gmra.mxu0 %v412
  %v1057 = vpop.f32.mrf.mxu0
  %v1058 = vadd.f32 0.0, %v1057
  %v1059 = vpop.f32.mrf.mxu0
  %v1060 = vadd.f32 0.0, %v1059
  %1061 = vmatmul.bf16.gmra.mxu0 %v415
  %v1062 = vpop.f32.mrf.mxu0
  %v1063 = vadd.f32 0.0, %v1062
  %v1064 = vpop.f32.mrf.mxu0
  %v1065 = vadd.f32 0.0, %v1064
  %1066 = vmatmul.bf16.gmra.mxu0 %v418
  %v1067 = vpop.f32.mrf.mxu0
  %v1068 = vadd.f32 0.0, %v1067
  %v1069 = vpop.f32.mrf.mxu0
  %v1070 = vadd.f32 0.0, %v1069
  %1071 = vmatmul.bf16.gmra.mxu0 %v421
  %v1072 = vpop.f32.mrf.mxu0
  %v1073 = vadd.f32 0.0, %v1072
  %v1074 = vpop.f32.mrf.mxu0
  %v1075 = vadd.f32 0.0, %v1074
  %1076 = vmatmul.bf16.gmra.mxu0 %v424
  %v1077 = vpop.f32.mrf.mxu0
  %v1078 = vadd.f32 0.0, %v1077
  %v1079 = vpop.f32.mrf.mxu0
  %v1080 = vadd.f32 0.0, %v1079
  %1081 = vmatmul.bf16.gmra.mxu0 %v427
  %v1082 = vpop.f32.mrf.mxu0
  %v1083 = vadd.f32 0.0, %v1082
  %v1084 = vpop.f32.mrf.mxu0
  %v1085 = vadd.f32 0.0, %v1084
  %1086 = vmatmul.bf16.gmra.mxu0 %v430
  %v1087 = vpop.f32.mrf.mxu0
  %v1088 = vadd.f32 0.0, %v1087
  %v1089 = vpop.f32.mrf.mxu0
  %v1090 = vadd.f32 0.0, %v1089
  %1091 = vmatmul.bf16.gmra.mxu0 %v433
  %v1092 = vpop.f32.mrf.mxu0
  %v1093 = vadd.f32 0.0, %v1092
  %v1094 = vpop.f32.mrf.mxu0
  %v1095 = vadd.f32 0.0, %v1094
  %1096 = vmatmul.bf16.gmra.mxu0 %v436
  %v1097 = vpop.f32.mrf.mxu0
  %v1098 = vadd.f32 0.0, %v1097
  %v1099 = vpop.f32.mrf.mxu0
  %v1100 = vadd.f32 0.0, %v1099
  %1101 = vmatmul.bf16.gmra.mxu0 %v439
  %v1102 = vpop.f32.mrf.mxu0
  %v1103 = vadd.f32 0.0, %v1102
  %v1104 = vpop.f32.mrf.mxu0
  %v1105 = vadd.f32 0.0, %v1104
  %1106 = vmatmul.bf16.gmra.mxu0 %v442
  %v1107 = vpop.f32.mrf.mxu0
  %v1108 = vadd.f32 0.0, %v1107
  %v1109 = vpop.f32.mrf.mxu0
  %v1110 = vadd.f32 0.0, %v1109
  %1111 = vmatmul.bf16.gmra.mxu0 %v445
  %v1112 = vpop.f32.mrf.mxu0
  %v1113 = vadd.f32 0.0, %v1112
  %v1114 = vpop.f32.mrf.mxu0
  %v1115 = vadd.f32 0.0, %v1114
  %1116 = vmatmul.bf16.gmra.mxu0 %v448
  %v1117 = vpop.f32.mrf.mxu0
  %v1118 = vadd.f32 0.0, %v1117
  %v1119 = vpop.f32.mrf.mxu0
  %v1120 = vadd.f32 0.0, %v1119
  %1121 = vmatmul.bf16.gmra.mxu0 %v451
  %v1122 = vpop.f32.mrf.mxu0
  %v1123 = vadd.f32 0.0, %v1122
  %v1124 = vpop.f32.mrf.mxu0
  %v1125 = vadd.f32 0.0, %v1124
  %1126 = vmatmul.bf16.gmra.mxu0 %v454
  %v1127 = vpop.f32.mrf.mxu0
  %v1128 = vadd.f32 0.0, %v1127
  %v1129 = vpop.f32.mrf.mxu0
  %v1130 = vadd.f32 0.0, %v1129
  %1131 = vmatmul.bf16.gmra.mxu0 %v457
  %v1132 = vpop.f32.mrf.mxu0
  %v1133 = vadd.f32 0.0, %v1132
  %v1134 = vpop.f32.mrf.mxu0
  %v1135 = vadd.f32 0.0, %v1134
  %1136 = vmatmul.bf16.gmra.mxu0 %v460
  %v1137 = vpop.f32.mrf.mxu0
  %v1138 = vadd.f32 0.0, %v1137
  %v1139 = vpop.f32.mrf.mxu0
  %v1140 = vadd.f32 0.0, %v1139
  %1141 = vmatmul.bf16.gmra.mxu0 %v463
  %v1142 = vpop.f32.mrf.mxu0
  %v1143 = vadd.f32 0.0, %v1142
  %v1144 = vpop.f32.mrf.mxu0
  %1145 = vdwg.mxu0
  %v1146 = vmax.f32 %v491, 0.0
  %v1147 = vmax.f32 %v624, 0.0
  %v1148 = vmax.f32 %v757, 0.0
  %v1149 = vmax.f32 %v890, 0.0
  %v1150 = vmax.f32 %v1023, 0.0
  %v1151 = vmax.f32 %v493, 0.0
  %v1152 = vmax.f32 %v626, 0.0
  %v1153 = vmax.f32 %v759, 0.0
  %v1154 = vmax.f32 %v892, 0.0
  %v1155 = vmax.f32 %v1025, 0.0
  %v1156 = vmax.f32 %v496, 0.0
  %v1157 = vmax.f32 %v629, 0.0
  %v1158 = vmax.f32 %v762, 0.0
  %v1159 = vmax.f32 %v895, 0.0
  %v1160 = vmax.f32 %v1028, 0.0
  %v1161 = vmax.f32 %v498, 0.0
  %v1162 = vmax.f32 %v631, 0.0
  %v1163 = vmax.f32 %v764, 0.0
  %v1164 = vmax.f32 %v897, 0.0
  %v1165 = vmax.f32 %v1030, 0.0
  %v1166 = vmax.f32 %v501, 0.0
  %v1167 = vmax.f32 %v634, 0.0
  %v1168 = vmax.f32 %v767, 0.0
  %v1169 = vmax.f32 %v900, 0.0
  %v1170 = vmax.f32 %v1033, 0.0
  %v1171 = vmax.f32 %v503, 0.0
  %v1172 = vmax.f32 %v636, 0.0
  %v1173 = vmax.f32 %v769, 0.0
  %v1174 = vmax.f32 %v902, 0.0
  %v1175 = vmax.f32 %v1035, 0.0
  %v1176 = vmax.f32 %v506, 0.0
  %v1177 = vmax.f32 %v639, 0.0
  %v1178 = vmax.f32 %v772, 0.0
  %v1179 = vmax.f32 %v905, 0.0
  %v1180 = vmax.f32 %v1038, 0.0
  %v1181 = vmax.f32 %v508, 0.0
  %v1182 = vmax.f32 %v641, 0.0
  %v1183 = vmax.f32 %v774, 0.0
  %v1184 = vmax.f32 %v907, 0.0
  %v1185 = vmax.f32 %v1040, 0.0
  %v1186 = vmax.f32 %v511, 0.0
  %v1187 = vmax.f32 %v644, 0.0
  %v1188 = vmax.f32 %v777, 0.0
  %v1189 = vmax.f32 %v910, 0.0
  %v1190 = vmax.f32 %v1043, 0.0
  %v1191 = vmax.f32 %v513, 0.0
  %v1192 = vmax.f32 %v646, 0.0
  %v1193 = vmax.f32 %v779, 0.0
  %v1194 = vmax.f32 %v912, 0.0
  %v1195 = vmax.f32 %v1045, 0.0
  %v1196 = vmax.f32 %v516, 0.0
  %v1197 = vmax.f32 %v649, 0.0
  %v1198 = vmax.f32 %v782, 0.0
  %v1199 = vmax.f32 %v915, 0.0
  %v1200 = vmax.f32 %v1048, 0.0
  %v1201 = vmax.f32 %v518, 0.0
  %v1202 = vmax.f32 %v651, 0.0
  %v1203 = vmax.f32 %v784, 0.0
  %v1204 = vmax.f32 %v917, 0.0
  %v1205 = vmax.f32 %v1050, 0.0
  %v1206 = vmax.f32 %v521, 0.0
  %v1207 = vmax.f32 %v654, 0.0
  %v1208 = vmax.f32 %v787, 0.0
  %v1209 = vmax.f32 %v920, 0.0
  %v1210 = vmax.f32 %v1053, 0.0
  %v1211 = vmax.f32 %v523, 0.0
  %v1212 = vmax.f32 %v656, 0.0
  %v1213 = vmax.f32 %v789, 0.0
  %v1214 = vmax.f32 %v922, 0.0
  %v1215 = vmax.f32 %v1055, 0.0
  %v1216 = vmax.f32 %v526, 0.0
  %v1217 = vmax.f32 %v659, 0.0
  %v1218 = vmax.f32 %v792, 0.0
  %v1219 = vmax.f32 %v925, 0.0
  %v1220 = vmax.f32 %v1058, 0.0
  %v1221 = vmax.f32 %v528, 0.0
  %v1222 = vmax.f32 %v661, 0.0
  %v1223 = vmax.f32 %v794, 0.0
  %v1224 = vmax.f32 %v927, 0.0
  %v1225 = vmax.f32 %v1060, 0.0
  %v1226 = vmax.f32 %v531, 0.0
  %v1227 = vmax.f32 %v664, 0.0
  %v1228 = vmax.f32 %v797, 0.0
  %v1229 = vmax.f32 %v930, 0.0
  %v1230 = vmax.f32 %v1063, 0.0
  %v1231 = vmax.f32 %v533, 0.0
  %v1232 = vmax.f32 %v666, 0.0
  %v1233 = vmax.f32 %v799, 0.0
  %v1234 = vmax.f32 %v932, 0.0
  %v1235 = vmax.f32 %v1065, 0.0
  %v1236 = vmax.f32 %v536, 0.0
  %v1237 = vmax.f32 %v669, 0.0
  %v1238 = vmax.f32 %v802, 0.0
  %v1239 = vmax.f32 %v935, 0.0
  %v1240 = vmax.f32 %v1068, 0.0
  %v1241 = vmax.f32 %v538, 0.0
  %v1242 = vmax.f32 %v671, 0.0
  %v1243 = vmax.f32 %v804, 0.0
  %v1244 = vmax.f32 %v937, 0.0
  %v1245 = vmax.f32 %v1070, 0.0
  %v1246 = vmax.f32 %v541, 0.0
  %v1247 = vmax.f32 %v674, 0.0
  %v1248 = vmax.f32 %v807, 0.0
  %v1249 = vmax.f32 %v940, 0.0
  %v1250 = vmax.f32 %v1073, 0.0
  %v1251 = vmax.f32 %v543, 0.0
  %v1252 = vmax.f32 %v676, 0.0
  %v1253 = vmax.f32 %v809, 0.0
  %v1254 = vmax.f32 %v942, 0.0
  %v1255 = vmax.f32 %v1075, 0.0
  %v1256 = vmax.f32 %v546, 0.0
  %v1257 = vmax.f32 %v679, 0.0
  %v1258 = vmax.f32 %v812, 0.0
  %v1259 = vmax.f32 %v945, 0.0
  %v1260 = vmax.f32 %v1078, 0.0
  %v1261 = vmax.f32 %v548, 0.0
  %v1262 = vmax.f32 %v681, 0.0
  %v1263 = vmax.f32 %v814, 0.0
  %v1264 = vmax.f32 %v947, 0.0
  %v1265 = vmax.f32 %v1080, 0.0
  %v1266 = vmax.f32 %v551, 0.0
  %v1267 = vmax.f32 %v684, 0.0
  %v1268 = vmax.f32 %v817, 0.0
  %v1269 = vmax.f32 %v950, 0.0
  %v1270 = vmax.f32 %v1083, 0.0
  %v1271 = vmax.f32 %v553, 0.0
  %v1272 = vmax.f32 %v686, 0.0
  %v1273 = vmax.f32 %v819, 0.0
  %v1274 = vmax.f32 %v952, 0.0
  %v1275 = vmax.f32 %v1085, 0.0
  %v1276 = vmax.f32 %v556, 0.0
  %v1277 = vmax.f32 %v689, 0.0
  %v1278 = vmax.f32 %v822, 0.0
  %v1279 = vmax.f32 %v955, 0.0
  %v1280 = vmax.f32 %v1088, 0.0
  %v1281 = vmax.f32 %v558, 0.0
  %v1282 = vmax.f32 %v691, 0.0
  %v1283 = vmax.f32 %v824, 0.0
  %v1284 = vmax.f32 %v957, 0.0
  %v1285 = vmax.f32 %v1090, 0.0
  %v1286 = vmax.f32 %v561, 0.0
  %v1287 = vmax.f32 %v694, 0.0
  %v1288 = vmax.f32 %v827, 0.0
  %v1289 = vmax.f32 %v960, 0.0
  %v1290 = vmax.f32 %v1093, 0.0
  %v1291 = vmax.f32 %v563, 0.0
  %v1292 = vmax.f32 %v696, 0.0
  %v1293 = vmax.f32 %v829, 0.0
  %v1294 = vmax.f32 %v962, 0.0
  %v1295 = vmax.f32 %v1095, 0.0
  %v1296 = vmax.f32 %v566, 0.0
  %v1297 = vmax.f32 %v699, 0.0
  %v1298 = vmax.f32 %v832, 0.0
  %v1299 = vmax.f32 %v965, 0.0
  %v1300 = vmax.f32 %v1098, 0.0
  %v1301 = vmax.f32 %v568, 0.0
  %v1302 = vmax.f32 %v701, 0.0
  %v1303 = vmax.f32 %v834, 0.0
  %v1304 = vmax.f32 %v967, 0.0
  %v1305 = vmax.f32 %v1100, 0.0
  %v1306 = vmax.f32 %v571, 0.0
  %v1307 = vmax.f32 %v704, 0.0
  %v1308 = vmax.f32 %v837, 0.0
  %v1309 = vmax.f32 %v970, 0.0
  %v1310 = vmax.f32 %v1103, 0.0
  %v1311 = vmax.f32 %v573, 0.0
  %v1312 = vmax.f32 %v706, 0.0
  %v1313 = vmax.f32 %v839, 0.0
  %v1314 = vmax.f32 %v972, 0.0
  %v1315 = vmax.f32 %v1105, 0.0
  %v1316 = vmax.f32 %v576, 0.0
  %v1317 = vmax.f32 %v709, 0.0
  %v1318 = vmax.f32 %v842, 0.0
  %v1319 = vmax.f32 %v975, 0.0
  %v1320 = vmax.f32 %v1108, 0.0
  %v1321 = vmax.f32 %v578, 0.0
  %v1322 = vmax.f32 %v711, 0.0
  %v1323 = vmax.f32 %v844, 0.0
  %v1324 = vmax.f32 %v977, 0.0
  %v1325 = vmax.f32 %v1110, 0.0
  %v1326 = vmax.f32 %v581, 0.0
  %v1327 = vmax.f32 %v714, 0.0
  %v1328 = vmax.f32 %v847, 0.0
  %v1329 = vmax.f32 %v980, 0.0
  %v1330 = vmax.f32 %v1113, 0.0
  %v1331 = vmax.f32 %v583, 0.0
  %v1332 = vmax.f32 %v716, 0.0
  %v1333 = vmax.f32 %v849, 0.0
  %v1334 = vmax.f32 %v982, 0.0
  %v1335 = vmax.f32 %v1115, 0.0
  %v1336 = vmax.f32 %v586, 0.0
  %v1337 = vmax.f32 %v719, 0.0
  %v1338 = vmax.f32 %v852, 0.0
  %v1339 = vmax.f32 %v985, 0.0
  %v1340 = vmax.f32 %v1118, 0.0
  %v1341 = vmax.f32 %v588, 0.0
  %v1342 = vmax.f32 %v721, 0.0
  %v1343 = vmax.f32 %v854, 0.0
  %v1344 = vmax.f32 %v987, 0.0
  %v1345 = vmax.f32 %v1120, 0.0
  %v1346 = vmax.f32 %v591, 0.0
  %v1347 = vmax.f32 %v724, 0.0
  %v1348 = vmax.f32 %v857, 0.0
  %v1349 = vmax.f32 %v990, 0.0
  %v1350 = vmax.f32 %v1123, 0.0
  %v1351 = vmax.f32 %v593, 0.0
  %v1352 = vmax.f32 %v726, 0.0
  %v1353 = vmax.f32 %v859, 0.0
  %v1354 = vmax.f32 %v992, 0.0
  %v1355 = vmax.f32 %v1125, 0.0
  %v1356 = vmax.f32 %v596, 0.0
  %v1357 = vmax.f32 %v729, 0.0
  %v1358 = vmax.f32 %v862, 0.0
  %v1359 = vmax.f32 %v995, 0.0
  %v1360 = vmax.f32 %v1128, 0.0
  %v1361 = vmax.f32 %v598, 0.0
  %v1362 = vmax.f32 %v731, 0.0
  %v1363 = vmax.f32 %v864, 0.0
  %v1364 = vmax.f32 %v997, 0.0
  %v1365 = vmax.f32 %v1130, 0.0
  %v1366 = vmax.f32 %v601, 0.0
  %v1367 = vmax.f32 %v734, 0.0
  %v1368 = vmax.f32 %v867, 0.0
  %v1369 = vmax.f32 %v1000, 0.0
  %v1370 = vmax.f32 %v1133, 0.0
  %v1371 = vmax.f32 %v603, 0.0
  %v1372 = vmax.f32 %v736, 0.0
  %v1373 = vmax.f32 %v869, 0.0
  %v1374 = vmax.f32 %v1002, 0.0
  %v1375 = vmax.f32 %v1135, 0.0
  %v1376 = vmax.f32 %v606, 0.0
  %v1377 = vmax.f32 %v739, 0.0
  %v1378 = vmax.f32 %v872, 0.0
  %v1379 = vmax.f32 %v1005, 0.0
  %v1380 = vmax.f32 %v1138, 0.0
  %v1381 = vmax.f32 %v608, 0.0
  %v1382 = vmax.f32 %v741, 0.0
  %v1383 = vmax.f32 %v874, 0.0
  %v1384 = vmax.f32 %v1007, 0.0
  %v1385 = vmax.f32 %v1140, 0.0
  %v1386 = vmax.f32 %v611, 0.0
  %v1387 = vmax.f32 %v744, 0.0
  %v1388 = vmax.f32 %v877, 0.0
  %v1389 = vmax.f32 %v1010, 0.0
  %v1390 = vmax.f32 %v1143, 0.0
  %v1391 = vpack.c.bf16 %v1151, %v1146
  %v1392 = vpack.c.bf16 %v1152, %v1147
  %v1393 = vpack.c.bf16 %v1153, %v1148
  %v1394 = vpack.c.bf16 %v1154, %v1149
  %v1395 = vpack.c.bf16 %v1155, %v1150
  %v1396 = vpack.c.bf16 %v1161, %v1156
  %v1397 = vpack.c.bf16 %v1162, %v1157
  %v1398 = vpack.c.bf16 %v1163, %v1158
  %v1399 = vpack.c.bf16 %v1164, %v1159
  %v1400 = vpack.c.bf16 %v1165, %v1160
  %v1401 = vpack.c.bf16 %v1171, %v1166
  %v1402 = vpack.c.bf16 %v1172, %v1167
  %v1403 = vpack.c.bf16 %v1173, %v1168
  %v1404 = vpack.c.bf16 %v1174, %v1169
  %v1405 = vpack.c.bf16 %v1175, %v1170
  %v1406 = vpack.c.bf16 %v1181, %v1176
  %v1407 = vpack.c.bf16 %v1182, %v1177
  %v1408 = vpack.c.bf16 %v1183, %v1178
  %v1409 = vpack.c.bf16 %v1184, %v1179
  %v1410 = vpack.c.bf16 %v1185, %v1180
  %v1411 = vpack.c.bf16 %v1191, %v1186
  %v1412 = vpack.c.bf16 %v1192, %v1187
  %v1413 = vpack.c.bf16 %v1193, %v1188
  %v1414 = vpack.c.bf16 %v1194, %v1189
  %v1415 = vpack.c.bf16 %v1195, %v1190
  %v1416 = vpack.c.bf16 %v1201, %v1196
  %v1417 = vpack.c.bf16 %v1202, %v1197
  %v1418 = vpack.c.bf16 %v1203, %v1198
  %v1419 = vpack.c.bf16 %v1204, %v1199
  %v1420 = vpack.c.bf16 %v1205, %v1200
  %v1421 = vpack.c.bf16 %v1211, %v1206
  %v1422 = vpack.c.bf16 %v1212, %v1207
  %v1423 = vpack.c.bf16 %v1213, %v1208
  %v1424 = vpack.c.bf16 %v1214, %v1209
  %v1425 = vpack.c.bf16 %v1215, %v1210
  %v1426 = vpack.c.bf16 %v1221, %v1216
  %v1427 = vpack.c.bf16 %v1222, %v1217
  %v1428 = vpack.c.bf16 %v1223, %v1218
  %v1429 = vpack.c.bf16 %v1224, %v1219
  %v1430 = vpack.c.bf16 %v1225, %v1220
  %v1431 = vpack.c.bf16 %v1231, %v1226
  %v1432 = vpack.c.bf16 %v1232, %v1227
  %v1433 = vpack.c.bf16 %v1233, %v1228
  %v1434 = vpack.c.bf16 %v1234, %v1229
  %v1435 = vpack.c.bf16 %v1235, %v1230
  %v1436 = vpack.c.bf16 %v1241, %v1236
  %v1437 = vpack.c.bf16 %v1242, %v1237
  %v1438 = vpack.c.bf16 %v1243, %v1238
  %v1439 = vpack.c.bf16 %v1244, %v1239
  %v1440 = vpack.c.bf16 %v1245, %v1240
  %v1441 = vpack.c.bf16 %v1251, %v1246
  %v1442 = vpack.c.bf16 %v1252, %v1247
  %v1443 = vpack.c.bf16 %v1253, %v1248
  %v1444 = vpack.c.bf16 %v1254, %v1249
  %v1445 = vpack.c.bf16 %v1255, %v1250
  %v1446 = vpack.c.bf16 %v1261, %v1256
  %v1447 = vpack.c.bf16 %v1262, %v1257
  %v1448 = vpack.c.bf16 %v1263, %v1258
  %v1449 = vpack.c.bf16 %v1264, %v1259
  %v1450 = vpack.c.bf16 %v1265, %v1260
  %v1451 = vpack.c.bf16 %v1271, %v1266
  %v1452 = vpack.c.bf16 %v1272, %v1267
  %v1453 = vpack.c.bf16 %v1273, %v1268
  %v1454 = vpack.c.bf16 %v1274, %v1269
  %v1455 = vpack.c.bf16 %v1275, %v1270
  %v1456 = vpack.c.bf16 %v1281, %v1276
  %v1457 = vpack.c.bf16 %v1282, %v1277
  %v1458 = vpack.c.bf16 %v1283, %v1278
  %v1459 = vpack.c.bf16 %v1284, %v1279
  %v1460 = vpack.c.bf16 %v1285, %v1280
  %v1461 = vpack.c.bf16 %v1291, %v1286
  %v1462 = vpack.c.bf16 %v1292, %v1287
  %v1463 = vpack.c.bf16 %v1293, %v1288
  %v1464 = vpack.c.bf16 %v1294, %v1289
  %v1465 = vpack.c.bf16 %v1295, %v1290
  %v1466 = vpack.c.bf16 %v1301, %v1296
  %v1467 = vpack.c.bf16 %v1302, %v1297
  %v1468 = vpack.c.bf16 %v1303, %v1298
  %v1469 = vpack.c.bf16 %v1304, %v1299
  %v1470 = vpack.c.bf16 %v1305, %v1300
  %v1471 = vpack.c.bf16 %v1311, %v1306
  %v1472 = vpack.c.bf16 %v1312, %v1307
  %v1473 = vpack.c.bf16 %v1313, %v1308
  %v1474 = vpack.c.bf16 %v1314, %v1309
  %v1475 = vpack.c.bf16 %v1315, %v1310
  %v1476 = vpack.c.bf16 %v1321, %v1316
  %v1477 = vpack.c.bf16 %v1322, %v1317
  %v1478 = vpack.c.bf16 %v1323, %v1318
  %v1479 = vpack.c.bf16 %v1324, %v1319
  %v1480 = vpack.c.bf16 %v1325, %v1320
  %v1481 = vpack.c.bf16 %v1331, %v1326
  %v1482 = vpack.c.bf16 %v1332, %v1327
  %v1483 = vpack.c.bf16 %v1333, %v1328
  %v1484 = vpack.c.bf16 %v1334, %v1329
  %v1485 = vpack.c.bf16 %v1335, %v1330
  %v1486 = vpack.c.bf16 %v1341, %v1336
  %v1487 = vpack.c.bf16 %v1342, %v1337
  %v1488 = vpack.c.bf16 %v1343, %v1338
  %v1489 = vpack.c.bf16 %v1344, %v1339
  %v1490 = vpack.c.bf16 %v1345, %v1340
  %v1491 = vpack.c.bf16 %v1351, %v1346
  %v1492 = vpack.c.bf16 %v1352, %v1347
  %v1493 = vpack.c.bf16 %v1353, %v1348
  %v1494 = vpack.c.bf16 %v1354, %v1349
  %v1495 = vpack.c.bf16 %v1355, %v1350
  %v1496 = vpack.c.bf16 %v1361, %v1356
  %v1497 = vpack.c.bf16 %v1362, %v1357
  %v1498 = vpack.c.bf16 %v1363, %v1358
  %v1499 = vpack.c.bf16 %v1364, %v1359
  %v1500 = vpack.c.bf16 %v1365, %v1360
  %v1501 = vpack.c.bf16 %v1371, %v1366
  %v1502 = vpack.c.bf16 %v1372, %v1367
  %v1503 = vpack.c.bf16 %v1373, %v1368
  %v1504 = vpack.c.bf16 %v1374, %v1369
  %v1505 = vpack.c.bf16 %v1375, %v1370
  %v1506 = vpack.c.bf16 %v1381, %v1376
  %v1507 = vpack.c.bf16 %v1382, %v1377
  %v1508 = vpack.c.bf16 %v1383, %v1378
  %v1509 = vpack.c.bf16 %v1384, %v1379
  %v1510 = vpack.c.bf16 %v1385, %v1380
  %v1511 = vpack.c.bf16 %v1386, %v1386
  %v1512 = vpack.c.bf16 %v1387, %v1387
  %v1513 = vpack.c.bf16 %v1388, %v1388
  %v1514 = vpack.c.bf16 %v1389, %v1389
  %v1515 = vpack.c.bf16 %v1390, %v1390
  %v1516 = vld [vmem:[%s2] sm:$0xf]
  %v1517 = vld [vmem:[%s2 + $0x4] sm:$0xf]
  %v1518 = vld [vmem:[%s2 + $0x8] sm:$0xf]
  %v1519 = vld [vmem:[%s2 + $0xc] sm:$0xf]
  %v1520 = vld [vmem:[%s2 + $0x10] sm:$0xf]
  %v1521 = vld [vmem:[%s2 + $0x14] sm:$0xf]
  %v1522 = vld [vmem:[%s2 + $0x18] sm:$0xf]
  %v1523 = vld [vmem:[%s2 + $0x1c] sm:$0xf]
  %v1524 = vld [vmem:[%s2 + $0x20] sm:$0xf]
  %v1525 = vld [vmem:[%s2 + $0x24] sm:$0xf]
  %v1526 = vld [vmem:[%s2 + $0x28] sm:$0xf]
  %v1527 = vld [vmem:[%s2 + $0x2c] sm:$0xf]
  %v1528 = vld [vmem:[%s2 + $0x30] sm:$0xf]
  %v1529 = vld [vmem:[%s2 + $0x34] sm:$0xf]
  %v1530 = vld [vmem:[%s2 + $0x38] sm:$0xf]
  %v1531 = vld [vmem:[%s2 + $0x3c] sm:$0xf]
  %v1532 = vld [vmem:[%s2 + $0x40] sm:$0xf]
  %v1533 = vld [vmem:[%s2 + $0x44] sm:$0xf]
  %v1534 = vld [vmem:[%s2 + $0x48] sm:$0xf]
  %v1535 = vld [vmem:[%s2 + $0x4c] sm:$0xf]
  %v1536 = vld [vmem:[%s2 + $0x50] sm:$0xf]
  %v1537 = vld [vmem:[%s2 + $0x54] sm:$0xf]
  %v1538 = vld [vmem:[%s2 + $0x58] sm:$0xf]
  %v1539 = vld [vmem:[%s2 + $0x5c] sm:$0xf]
  %v1540 = vld [vmem:[%s2 + $0x60] sm:$0xf]
  %v1541 = vld [vmem:[%s2 + $0x64] sm:$0xf]
  %v1542 = vld [vmem:[%s2 + $0x68] sm:$0xf]
  %v1543 = vld [vmem:[%s2 + $0x6c] sm:$0xf]
  %v1544 = vld [vmem:[%s2 + $0x70] sm:$0xf]
  %v1545 = vld [vmem:[%s2 + $0x74] sm:$0xf]
  %v1546 = vld [vmem:[%s2 + $0x78] sm:$0xf]
  %v1547 = vld [vmem:[%s2 + $0x7c] sm:$0xf]
  %v1548 = vld [vmem:[%s2 + $0x80] sm:$0xf]
  %v1549 = vld [vmem:[%s2 + $0x84] sm:$0xf]
  %v1550 = vld [vmem:[%s2 + $0x88] sm:$0xf]
  %v1551 = vld [vmem:[%s2 + $0x8c] sm:$0xf]
  %v1552 = vld [vmem:[%s2 + $0x90] sm:$0xf]
  %v1553 = vld [vmem:[%s2 + $0x94] sm:$0xf]
  %v1554 = vld [vmem:[%s2 + $0x98] sm:$0xf]
  %v1555 = vld [vmem:[%s2 + $0x9c] sm:$0xf]
  %v1556 = vld [vmem:[%s2 + $0xa0] sm:$0xf]
  %v1557 = vld [vmem:[%s2 + $0xa4] sm:$0xf]
  %v1558 = vld [vmem:[%s2 + $0xa8] sm:$0xf]
  %v1559 = vld [vmem:[%s2 + $0xac] sm:$0xf]
  %v1560 = vld [vmem:[%s2 + $0xb0] sm:$0xf]
  %v1561 = vld [vmem:[%s2 + $0xb4] sm:$0xf]
  %v1562 = vld [vmem:[%s2 + $0xb8] sm:$0xf]
  %v1563 = vld [vmem:[%s2 + $0xbc] sm:$0xf]
  %v1564 = vld [vmem:[%s2 + $0xc0] sm:$0xf]
  %v1565 = vld [vmem:[%s2 + $0xc4] sm:$0xf]
  %v1566 = vld [vmem:[%s2 + $0xc8] sm:$0xf]
  %v1567 = vld [vmem:[%s2 + $0xcc] sm:$0xf]
  %v1568 = vld [vmem:[%s2 + $0xd0] sm:$0xf]
  %v1569 = vld [vmem:[%s2 + $0xd4] sm:$0xf]
  %v1570 = vld [vmem:[%s2 + $0xd8] sm:$0xf]
  %v1571 = vld [vmem:[%s2 + $0xdc] sm:$0xf]
  %v1572 = vld [vmem:[%s2 + $0xe0] sm:$0xf]
  %v1573 = vld [vmem:[%s2 + $0xe4] sm:$0xf]
  %v1574 = vld [vmem:[%s2 + $0xe8] sm:$0xf]
  %v1575 = vld [vmem:[%s2 + $0xec] sm:$0xf]
  %v1576 = vld [vmem:[%s2 + $0xf0] sm:$0xf]
  %v1577 = vld [vmem:[%s2 + $0xf4] sm:$0xf]
  %v1578 = vld [vmem:[%s2 + $0xf8] sm:$0xf]
  %v1579 = vld [vmem:[%s2 + $0xfc] sm:$0xf]
  %v1580 = vld [vmem:[%s2 + $0x100] sm:$0xf]
  %v1581 = vld [vmem:[%s2 + $0x104] sm:$0xf]
  %v1582 = vld [vmem:[%s2 + $0x108] sm:$0xf]
  %v1583 = vld [vmem:[%s2 + $0x10c] sm:$0xf]
  %v1584 = vld [vmem:[%s2 + $0x110] sm:$0xf]
  %v1585 = vld [vmem:[%s2 + $0x114] sm:$0xf]
  %v1586 = vld [vmem:[%s2 + $0x118] sm:$0xf]
  %v1587 = vld [vmem:[%s2 + $0x11c] sm:$0xf]
  %v1588 = vld [vmem:[%s3] sm:$0x1]
  %v1590 = vperm.slane %v1588, 0
  %v1664 = vunpack.c.l.b16 %v1516
  %v1665 = vunpack.c.l.b16 %v1517
  %v1666 = vunpack.c.l.b16 %v1518
  %v1667 = vunpack.c.l.b16 %v1519
  %v1668 = vunpack.c.l.b16 %v1520
  %v1669 = vunpack.c.l.b16 %v1521
  %v1670 = vunpack.c.l.b16 %v1522
  %v1671 = vunpack.c.l.b16 %v1523
  %v1672 = vunpack.c.l.b16 %v1524
  %v1673 = vunpack.c.l.b16 %v1525
  %v1674 = vunpack.c.l.b16 %v1526
  %v1675 = vunpack.c.l.b16 %v1527
  %v1676 = vunpack.c.l.b16 %v1528
  %v1677 = vunpack.c.l.b16 %v1529
  %v1678 = vunpack.c.l.b16 %v1530
  %v1679 = vunpack.c.l.b16 %v1531
  %v1680 = vunpack.c.l.b16 %v1532
  %v1681 = vunpack.c.l.b16 %v1533
  %v1682 = vunpack.c.l.b16 %v1534
  %v1683 = vunpack.c.l.b16 %v1535
  %v1684 = vunpack.c.l.b16 %v1536
  %v1685 = vunpack.c.l.b16 %v1537
  %v1686 = vunpack.c.l.b16 %v1538
  %v1687 = vunpack.c.l.b16 %v1539
  %v1688 = vunpack.c.l.b16 %v1540
  %v1689 = vunpack.c.l.b16 %v1541
  %v1690 = vunpack.c.l.b16 %v1542
  %v1691 = vunpack.c.l.b16 %v1543
  %v1692 = vunpack.c.l.b16 %v1544
  %v1693 = vunpack.c.l.b16 %v1545
  %v1694 = vunpack.c.l.b16 %v1546
  %v1695 = vunpack.c.l.b16 %v1547
  %v1696 = vunpack.c.l.b16 %v1548
  %v1697 = vunpack.c.l.b16 %v1549
  %v1698 = vunpack.c.l.b16 %v1550
  %v1699 = vunpack.c.l.b16 %v1551
  %v1700 = vunpack.c.l.b16 %v1552
  %v1701 = vunpack.c.l.b16 %v1553
  %v1702 = vunpack.c.l.b16 %v1554
  %v1703 = vunpack.c.l.b16 %v1555
  %v1704 = vunpack.c.l.b16 %v1556
  %v1705 = vunpack.c.l.b16 %v1557
  %v1706 = vunpack.c.l.b16 %v1558
  %v1707 = vunpack.c.l.b16 %v1559
  %v1708 = vunpack.c.l.b16 %v1560
  %v1709 = vunpack.c.l.b16 %v1561
  %v1710 = vunpack.c.l.b16 %v1562
  %v1711 = vunpack.c.l.b16 %v1563
  %v1712 = vunpack.c.l.b16 %v1564
  %v1713 = vunpack.c.l.b16 %v1565
  %v1714 = vunpack.c.l.b16 %v1566
  %v1715 = vunpack.c.l.b16 %v1567
  %v1716 = vunpack.c.l.b16 %v1568
  %v1717 = vunpack.c.l.b16 %v1569
  %v1718 = vunpack.c.l.b16 %v1570
  %v1719 = vunpack.c.l.b16 %v1571
  %v1720 = vunpack.c.l.b16 %v1572
  %v1721 = vunpack.c.l.b16 %v1573
  %v1722 = vunpack.c.l.b16 %v1574
  %v1723 = vunpack.c.l.b16 %v1575
  %v1724 = vunpack.c.l.b16 %v1576
  %v1725 = vunpack.c.l.b16 %v1577
  %v1726 = vunpack.c.l.b16 %v1578
  %v1727 = vunpack.c.l.b16 %v1579
  %v1728 = vunpack.c.l.b16 %v1580
  %v1729 = vunpack.c.l.b16 %v1581
  %v1730 = vunpack.c.l.b16 %v1582
  %v1731 = vunpack.c.l.b16 %v1583
  %v1732 = vunpack.c.l.b16 %v1584
  %v1733 = vunpack.c.l.b16 %v1585
  %v1734 = vunpack.c.l.b16 %v1586
  %v1735 = vunpack.c.l.b16 %v1587
  %v1736 = vpack.c.b16 %v1665, %v1664
  %v1737 = vpack.c.b16 %v1667, %v1666
  %v1738 = vpack.c.b16 %v1669, %v1668
  %v1739 = vpack.c.b16 %v1671, %v1670
  %v1740 = vpack.c.b16 %v1673, %v1672
  %v1741 = vpack.c.b16 %v1675, %v1674
  %v1742 = vpack.c.b16 %v1677, %v1676
  %v1743 = vpack.c.b16 %v1679, %v1678
  %v1744 = vpack.c.b16 %v1681, %v1680
  %v1745 = vpack.c.b16 %v1683, %v1682
  %v1746 = vpack.c.b16 %v1685, %v1684
  %v1747 = vpack.c.b16 %v1687, %v1686
  %v1748 = vpack.c.b16 %v1689, %v1688
  %v1749 = vpack.c.b16 %v1691, %v1690
  %v1750 = vpack.c.b16 %v1693, %v1692
  %v1751 = vpack.c.b16 %v1695, %v1694
  %v1752 = vpack.c.b16 %v1697, %v1696
  %v1753 = vpack.c.b16 %v1699, %v1698
  %v1754 = vpack.c.b16 %v1701, %v1700
  %v1755 = vpack.c.b16 %v1703, %v1702
  %v1756 = vpack.c.b16 %v1705, %v1704
  %v1757 = vpack.c.b16 %v1707, %v1706
  %v1758 = vpack.c.b16 %v1709, %v1708
  %v1759 = vpack.c.b16 %v1711, %v1710
  %v1760 = vpack.c.b16 %v1713, %v1712
  %v1761 = vpack.c.b16 %v1715, %v1714
  %v1762 = vpack.c.b16 %v1717, %v1716
  %v1763 = vpack.c.b16 %v1719, %v1718
  %v1764 = vpack.c.b16 %v1721, %v1720
  %v1765 = vpack.c.b16 %v1723, %v1722
  %v1766 = vpack.c.b16 %v1725, %v1724
  %v1767 = vpack.c.b16 %v1727, %v1726
  %v1768 = vpack.c.b16 %v1729, %v1728
  %v1769 = vpack.c.b16 %v1731, %v1730
  %v1770 = vpack.c.b16 %v1733, %v1732
  %v1771 = vpack.c.b16 %v1735, %v1734
  %vm1808 = vcmask 523264
  %v1810 = vsel %vm1808, %v1395, 0
  %v1813 = vsel %vm1808, %v1400, 0
  %v1816 = vsel %vm1808, %v1405, 0
  %v1819 = vsel %vm1808, %v1410, 0
  %v1822 = vsel %vm1808, %v1415, 0
  %v1825 = vsel %vm1808, %v1420, 0
  %v1828 = vsel %vm1808, %v1425, 0
  %v1831 = vsel %vm1808, %v1430, 0
  %v1834 = vsel %vm1808, %v1435, 0
  %v1837 = vsel %vm1808, %v1440, 0
  %v1840 = vsel %vm1808, %v1445, 0
  %v1843 = vsel %vm1808, %v1450, 0
  %v1846 = vsel %vm1808, %v1455, 0
  %v1849 = vsel %vm1808, %v1460, 0
  %v1852 = vsel %vm1808, %v1465, 0
  %v1855 = vsel %vm1808, %v1470, 0
  %v1858 = vsel %vm1808, %v1475, 0
  %v1861 = vsel %vm1808, %v1480, 0
  %v1864 = vsel %vm1808, %v1485, 0
  %v1867 = vsel %vm1808, %v1490, 0
  %v1870 = vsel %vm1808, %v1495, 0
  %v1873 = vsel %vm1808, %v1500, 0
  %v1876 = vsel %vm1808, %v1505, 0
  %v1879 = vsel %vm1808, %v1510, 0
  %v1882 = vsel %vm1808, %v1515, 0
  %1884 = vmatpush.bf16.msra.mxu0 %v1743
  %1885 = vmatpush.bf16.msra.mxu0 %v1742
  %1886 = vmatpush.bf16.msra.mxu0 %v1741
  %1887 = vmatpush.bf16.msra.mxu0 %v1740
  %1888 = vmatpush.bf16.msra.mxu0 %v1739
  %1889 = vmatpush.bf16.msra.mxu0 %v1738
  %1890 = vmatpush.bf16.msra.mxu0 %v1737
  %1891 = vmatpush.bf16.msra.mxu0 %v1736
  %1892 = vmatmul.bf16.gmra.mxu0 %v1391
  %v1893 = vpop.f32.mrf.mxu0
  %v1894 = vadd.f32 %v1590, %v1893
  %v1895 = vpop.f32.mrf.mxu0
  %v1896 = vadd.f32 %v1590, %v1895
  %1897 = vmatmul.bf16.gmra.mxu0 %v1396
  %v1898 = vpop.f32.mrf.mxu0
  %v1899 = vadd.f32 %v1590, %v1898
  %v1900 = vpop.f32.mrf.mxu0
  %v1901 = vadd.f32 %v1590, %v1900
  %1902 = vmatmul.bf16.gmra.mxu0 %v1401
  %v1903 = vpop.f32.mrf.mxu0
  %v1904 = vadd.f32 %v1590, %v1903
  %v1905 = vpop.f32.mrf.mxu0
  %v1906 = vadd.f32 %v1590, %v1905
  %1907 = vmatmul.bf16.gmra.mxu0 %v1406
  %v1908 = vpop.f32.mrf.mxu0
  %v1909 = vadd.f32 %v1590, %v1908
  %v1910 = vpop.f32.mrf.mxu0
  %v1911 = vadd.f32 %v1590, %v1910
  %1912 = vmatmul.bf16.gmra.mxu0 %v1411
  %v1913 = vpop.f32.mrf.mxu0
  %v1914 = vadd.f32 %v1590, %v1913
  %v1915 = vpop.f32.mrf.mxu0
  %v1916 = vadd.f32 %v1590, %v1915
  %1917 = vmatmul.bf16.gmra.mxu0 %v1416
  %v1918 = vpop.f32.mrf.mxu0
  %v1919 = vadd.f32 %v1590, %v1918
  %v1920 = vpop.f32.mrf.mxu0
  %v1921 = vadd.f32 %v1590, %v1920
  %1922 = vmatmul.bf16.gmra.mxu0 %v1421
  %v1923 = vpop.f32.mrf.mxu0
  %v1924 = vadd.f32 %v1590, %v1923
  %v1925 = vpop.f32.mrf.mxu0
  %v1926 = vadd.f32 %v1590, %v1925
  %1927 = vmatmul.bf16.gmra.mxu0 %v1426
  %v1928 = vpop.f32.mrf.mxu0
  %v1929 = vadd.f32 %v1590, %v1928
  %v1930 = vpop.f32.mrf.mxu0
  %v1931 = vadd.f32 %v1590, %v1930
  %1932 = vmatmul.bf16.gmra.mxu0 %v1431
  %v1933 = vpop.f32.mrf.mxu0
  %v1934 = vadd.f32 %v1590, %v1933
  %v1935 = vpop.f32.mrf.mxu0
  %v1936 = vadd.f32 %v1590, %v1935
  %1937 = vmatmul.bf16.gmra.mxu0 %v1436
  %v1938 = vpop.f32.mrf.mxu0
  %v1939 = vadd.f32 %v1590, %v1938
  %v1940 = vpop.f32.mrf.mxu0
  %v1941 = vadd.f32 %v1590, %v1940
  %1942 = vmatmul.bf16.gmra.mxu0 %v1441
  %v1943 = vpop.f32.mrf.mxu0
  %v1944 = vadd.f32 %v1590, %v1943
  %v1945 = vpop.f32.mrf.mxu0
  %v1946 = vadd.f32 %v1590, %v1945
  %1947 = vmatmul.bf16.gmra.mxu0 %v1446
  %v1948 = vpop.f32.mrf.mxu0
  %v1949 = vadd.f32 %v1590, %v1948
  %v1950 = vpop.f32.mrf.mxu0
  %v1951 = vadd.f32 %v1590, %v1950
  %1952 = vmatmul.bf16.gmra.mxu0 %v1451
  %v1953 = vpop.f32.mrf.mxu0
  %v1954 = vadd.f32 %v1590, %v1953
  %v1955 = vpop.f32.mrf.mxu0
  %v1956 = vadd.f32 %v1590, %v1955
  %1957 = vmatmul.bf16.gmra.mxu0 %v1456
  %v1958 = vpop.f32.mrf.mxu0
  %v1959 = vadd.f32 %v1590, %v1958
  %v1960 = vpop.f32.mrf.mxu0
  %v1961 = vadd.f32 %v1590, %v1960
  %1962 = vmatmul.bf16.gmra.mxu0 %v1461
  %v1963 = vpop.f32.mrf.mxu0
  %v1964 = vadd.f32 %v1590, %v1963
  %v1965 = vpop.f32.mrf.mxu0
  %v1966 = vadd.f32 %v1590, %v1965
  %1967 = vmatmul.bf16.gmra.mxu0 %v1466
  %v1968 = vpop.f32.mrf.mxu0
  %v1969 = vadd.f32 %v1590, %v1968
  %v1970 = vpop.f32.mrf.mxu0
  %v1971 = vadd.f32 %v1590, %v1970
  %1972 = vmatmul.bf16.gmra.mxu0 %v1471
  %v1973 = vpop.f32.mrf.mxu0
  %v1974 = vadd.f32 %v1590, %v1973
  %v1975 = vpop.f32.mrf.mxu0
  %v1976 = vadd.f32 %v1590, %v1975
  %1977 = vmatmul.bf16.gmra.mxu0 %v1476
  %v1978 = vpop.f32.mrf.mxu0
  %v1979 = vadd.f32 %v1590, %v1978
  %v1980 = vpop.f32.mrf.mxu0
  %v1981 = vadd.f32 %v1590, %v1980
  %1982 = vmatmul.bf16.gmra.mxu0 %v1481
  %v1983 = vpop.f32.mrf.mxu0
  %v1984 = vadd.f32 %v1590, %v1983
  %v1985 = vpop.f32.mrf.mxu0
  %v1986 = vadd.f32 %v1590, %v1985
  %1987 = vmatmul.bf16.gmra.mxu0 %v1486
  %v1988 = vpop.f32.mrf.mxu0
  %v1989 = vadd.f32 %v1590, %v1988
  %v1990 = vpop.f32.mrf.mxu0
  %v1991 = vadd.f32 %v1590, %v1990
  %1992 = vmatmul.bf16.gmra.mxu0 %v1491
  %v1993 = vpop.f32.mrf.mxu0
  %v1994 = vadd.f32 %v1590, %v1993
  %v1995 = vpop.f32.mrf.mxu0
  %v1996 = vadd.f32 %v1590, %v1995
  %1997 = vmatmul.bf16.gmra.mxu0 %v1496
  %v1998 = vpop.f32.mrf.mxu0
  %v1999 = vadd.f32 %v1590, %v1998
  %v2000 = vpop.f32.mrf.mxu0
  %v2001 = vadd.f32 %v1590, %v2000
  %2002 = vmatmul.bf16.gmra.mxu0 %v1501
  %v2003 = vpop.f32.mrf.mxu0
  %v2004 = vadd.f32 %v1590, %v2003
  %v2005 = vpop.f32.mrf.mxu0
  %v2006 = vadd.f32 %v1590, %v2005
  %2007 = vmatmul.bf16.gmra.mxu0 %v1506
  %v2008 = vpop.f32.mrf.mxu0
  %v2009 = vadd.f32 %v1590, %v2008
  %v2010 = vpop.f32.mrf.mxu0
  %v2011 = vadd.f32 %v1590, %v2010
  %2012 = vmatmul.bf16.gmra.mxu0 %v1511
  %v2013 = vpop.f32.mrf.mxu0
  %v2014 = vadd.f32 %v1590, %v2013
  %v2015 = vpop.f32.mrf.mxu0
  %2016 = vdwg.mxu0
  %2017 = vmatpush.bf16.msra.mxu0 %v1751
  %2018 = vmatpush.bf16.msra.mxu0 %v1750
  %2019 = vmatpush.bf16.msra.mxu0 %v1749
  %2020 = vmatpush.bf16.msra.mxu0 %v1748
  %2021 = vmatpush.bf16.msra.mxu0 %v1747
  %2022 = vmatpush.bf16.msra.mxu0 %v1746
  %2023 = vmatpush.bf16.msra.mxu0 %v1745
  %2024 = vmatpush.bf16.msra.mxu0 %v1744
  %2025 = vmatmul.bf16.gmra.mxu0 %v1392
  %v2026 = vpop.f32.mrf.mxu0
  %v2027 = vadd.f32 %v1894, %v2026
  %v2028 = vpop.f32.mrf.mxu0
  %v2029 = vadd.f32 %v1896, %v2028
  %2030 = vmatmul.bf16.gmra.mxu0 %v1397
  %v2031 = vpop.f32.mrf.mxu0
  %v2032 = vadd.f32 %v1899, %v2031
  %v2033 = vpop.f32.mrf.mxu0
  %v2034 = vadd.f32 %v1901, %v2033
  %2035 = vmatmul.bf16.gmra.mxu0 %v1402
  %v2036 = vpop.f32.mrf.mxu0
  %v2037 = vadd.f32 %v1904, %v2036
  %v2038 = vpop.f32.mrf.mxu0
  %v2039 = vadd.f32 %v1906, %v2038
  %2040 = vmatmul.bf16.gmra.mxu0 %v1407
  %v2041 = vpop.f32.mrf.mxu0
  %v2042 = vadd.f32 %v1909, %v2041
  %v2043 = vpop.f32.mrf.mxu0
  %v2044 = vadd.f32 %v1911, %v2043
  %2045 = vmatmul.bf16.gmra.mxu0 %v1412
  %v2046 = vpop.f32.mrf.mxu0
  %v2047 = vadd.f32 %v1914, %v2046
  %v2048 = vpop.f32.mrf.mxu0
  %v2049 = vadd.f32 %v1916, %v2048
  %2050 = vmatmul.bf16.gmra.mxu0 %v1417
  %v2051 = vpop.f32.mrf.mxu0
  %v2052 = vadd.f32 %v1919, %v2051
  %v2053 = vpop.f32.mrf.mxu0
  %v2054 = vadd.f32 %v1921, %v2053
  %2055 = vmatmul.bf16.gmra.mxu0 %v1422
  %v2056 = vpop.f32.mrf.mxu0
  %v2057 = vadd.f32 %v1924, %v2056
  %v2058 = vpop.f32.mrf.mxu0
  %v2059 = vadd.f32 %v1926, %v2058
  %2060 = vmatmul.bf16.gmra.mxu0 %v1427
  %v2061 = vpop.f32.mrf.mxu0
  %v2062 = vadd.f32 %v1929, %v2061
  %v2063 = vpop.f32.mrf.mxu0
  %v2064 = vadd.f32 %v1931, %v2063
  %2065 = vmatmul.bf16.gmra.mxu0 %v1432
  %v2066 = vpop.f32.mrf.mxu0
  %v2067 = vadd.f32 %v1934, %v2066
  %v2068 = vpop.f32.mrf.mxu0
  %v2069 = vadd.f32 %v1936, %v2068
  %2070 = vmatmul.bf16.gmra.mxu0 %v1437
  %v2071 = vpop.f32.mrf.mxu0
  %v2072 = vadd.f32 %v1939, %v2071
  %v2073 = vpop.f32.mrf.mxu0
  %v2074 = vadd.f32 %v1941, %v2073
  %2075 = vmatmul.bf16.gmra.mxu0 %v1442
  %v2076 = vpop.f32.mrf.mxu0
  %v2077 = vadd.f32 %v1944, %v2076
  %v2078 = vpop.f32.mrf.mxu0
  %v2079 = vadd.f32 %v1946, %v2078
  %2080 = vmatmul.bf16.gmra.mxu0 %v1447
  %v2081 = vpop.f32.mrf.mxu0
  %v2082 = vadd.f32 %v1949, %v2081
  %v2083 = vpop.f32.mrf.mxu0
  %v2084 = vadd.f32 %v1951, %v2083
  %2085 = vmatmul.bf16.gmra.mxu0 %v1452
  %v2086 = vpop.f32.mrf.mxu0
  %v2087 = vadd.f32 %v1954, %v2086
  %v2088 = vpop.f32.mrf.mxu0
  %v2089 = vadd.f32 %v1956, %v2088
  %2090 = vmatmul.bf16.gmra.mxu0 %v1457
  %v2091 = vpop.f32.mrf.mxu0
  %v2092 = vadd.f32 %v1959, %v2091
  %v2093 = vpop.f32.mrf.mxu0
  %v2094 = vadd.f32 %v1961, %v2093
  %2095 = vmatmul.bf16.gmra.mxu0 %v1462
  %v2096 = vpop.f32.mrf.mxu0
  %v2097 = vadd.f32 %v1964, %v2096
  %v2098 = vpop.f32.mrf.mxu0
  %v2099 = vadd.f32 %v1966, %v2098
  %2100 = vmatmul.bf16.gmra.mxu0 %v1467
  %v2101 = vpop.f32.mrf.mxu0
  %v2102 = vadd.f32 %v1969, %v2101
  %v2103 = vpop.f32.mrf.mxu0
  %v2104 = vadd.f32 %v1971, %v2103
  %2105 = vmatmul.bf16.gmra.mxu0 %v1472
  %v2106 = vpop.f32.mrf.mxu0
  %v2107 = vadd.f32 %v1974, %v2106
  %v2108 = vpop.f32.mrf.mxu0
  %v2109 = vadd.f32 %v1976, %v2108
  %2110 = vmatmul.bf16.gmra.mxu0 %v1477
  %v2111 = vpop.f32.mrf.mxu0
  %v2112 = vadd.f32 %v1979, %v2111
  %v2113 = vpop.f32.mrf.mxu0
  %v2114 = vadd.f32 %v1981, %v2113
  %2115 = vmatmul.bf16.gmra.mxu0 %v1482
  %v2116 = vpop.f32.mrf.mxu0
  %v2117 = vadd.f32 %v1984, %v2116
  %v2118 = vpop.f32.mrf.mxu0
  %v2119 = vadd.f32 %v1986, %v2118
  %2120 = vmatmul.bf16.gmra.mxu0 %v1487
  %v2121 = vpop.f32.mrf.mxu0
  %v2122 = vadd.f32 %v1989, %v2121
  %v2123 = vpop.f32.mrf.mxu0
  %v2124 = vadd.f32 %v1991, %v2123
  %2125 = vmatmul.bf16.gmra.mxu0 %v1492
  %v2126 = vpop.f32.mrf.mxu0
  %v2127 = vadd.f32 %v1994, %v2126
  %v2128 = vpop.f32.mrf.mxu0
  %v2129 = vadd.f32 %v1996, %v2128
  %2130 = vmatmul.bf16.gmra.mxu0 %v1497
  %v2131 = vpop.f32.mrf.mxu0
  %v2132 = vadd.f32 %v1999, %v2131
  %v2133 = vpop.f32.mrf.mxu0
  %v2134 = vadd.f32 %v2001, %v2133
  %2135 = vmatmul.bf16.gmra.mxu0 %v1502
  %v2136 = vpop.f32.mrf.mxu0
  %v2137 = vadd.f32 %v2004, %v2136
  %v2138 = vpop.f32.mrf.mxu0
  %v2139 = vadd.f32 %v2006, %v2138
  %2140 = vmatmul.bf16.gmra.mxu0 %v1507
  %v2141 = vpop.f32.mrf.mxu0
  %v2142 = vadd.f32 %v2009, %v2141
  %v2143 = vpop.f32.mrf.mxu0
  %v2144 = vadd.f32 %v2011, %v2143
  %2145 = vmatmul.bf16.gmra.mxu0 %v1512
  %v2146 = vpop.f32.mrf.mxu0
  %v2147 = vadd.f32 %v2014, %v2146
  %v2148 = vpop.f32.mrf.mxu0
  %2149 = vdwg.mxu0
  %2150 = vmatpush.bf16.msra.mxu0 %v1759
  %2151 = vmatpush.bf16.msra.mxu0 %v1758
  %2152 = vmatpush.bf16.msra.mxu0 %v1757
  %2153 = vmatpush.bf16.msra.mxu0 %v1756
  %2154 = vmatpush.bf16.msra.mxu0 %v1755
  %2155 = vmatpush.bf16.msra.mxu0 %v1754
  %2156 = vmatpush.bf16.msra.mxu0 %v1753
  %2157 = vmatpush.bf16.msra.mxu0 %v1752
  %2158 = vmatmul.bf16.gmra.mxu0 %v1393
  %v2159 = vpop.f32.mrf.mxu0
  %v2160 = vadd.f32 %v2027, %v2159
  %v2161 = vpop.f32.mrf.mxu0
  %v2162 = vadd.f32 %v2029, %v2161
  %2163 = vmatmul.bf16.gmra.mxu0 %v1398
  %v2164 = vpop.f32.mrf.mxu0
  %v2165 = vadd.f32 %v2032, %v2164
  %v2166 = vpop.f32.mrf.mxu0
  %v2167 = vadd.f32 %v2034, %v2166
  %2168 = vmatmul.bf16.gmra.mxu0 %v1403
  %v2169 = vpop.f32.mrf.mxu0
  %v2170 = vadd.f32 %v2037, %v2169
  %v2171 = vpop.f32.mrf.mxu0
  %v2172 = vadd.f32 %v2039, %v2171
  %2173 = vmatmul.bf16.gmra.mxu0 %v1408
  %v2174 = vpop.f32.mrf.mxu0
  %v2175 = vadd.f32 %v2042, %v2174
  %v2176 = vpop.f32.mrf.mxu0
  %v2177 = vadd.f32 %v2044, %v2176
  %2178 = vmatmul.bf16.gmra.mxu0 %v1413
  %v2179 = vpop.f32.mrf.mxu0
  %v2180 = vadd.f32 %v2047, %v2179
  %v2181 = vpop.f32.mrf.mxu0
  %v2182 = vadd.f32 %v2049, %v2181
  %2183 = vmatmul.bf16.gmra.mxu0 %v1418
  %v2184 = vpop.f32.mrf.mxu0
  %v2185 = vadd.f32 %v2052, %v2184
  %v2186 = vpop.f32.mrf.mxu0
  %v2187 = vadd.f32 %v2054, %v2186
  %2188 = vmatmul.bf16.gmra.mxu0 %v1423
  %v2189 = vpop.f32.mrf.mxu0
  %v2190 = vadd.f32 %v2057, %v2189
  %v2191 = vpop.f32.mrf.mxu0
  %v2192 = vadd.f32 %v2059, %v2191
  %2193 = vmatmul.bf16.gmra.mxu0 %v1428
  %v2194 = vpop.f32.mrf.mxu0
  %v2195 = vadd.f32 %v2062, %v2194
  %v2196 = vpop.f32.mrf.mxu0
  %v2197 = vadd.f32 %v2064, %v2196
  %2198 = vmatmul.bf16.gmra.mxu0 %v1433
  %v2199 = vpop.f32.mrf.mxu0
  %v2200 = vadd.f32 %v2067, %v2199
  %v2201 = vpop.f32.mrf.mxu0
  %v2202 = vadd.f32 %v2069, %v2201
  %2203 = vmatmul.bf16.gmra.mxu0 %v1438
  %v2204 = vpop.f32.mrf.mxu0
  %v2205 = vadd.f32 %v2072, %v2204
  %v2206 = vpop.f32.mrf.mxu0
  %v2207 = vadd.f32 %v2074, %v2206
  %2208 = vmatmul.bf16.gmra.mxu0 %v1443
  %v2209 = vpop.f32.mrf.mxu0
  %v2210 = vadd.f32 %v2077, %v2209
  %v2211 = vpop.f32.mrf.mxu0
  %v2212 = vadd.f32 %v2079, %v2211
  %2213 = vmatmul.bf16.gmra.mxu0 %v1448
  %v2214 = vpop.f32.mrf.mxu0
  %v2215 = vadd.f32 %v2082, %v2214
  %v2216 = vpop.f32.mrf.mxu0
  %v2217 = vadd.f32 %v2084, %v2216
  %2218 = vmatmul.bf16.gmra.mxu0 %v1453
  %v2219 = vpop.f32.mrf.mxu0
  %v2220 = vadd.f32 %v2087, %v2219
  %v2221 = vpop.f32.mrf.mxu0
  %v2222 = vadd.f32 %v2089, %v2221
  %2223 = vmatmul.bf16.gmra.mxu0 %v1458
  %v2224 = vpop.f32.mrf.mxu0
  %v2225 = vadd.f32 %v2092, %v2224
  %v2226 = vpop.f32.mrf.mxu0
  %v2227 = vadd.f32 %v2094, %v2226
  %2228 = vmatmul.bf16.gmra.mxu0 %v1463
  %v2229 = vpop.f32.mrf.mxu0
  %v2230 = vadd.f32 %v2097, %v2229
  %v2231 = vpop.f32.mrf.mxu0
  %v2232 = vadd.f32 %v2099, %v2231
  %2233 = vmatmul.bf16.gmra.mxu0 %v1468
  %v2234 = vpop.f32.mrf.mxu0
  %v2235 = vadd.f32 %v2102, %v2234
  %v2236 = vpop.f32.mrf.mxu0
  %v2237 = vadd.f32 %v2104, %v2236
  %2238 = vmatmul.bf16.gmra.mxu0 %v1473
  %v2239 = vpop.f32.mrf.mxu0
  %v2240 = vadd.f32 %v2107, %v2239
  %v2241 = vpop.f32.mrf.mxu0
  %v2242 = vadd.f32 %v2109, %v2241
  %2243 = vmatmul.bf16.gmra.mxu0 %v1478
  %v2244 = vpop.f32.mrf.mxu0
  %v2245 = vadd.f32 %v2112, %v2244
  %v2246 = vpop.f32.mrf.mxu0
  %v2247 = vadd.f32 %v2114, %v2246
  %2248 = vmatmul.bf16.gmra.mxu0 %v1483
  %v2249 = vpop.f32.mrf.mxu0
  %v2250 = vadd.f32 %v2117, %v2249
  %v2251 = vpop.f32.mrf.mxu0
  %v2252 = vadd.f32 %v2119, %v2251
  %2253 = vmatmul.bf16.gmra.mxu0 %v1488
  %v2254 = vpop.f32.mrf.mxu0
  %v2255 = vadd.f32 %v2122, %v2254
  %v2256 = vpop.f32.mrf.mxu0
  %v2257 = vadd.f32 %v2124, %v2256
  %2258 = vmatmul.bf16.gmra.mxu0 %v1493
  %v2259 = vpop.f32.mrf.mxu0
  %v2260 = vadd.f32 %v2127, %v2259
  %v2261 = vpop.f32.mrf.mxu0
  %v2262 = vadd.f32 %v2129, %v2261
  %2263 = vmatmul.bf16.gmra.mxu0 %v1498
  %v2264 = vpop.f32.mrf.mxu0
  %v2265 = vadd.f32 %v2132, %v2264
  %v2266 = vpop.f32.mrf.mxu0
  %v2267 = vadd.f32 %v2134, %v2266
  %2268 = vmatmul.bf16.gmra.mxu0 %v1503
  %v2269 = vpop.f32.mrf.mxu0
  %v2270 = vadd.f32 %v2137, %v2269
  %v2271 = vpop.f32.mrf.mxu0
  %v2272 = vadd.f32 %v2139, %v2271
  %2273 = vmatmul.bf16.gmra.mxu0 %v1508
  %v2274 = vpop.f32.mrf.mxu0
  %v2275 = vadd.f32 %v2142, %v2274
  %v2276 = vpop.f32.mrf.mxu0
  %v2277 = vadd.f32 %v2144, %v2276
  %2278 = vmatmul.bf16.gmra.mxu0 %v1513
  %v2279 = vpop.f32.mrf.mxu0
  %v2280 = vadd.f32 %v2147, %v2279
  %v2281 = vpop.f32.mrf.mxu0
  %2282 = vdwg.mxu0
  %2283 = vmatpush.bf16.msra.mxu0 %v1767
  %2284 = vmatpush.bf16.msra.mxu0 %v1766
  %2285 = vmatpush.bf16.msra.mxu0 %v1765
  %2286 = vmatpush.bf16.msra.mxu0 %v1764
  %2287 = vmatpush.bf16.msra.mxu0 %v1763
  %2288 = vmatpush.bf16.msra.mxu0 %v1762
  %2289 = vmatpush.bf16.msra.mxu0 %v1761
  %2290 = vmatpush.bf16.msra.mxu0 %v1760
  %2291 = vmatmul.bf16.gmra.mxu0 %v1394
  %v2292 = vpop.f32.mrf.mxu0
  %v2293 = vadd.f32 %v2160, %v2292
  %v2294 = vpop.f32.mrf.mxu0
  %v2295 = vadd.f32 %v2162, %v2294
  %2296 = vmatmul.bf16.gmra.mxu0 %v1399
  %v2297 = vpop.f32.mrf.mxu0
  %v2298 = vadd.f32 %v2165, %v2297
  %v2299 = vpop.f32.mrf.mxu0
  %v2300 = vadd.f32 %v2167, %v2299
  %2301 = vmatmul.bf16.gmra.mxu0 %v1404
  %v2302 = vpop.f32.mrf.mxu0
  %v2303 = vadd.f32 %v2170, %v2302
  %v2304 = vpop.f32.mrf.mxu0
  %v2305 = vadd.f32 %v2172, %v2304
  %2306 = vmatmul.bf16.gmra.mxu0 %v1409
  %v2307 = vpop.f32.mrf.mxu0
  %v2308 = vadd.f32 %v2175, %v2307
  %v2309 = vpop.f32.mrf.mxu0
  %v2310 = vadd.f32 %v2177, %v2309
  %2311 = vmatmul.bf16.gmra.mxu0 %v1414
  %v2312 = vpop.f32.mrf.mxu0
  %v2313 = vadd.f32 %v2180, %v2312
  %v2314 = vpop.f32.mrf.mxu0
  %v2315 = vadd.f32 %v2182, %v2314
  %2316 = vmatmul.bf16.gmra.mxu0 %v1419
  %v2317 = vpop.f32.mrf.mxu0
  %v2318 = vadd.f32 %v2185, %v2317
  %v2319 = vpop.f32.mrf.mxu0
  %v2320 = vadd.f32 %v2187, %v2319
  %2321 = vmatmul.bf16.gmra.mxu0 %v1424
  %v2322 = vpop.f32.mrf.mxu0
  %v2323 = vadd.f32 %v2190, %v2322
  %v2324 = vpop.f32.mrf.mxu0
  %v2325 = vadd.f32 %v2192, %v2324
  %2326 = vmatmul.bf16.gmra.mxu0 %v1429
  %v2327 = vpop.f32.mrf.mxu0
  %v2328 = vadd.f32 %v2195, %v2327
  %v2329 = vpop.f32.mrf.mxu0
  %v2330 = vadd.f32 %v2197, %v2329
  %2331 = vmatmul.bf16.gmra.mxu0 %v1434
  %v2332 = vpop.f32.mrf.mxu0
  %v2333 = vadd.f32 %v2200, %v2332
  %v2334 = vpop.f32.mrf.mxu0
  %v2335 = vadd.f32 %v2202, %v2334
  %2336 = vmatmul.bf16.gmra.mxu0 %v1439
  %v2337 = vpop.f32.mrf.mxu0
  %v2338 = vadd.f32 %v2205, %v2337
  %v2339 = vpop.f32.mrf.mxu0
  %v2340 = vadd.f32 %v2207, %v2339
  %2341 = vmatmul.bf16.gmra.mxu0 %v1444
  %v2342 = vpop.f32.mrf.mxu0
  %v2343 = vadd.f32 %v2210, %v2342
  %v2344 = vpop.f32.mrf.mxu0
  %v2345 = vadd.f32 %v2212, %v2344
  %2346 = vmatmul.bf16.gmra.mxu0 %v1449
  %v2347 = vpop.f32.mrf.mxu0
  %v2348 = vadd.f32 %v2215, %v2347
  %v2349 = vpop.f32.mrf.mxu0
  %v2350 = vadd.f32 %v2217, %v2349
  %2351 = vmatmul.bf16.gmra.mxu0 %v1454
  %v2352 = vpop.f32.mrf.mxu0
  %v2353 = vadd.f32 %v2220, %v2352
  %v2354 = vpop.f32.mrf.mxu0
  %v2355 = vadd.f32 %v2222, %v2354
  %2356 = vmatmul.bf16.gmra.mxu0 %v1459
  %v2357 = vpop.f32.mrf.mxu0
  %v2358 = vadd.f32 %v2225, %v2357
  %v2359 = vpop.f32.mrf.mxu0
  %v2360 = vadd.f32 %v2227, %v2359
  %2361 = vmatmul.bf16.gmra.mxu0 %v1464
  %v2362 = vpop.f32.mrf.mxu0
  %v2363 = vadd.f32 %v2230, %v2362
  %v2364 = vpop.f32.mrf.mxu0
  %v2365 = vadd.f32 %v2232, %v2364
  %2366 = vmatmul.bf16.gmra.mxu0 %v1469
  %v2367 = vpop.f32.mrf.mxu0
  %v2368 = vadd.f32 %v2235, %v2367
  %v2369 = vpop.f32.mrf.mxu0
  %v2370 = vadd.f32 %v2237, %v2369
  %2371 = vmatmul.bf16.gmra.mxu0 %v1474
  %v2372 = vpop.f32.mrf.mxu0
  %v2373 = vadd.f32 %v2240, %v2372
  %v2374 = vpop.f32.mrf.mxu0
  %v2375 = vadd.f32 %v2242, %v2374
  %2376 = vmatmul.bf16.gmra.mxu0 %v1479
  %v2377 = vpop.f32.mrf.mxu0
  %v2378 = vadd.f32 %v2245, %v2377
  %v2379 = vpop.f32.mrf.mxu0
  %v2380 = vadd.f32 %v2247, %v2379
  %2381 = vmatmul.bf16.gmra.mxu0 %v1484
  %v2382 = vpop.f32.mrf.mxu0
  %v2383 = vadd.f32 %v2250, %v2382
  %v2384 = vpop.f32.mrf.mxu0
  %v2385 = vadd.f32 %v2252, %v2384
  %2386 = vmatmul.bf16.gmra.mxu0 %v1489
  %v2387 = vpop.f32.mrf.mxu0
  %v2388 = vadd.f32 %v2255, %v2387
  %v2389 = vpop.f32.mrf.mxu0
  %v2390 = vadd.f32 %v2257, %v2389
  %2391 = vmatmul.bf16.gmra.mxu0 %v1494
  %v2392 = vpop.f32.mrf.mxu0
  %v2393 = vadd.f32 %v2260, %v2392
  %v2394 = vpop.f32.mrf.mxu0
  %v2395 = vadd.f32 %v2262, %v2394
  %2396 = vmatmul.bf16.gmra.mxu0 %v1499
  %v2397 = vpop.f32.mrf.mxu0
  %v2398 = vadd.f32 %v2265, %v2397
  %v2399 = vpop.f32.mrf.mxu0
  %v2400 = vadd.f32 %v2267, %v2399
  %2401 = vmatmul.bf16.gmra.mxu0 %v1504
  %v2402 = vpop.f32.mrf.mxu0
  %v2403 = vadd.f32 %v2270, %v2402
  %v2404 = vpop.f32.mrf.mxu0
  %v2405 = vadd.f32 %v2272, %v2404
  %2406 = vmatmul.bf16.gmra.mxu0 %v1509
  %v2407 = vpop.f32.mrf.mxu0
  %v2408 = vadd.f32 %v2275, %v2407
  %v2409 = vpop.f32.mrf.mxu0
  %v2410 = vadd.f32 %v2277, %v2409
  %2411 = vmatmul.bf16.gmra.mxu0 %v1514
  %v2412 = vpop.f32.mrf.mxu0
  %v2413 = vadd.f32 %v2280, %v2412
  %v2414 = vpop.f32.mrf.mxu0
  %2415 = vdwg.mxu0
  %2416 = vmatpush.bf16.msra.mxu0 0
  %2417 = vmatpush.bf16.msra.mxu0 0
  %2418 = vmatpush.bf16.msra.mxu0 0
  %2419 = vmatpush.bf16.msra.mxu0 0
  %2420 = vmatpush.bf16.msra.mxu0 %v1771
  %2421 = vmatpush.bf16.msra.mxu0 %v1770
  %2422 = vmatpush.bf16.msra.mxu0 %v1769
  %2423 = vmatpush.bf16.msra.mxu0 %v1768
  %2424 = vmatmul.bf16.gmra.mxu0 %v1810
  %v2425 = vpop.f32.mrf.mxu0
  %v2426 = vadd.f32 %v2293, %v2425
  %v2427 = vpop.f32.mrf.mxu0
  %v2428 = vadd.f32 %v2295, %v2427
  %2429 = vmatmul.bf16.gmra.mxu0 %v1813
  %v2430 = vpop.f32.mrf.mxu0
  %v2431 = vadd.f32 %v2298, %v2430
  %v2432 = vpop.f32.mrf.mxu0
  %v2433 = vadd.f32 %v2300, %v2432
  %2434 = vmatmul.bf16.gmra.mxu0 %v1816
  %v2435 = vpop.f32.mrf.mxu0
  %v2436 = vadd.f32 %v2303, %v2435
  %v2437 = vpop.f32.mrf.mxu0
  %v2438 = vadd.f32 %v2305, %v2437
  %2439 = vmatmul.bf16.gmra.mxu0 %v1819
  %v2440 = vpop.f32.mrf.mxu0
  %v2441 = vadd.f32 %v2308, %v2440
  %v2442 = vpop.f32.mrf.mxu0
  %v2443 = vadd.f32 %v2310, %v2442
  %2444 = vmatmul.bf16.gmra.mxu0 %v1822
  %v2445 = vpop.f32.mrf.mxu0
  %v2446 = vadd.f32 %v2313, %v2445
  %v2447 = vpop.f32.mrf.mxu0
  %v2448 = vadd.f32 %v2315, %v2447
  %2449 = vmatmul.bf16.gmra.mxu0 %v1825
  %v2450 = vpop.f32.mrf.mxu0
  %v2451 = vadd.f32 %v2318, %v2450
  %v2452 = vpop.f32.mrf.mxu0
  %v2453 = vadd.f32 %v2320, %v2452
  %2454 = vmatmul.bf16.gmra.mxu0 %v1828
  %v2455 = vpop.f32.mrf.mxu0
  %v2456 = vadd.f32 %v2323, %v2455
  %v2457 = vpop.f32.mrf.mxu0
  %v2458 = vadd.f32 %v2325, %v2457
  %2459 = vmatmul.bf16.gmra.mxu0 %v1831
  %v2460 = vpop.f32.mrf.mxu0
  %v2461 = vadd.f32 %v2328, %v2460
  %v2462 = vpop.f32.mrf.mxu0
  %v2463 = vadd.f32 %v2330, %v2462
  %2464 = vmatmul.bf16.gmra.mxu0 %v1834
  %v2465 = vpop.f32.mrf.mxu0
  %v2466 = vadd.f32 %v2333, %v2465
  %v2467 = vpop.f32.mrf.mxu0
  %v2468 = vadd.f32 %v2335, %v2467
  %2469 = vmatmul.bf16.gmra.mxu0 %v1837
  %v2470 = vpop.f32.mrf.mxu0
  %v2471 = vadd.f32 %v2338, %v2470
  %v2472 = vpop.f32.mrf.mxu0
  %v2473 = vadd.f32 %v2340, %v2472
  %2474 = vmatmul.bf16.gmra.mxu0 %v1840
  %v2475 = vpop.f32.mrf.mxu0
  %v2476 = vadd.f32 %v2343, %v2475
  %v2477 = vpop.f32.mrf.mxu0
  %v2478 = vadd.f32 %v2345, %v2477
  %2479 = vmatmul.bf16.gmra.mxu0 %v1843
  %v2480 = vpop.f32.mrf.mxu0
  %v2481 = vadd.f32 %v2348, %v2480
  %v2482 = vpop.f32.mrf.mxu0
  %v2483 = vadd.f32 %v2350, %v2482
  %2484 = vmatmul.bf16.gmra.mxu0 %v1846
  %v2485 = vpop.f32.mrf.mxu0
  %v2486 = vadd.f32 %v2353, %v2485
  %v2487 = vpop.f32.mrf.mxu0
  %v2488 = vadd.f32 %v2355, %v2487
  %2489 = vmatmul.bf16.gmra.mxu0 %v1849
  %v2490 = vpop.f32.mrf.mxu0
  %v2491 = vadd.f32 %v2358, %v2490
  %v2492 = vpop.f32.mrf.mxu0
  %v2493 = vadd.f32 %v2360, %v2492
  %2494 = vmatmul.bf16.gmra.mxu0 %v1852
  %v2495 = vpop.f32.mrf.mxu0
  %v2496 = vadd.f32 %v2363, %v2495
  %v2497 = vpop.f32.mrf.mxu0
  %v2498 = vadd.f32 %v2365, %v2497
  %2499 = vmatmul.bf16.gmra.mxu0 %v1855
  %v2500 = vpop.f32.mrf.mxu0
  %v2501 = vadd.f32 %v2368, %v2500
  %v2502 = vpop.f32.mrf.mxu0
  %v2503 = vadd.f32 %v2370, %v2502
  %2504 = vmatmul.bf16.gmra.mxu0 %v1858
  %v2505 = vpop.f32.mrf.mxu0
  %v2506 = vadd.f32 %v2373, %v2505
  %v2507 = vpop.f32.mrf.mxu0
  %v2508 = vadd.f32 %v2375, %v2507
  %2509 = vmatmul.bf16.gmra.mxu0 %v1861
  %v2510 = vpop.f32.mrf.mxu0
  %v2511 = vadd.f32 %v2378, %v2510
  %v2512 = vpop.f32.mrf.mxu0
  %v2513 = vadd.f32 %v2380, %v2512
  %2514 = vmatmul.bf16.gmra.mxu0 %v1864
  %v2515 = vpop.f32.mrf.mxu0
  %v2516 = vadd.f32 %v2383, %v2515
  %v2517 = vpop.f32.mrf.mxu0
  %v2518 = vadd.f32 %v2385, %v2517
  %2519 = vmatmul.bf16.gmra.mxu0 %v1867
  %v2520 = vpop.f32.mrf.mxu0
  %v2521 = vadd.f32 %v2388, %v2520
  %v2522 = vpop.f32.mrf.mxu0
  %v2523 = vadd.f32 %v2390, %v2522
  %2524 = vmatmul.bf16.gmra.mxu0 %v1870
  %v2525 = vpop.f32.mrf.mxu0
  %v2526 = vadd.f32 %v2393, %v2525
  %v2527 = vpop.f32.mrf.mxu0
  %v2528 = vadd.f32 %v2395, %v2527
  %2529 = vmatmul.bf16.gmra.mxu0 %v1873
  %v2530 = vpop.f32.mrf.mxu0
  %v2531 = vadd.f32 %v2398, %v2530
  %v2532 = vpop.f32.mrf.mxu0
  %v2533 = vadd.f32 %v2400, %v2532
  %2534 = vmatmul.bf16.gmra.mxu0 %v1876
  %v2535 = vpop.f32.mrf.mxu0
  %v2536 = vadd.f32 %v2403, %v2535
  %v2537 = vpop.f32.mrf.mxu0
  %v2538 = vadd.f32 %v2405, %v2537
  %2539 = vmatmul.bf16.gmra.mxu0 %v1879
  %v2540 = vpop.f32.mrf.mxu0
  %v2541 = vadd.f32 %v2408, %v2540
  %v2542 = vpop.f32.mrf.mxu0
  %v2543 = vadd.f32 %v2410, %v2542
  %2544 = vmatmul.bf16.gmra.mxu0 %v1882
  %v2545 = vpop.f32.mrf.mxu0
  %v2546 = vadd.f32 %v2413, %v2545
  %v2547 = vpop.f32.mrf.mxu0
  %2548 = vdwg.mxu0
  %v2549 = vmax.f32 %v2426, 0.0
  %v2550 = vmax.f32 %v2428, 0.0
  %v2551 = vmax.f32 %v2431, 0.0
  %v2552 = vmax.f32 %v2433, 0.0
  %v2553 = vmax.f32 %v2436, 0.0
  %v2554 = vmax.f32 %v2438, 0.0
  %v2555 = vmax.f32 %v2441, 0.0
  %v2556 = vmax.f32 %v2443, 0.0
  %v2557 = vmax.f32 %v2446, 0.0
  %v2558 = vmax.f32 %v2448, 0.0
  %v2559 = vmax.f32 %v2451, 0.0
  %v2560 = vmax.f32 %v2453, 0.0
  %v2561 = vmax.f32 %v2456, 0.0
  %v2562 = vmax.f32 %v2458, 0.0
  %v2563 = vmax.f32 %v2461, 0.0
  %v2564 = vmax.f32 %v2463, 0.0
  %v2565 = vmax.f32 %v2466, 0.0
  %v2566 = vmax.f32 %v2468, 0.0
  %v2567 = vmax.f32 %v2471, 0.0
  %v2568 = vmax.f32 %v2473, 0.0
  %v2569 = vmax.f32 %v2476, 0.0
  %v2570 = vmax.f32 %v2478, 0.0
  %v2571 = vmax.f32 %v2481, 0.0
  %v2572 = vmax.f32 %v2483, 0.0
  %v2573 = vmax.f32 %v2486, 0.0
  %v2574 = vmax.f32 %v2488, 0.0
  %v2575 = vmax.f32 %v2491, 0.0
  %v2576 = vmax.f32 %v2493, 0.0
  %v2577 = vmax.f32 %v2496, 0.0
  %v2578 = vmax.f32 %v2498, 0.0
  %v2579 = vmax.f32 %v2501, 0.0
  %v2580 = vmax.f32 %v2503, 0.0
  %v2581 = vmax.f32 %v2506, 0.0
  %v2582 = vmax.f32 %v2508, 0.0
  %v2583 = vmax.f32 %v2511, 0.0
  %v2584 = vmax.f32 %v2513, 0.0
  %v2585 = vmax.f32 %v2516, 0.0
  %v2586 = vmax.f32 %v2518, 0.0
  %v2587 = vmax.f32 %v2521, 0.0
  %v2588 = vmax.f32 %v2523, 0.0
  %v2589 = vmax.f32 %v2526, 0.0
  %v2590 = vmax.f32 %v2528, 0.0
  %v2591 = vmax.f32 %v2531, 0.0
  %v2592 = vmax.f32 %v2533, 0.0
  %v2593 = vmax.f32 %v2536, 0.0
  %v2594 = vmax.f32 %v2538, 0.0
  %v2595 = vmax.f32 %v2541, 0.0
  %v2596 = vmax.f32 %v2543, 0.0
  %v2597 = vmax.f32 %v2546, 0.0
  %v2598 = vpack.c.bf16 %v2549, %v2549
  %v2599 = vpack.c.bf16 %v2550, %v2550
  %v2600 = vpack.c.bf16 %v2551, %v2551
  %v2601 = vpack.c.bf16 %v2552, %v2552
  %v2602 = vpack.c.bf16 %v2553, %v2553
  %v2603 = vpack.c.bf16 %v2554, %v2554
  %v2604 = vpack.c.bf16 %v2555, %v2555
  %v2605 = vpack.c.bf16 %v2556, %v2556
  %v2606 = vpack.c.bf16 %v2557, %v2557
  %v2607 = vpack.c.bf16 %v2558, %v2558
  %v2608 = vpack.c.bf16 %v2559, %v2559
  %v2609 = vpack.c.bf16 %v2560, %v2560
  %v2610 = vpack.c.bf16 %v2561, %v2561
  %v2611 = vpack.c.bf16 %v2562, %v2562
  %v2612 = vpack.c.bf16 %v2563, %v2563
  %v2613 = vpack.c.bf16 %v2564, %v2564
  %v2614 = vpack.c.bf16 %v2565, %v2565
  %v2615 = vpack.c.bf16 %v2566, %v2566
  %v2616 = vpack.c.bf16 %v2567, %v2567
  %v2617 = vpack.c.bf16 %v2568, %v2568
  %v2618 = vpack.c.bf16 %v2569, %v2569
  %v2619 = vpack.c.bf16 %v2570, %v2570
  %v2620 = vpack.c.bf16 %v2571, %v2571
  %v2621 = vpack.c.bf16 %v2572, %v2572
  %v2622 = vpack.c.bf16 %v2573, %v2573
  %v2623 = vpack.c.bf16 %v2574, %v2574
  %v2624 = vpack.c.bf16 %v2575, %v2575
  %v2625 = vpack.c.bf16 %v2576, %v2576
  %v2626 = vpack.c.bf16 %v2577, %v2577
  %v2627 = vpack.c.bf16 %v2578, %v2578
  %v2628 = vpack.c.bf16 %v2579, %v2579
  %v2629 = vpack.c.bf16 %v2580, %v2580
  %v2630 = vpack.c.bf16 %v2581, %v2581
  %v2631 = vpack.c.bf16 %v2582, %v2582
  %v2632 = vpack.c.bf16 %v2583, %v2583
  %v2633 = vpack.c.bf16 %v2584, %v2584
  %v2634 = vpack.c.bf16 %v2585, %v2585
  %v2635 = vpack.c.bf16 %v2586, %v2586
  %v2636 = vpack.c.bf16 %v2587, %v2587
  %v2637 = vpack.c.bf16 %v2588, %v2588
  %v2638 = vpack.c.bf16 %v2589, %v2589
  %v2639 = vpack.c.bf16 %v2590, %v2590
  %v2640 = vpack.c.bf16 %v2591, %v2591
  %v2641 = vpack.c.bf16 %v2592, %v2592
  %v2642 = vpack.c.bf16 %v2593, %v2593
  %v2643 = vpack.c.bf16 %v2594, %v2594
  %v2644 = vpack.c.bf16 %v2595, %v2595
  %v2645 = vpack.c.bf16 %v2596, %v2596
  %v2646 = vpack.c.bf16 %v2597, %v2597
  %2647 = vst [vmem:[#allocation2] sm:$0xf] %v2598
  %2648 = vst [vmem:[#allocation2 + $0x4] sm:$0xf] %v2599
  %2649 = vst [vmem:[#allocation2 + $0x8] sm:$0xf] %v2600
  %2650 = vst [vmem:[#allocation2 + $0xc] sm:$0xf] %v2601
  %2651 = vst [vmem:[#allocation2 + $0x10] sm:$0xf] %v2602
  %2652 = vst [vmem:[#allocation2 + $0x14] sm:$0xf] %v2603
  %2653 = vst [vmem:[#allocation2 + $0x18] sm:$0xf] %v2604
  %2654 = vst [vmem:[#allocation2 + $0x1c] sm:$0xf] %v2605
  %2655 = vst [vmem:[#allocation2 + $0x20] sm:$0xf] %v2606
  %2656 = vst [vmem:[#allocation2 + $0x24] sm:$0xf] %v2607
  %2657 = vst [vmem:[#allocation2 + $0x28] sm:$0xf] %v2608
  %2658 = vst [vmem:[#allocation2 + $0x2c] sm:$0xf] %v2609
  %2659 = vst [vmem:[#allocation2 + $0x30] sm:$0xf] %v2610
  %2660 = vst [vmem:[#allocation2 + $0x34] sm:$0xf] %v2611
  %2661 = vst [vmem:[#allocation2 + $0x38] sm:$0xf] %v2612
  %2662 = vst [vmem:[#allocation2 + $0x3c] sm:$0xf] %v2613
  %2663 = vst [vmem:[#allocation2 + $0x40] sm:$0xf] %v2614
  %2664 = vst [vmem:[#allocation2 + $0x44] sm:$0xf] %v2615
  %2665 = vst [vmem:[#allocation2 + $0x48] sm:$0xf] %v2616
  %2666 = vst [vmem:[#allocation2 + $0x4c] sm:$0xf] %v2617
  %2667 = vst [vmem:[#allocation2 + $0x50] sm:$0xf] %v2618
  %2668 = vst [vmem:[#allocation2 + $0x54] sm:$0xf] %v2619
  %2669 = vst [vmem:[#allocation2 + $0x58] sm:$0xf] %v2620
  %2670 = vst [vmem:[#allocation2 + $0x5c] sm:$0xf] %v2621
  %2671 = vst [vmem:[#allocation2 + $0x60] sm:$0xf] %v2622
  %2672 = vst [vmem:[#allocation2 + $0x64] sm:$0xf] %v2623
  %2673 = vst [vmem:[#allocation2 + $0x68] sm:$0xf] %v2624
  %2674 = vst [vmem:[#allocation2 + $0x6c] sm:$0xf] %v2625
  %2675 = vst [vmem:[#allocation2 + $0x70] sm:$0xf] %v2626
  %2676 = vst [vmem:[#allocation2 + $0x74] sm:$0xf] %v2627
  %2677 = vst [vmem:[#allocation2 + $0x78] sm:$0xf] %v2628
  %2678 = vst [vmem:[#allocation2 + $0x7c] sm:$0xf] %v2629
  %2679 = vst [vmem:[#allocation2 + $0x80] sm:$0xf] %v2630
  %2680 = vst [vmem:[#allocation2 + $0x84] sm:$0xf] %v2631
  %2681 = vst [vmem:[#allocation2 + $0x88] sm:$0xf] %v2632
  %2682 = vst [vmem:[#allocation2 + $0x8c] sm:$0xf] %v2633
  %2683 = vst [vmem:[#allocation2 + $0x90] sm:$0xf] %v2634
  %2684 = vst [vmem:[#allocation2 + $0x94] sm:$0xf] %v2635
  %2685 = vst [vmem:[#allocation2 + $0x98] sm:$0xf] %v2636
  %2686 = vst [vmem:[#allocation2 + $0x9c] sm:$0xf] %v2637
  %2687 = vst [vmem:[#allocation2 + $0xa0] sm:$0xf] %v2638
  %2688 = vst [vmem:[#allocation2 + $0xa4] sm:$0xf] %v2639
  %2689 = vst [vmem:[#allocation2 + $0xa8] sm:$0xf] %v2640
  %2690 = vst [vmem:[#allocation2 + $0xac] sm:$0xf] %v2641
  %2691 = vst [vmem:[#allocation2 + $0xb0] sm:$0xf] %v2642
  %2692 = vst [vmem:[#allocation2 + $0xb4] sm:$0xf] %v2643
  %2693 = vst [vmem:[#allocation2 + $0xb8] sm:$0xf] %v2644
  %2694 = vst [vmem:[#allocation2 + $0xbc] sm:$0xf] %v2645
  %2695 = vst [vmem:[#allocation2 + $0xc0] sm:$0xf] %v2646
  %v2696 = vld [vmem:[#allocation2] sm:$0xff]
  %v2697 = vld [vmem:[#allocation2 + $0x8] sm:$0xff]
  %v2698 = vld [vmem:[#allocation2 + $0x10] sm:$0xff]
  %v2699 = vld [vmem:[#allocation2 + $0x18] sm:$0xff]
  %v2700 = vld [vmem:[#allocation2 + $0x20] sm:$0xff]
  %v2701 = vld [vmem:[#allocation2 + $0x28] sm:$0xff]
  %v2702 = vld [vmem:[#allocation2 + $0x30] sm:$0xff]
  %v2703 = vld [vmem:[#allocation2 + $0x38] sm:$0xff]
  %v2704 = vld [vmem:[#allocation2 + $0x40] sm:$0xff]
  %v2705 = vld [vmem:[#allocation2 + $0x48] sm:$0xff]
  %v2706 = vld [vmem:[#allocation2 + $0x50] sm:$0xff]
  %v2707 = vld [vmem:[#allocation2 + $0x58] sm:$0xff]
  %v2708 = vld [vmem:[#allocation2 + $0x60] sm:$0xff]
  %v2709 = vld [vmem:[#allocation2 + $0x68] sm:$0xff]
  %v2710 = vld [vmem:[#allocation2 + $0x70] sm:$0xff]
  %v2711 = vld [vmem:[#allocation2 + $0x78] sm:$0xff]
  %v2712 = vld [vmem:[#allocation2 + $0x80] sm:$0xff]
  %v2713 = vld [vmem:[#allocation2 + $0x88] sm:$0xff]
  %v2714 = vld [vmem:[#allocation2 + $0x90] sm:$0xff]
  %v2715 = vld [vmem:[#allocation2 + $0x98] sm:$0xff]
  %v2716 = vld [vmem:[#allocation2 + $0xa0] sm:$0xff]
  %v2717 = vld [vmem:[#allocation2 + $0xa8] sm:$0xff]
  %v2718 = vld [vmem:[#allocation2 + $0xb0] sm:$0xff]
  %v2719 = vld [vmem:[#allocation2 + $0xb8] sm:$0xff]
  %v2720 = vld [vmem:[#allocation2 + $0xc0] sm:$0xf]
  %v2721 = vld [vmem:[%s4] sm:$0xf]
  %v2722 = vld [vmem:[%s4 + $0x4] sm:$0xf]
  %v2723 = vld [vmem:[%s4 + $0x8] sm:$0xf]
  %v2724 = vld [vmem:[%s4 + $0xc] sm:$0xf]
  %v2725 = vld [vmem:[%s4 + $0x10] sm:$0xf]
  %v2726 = vld [vmem:[%s4 + $0x14] sm:$0xf]
  %v2727 = vld [vmem:[%s4 + $0x18] sm:$0xf]
  %v2728 = vld [vmem:[%s4 + $0x1c] sm:$0xf]
  %v2729 = vld [vmem:[%s4 + $0x20] sm:$0xf]
  %v2730 = vld [vmem:[%s4 + $0x24] sm:$0xf]
  %v2731 = vld [vmem:[%s4 + $0x28] sm:$0xf]
  %v2732 = vld [vmem:[%s4 + $0x2c] sm:$0xf]
  %v2733 = vld [vmem:[%s4 + $0x30] sm:$0xf]
  %v2734 = vld [vmem:[%s4 + $0x34] sm:$0xf]
  %v2735 = vld [vmem:[%s4 + $0x38] sm:$0xf]
  %v2736 = vld [vmem:[%s4 + $0x3c] sm:$0xf]
  %v2737 = vld [vmem:[%s4 + $0x40] sm:$0xf]
  %v2738 = vld [vmem:[%s4 + $0x44] sm:$0xf]
  %v2739 = vld [vmem:[%s4 + $0x48] sm:$0xf]
  %v2740 = vld [vmem:[%s4 + $0x4c] sm:$0xf]
  %v2741 = vld [vmem:[%s4 + $0x50] sm:$0xf]
  %v2742 = vld [vmem:[%s4 + $0x54] sm:$0xf]
  %v2743 = vld [vmem:[%s4 + $0x58] sm:$0xf]
  %v2744 = vld [vmem:[%s4 + $0x5c] sm:$0xf]
  %v2745 = vld [vmem:[%s4 + $0x60] sm:$0xf]
  %v2746 = vld [vmem:[%s4 + $0x64] sm:$0xf]
  %v2747 = vld [vmem:[%s4 + $0x68] sm:$0xf]
  %v2748 = vld [vmem:[%s4 + $0x6c] sm:$0xf]
  %v2749 = vld [vmem:[%s4 + $0x70] sm:$0xf]
  %v2750 = vld [vmem:[%s4 + $0x74] sm:$0xf]
  %v2751 = vld [vmem:[%s4 + $0x78] sm:$0xf]
  %v2752 = vld [vmem:[%s4 + $0x7c] sm:$0xf]
  %v2753 = vld [vmem:[%s4 + $0x80] sm:$0xf]
  %v2754 = vld [vmem:[%s4 + $0x84] sm:$0xf]
  %v2755 = vld [vmem:[%s4 + $0x88] sm:$0xf]
  %v2756 = vld [vmem:[%s4 + $0x8c] sm:$0xf]
  %v2757 = vld [vmem:[%s4 + $0x90] sm:$0xf]
  %v2758 = vld [vmem:[%s4 + $0x94] sm:$0xf]
  %v2759 = vld [vmem:[%s4 + $0x98] sm:$0xf]
  %v2760 = vld [vmem:[%s4 + $0x9c] sm:$0xf]
  %v2761 = vld [vmem:[%s4 + $0xa0] sm:$0xf]
  %v2762 = vld [vmem:[%s4 + $0xa4] sm:$0xf]
  %v2763 = vld [vmem:[%s4 + $0xa8] sm:$0xf]
  %v2764 = vld [vmem:[%s4 + $0xac] sm:$0xf]
  %v2765 = vld [vmem:[%s4 + $0xb0] sm:$0xf]
  %v2766 = vld [vmem:[%s4 + $0xb4] sm:$0xf]
  %v2767 = vld [vmem:[%s4 + $0xb8] sm:$0xf]
  %v2768 = vld [vmem:[%s4 + $0xbc] sm:$0xf]
  %v2769 = vld [vmem:[%s4 + $0xc0] sm:$0xf]
  %v2770 = vld [vmem:[%s4 + $0xc4] sm:$0xf]
  %v2771 = vld [vmem:[%s4 + $0xc8] sm:$0xf]
  %v2772 = vld [vmem:[%s4 + $0xcc] sm:$0xf]
  %v2773 = vld [vmem:[%s4 + $0xd0] sm:$0xf]
  %v2774 = vld [vmem:[%s4 + $0xd4] sm:$0xf]
  %v2775 = vld [vmem:[%s4 + $0xd8] sm:$0xf]
  %v2776 = vld [vmem:[%s4 + $0xdc] sm:$0xf]
  %v2777 = vld [vmem:[%s4 + $0xe0] sm:$0xf]
  %v2778 = vld [vmem:[%s4 + $0xe4] sm:$0xf]
  %v2779 = vld [vmem:[%s4 + $0xe8] sm:$0xf]
  %v2780 = vld [vmem:[%s4 + $0xec] sm:$0xf]
  %v2781 = vld [vmem:[%s4 + $0xf0] sm:$0xf]
  %v2782 = vld [vmem:[%s4 + $0xf4] sm:$0xf]
  %v2783 = vld [vmem:[%s4 + $0xf8] sm:$0xf]
  %v2784 = vld [vmem:[%s4 + $0xfc] sm:$0xf]
  %v2785 = vld [vmem:[%s4 + $0x100] sm:$0xf]
  %v2786 = vld [vmem:[%s4 + $0x104] sm:$0xf]
  %v2787 = vld [vmem:[%s4 + $0x108] sm:$0xf]
  %v2788 = vld [vmem:[%s4 + $0x10c] sm:$0xf]
  %v2789 = vld [vmem:[%s4 + $0x110] sm:$0xf]
  %v2790 = vld [vmem:[%s4 + $0x114] sm:$0xf]
  %v2791 = vld [vmem:[%s4 + $0x118] sm:$0xf]
  %v2792 = vld [vmem:[%s4 + $0x11c] sm:$0xf]
  %v2793 = vld [vmem:[%s4 + $0x120] sm:$0xf]
  %v2794 = vld [vmem:[%s4 + $0x124] sm:$0xf]
  %v2795 = vld [vmem:[%s4 + $0x128] sm:$0xf]
  %v2796 = vld [vmem:[%s4 + $0x12c] sm:$0xf]
  %v2797 = vld [vmem:[%s4 + $0x130] sm:$0xf]
  %v2798 = vld [vmem:[%s4 + $0x134] sm:$0xf]
  %v2799 = vld [vmem:[%s4 + $0x138] sm:$0xf]
  %v2800 = vld [vmem:[%s4 + $0x13c] sm:$0xf]
  %v2801 = vld [vmem:[%s4 + $0x140] sm:$0xf]
  %v2802 = vld [vmem:[%s4 + $0x144] sm:$0xf]
  %v2803 = vld [vmem:[%s4 + $0x148] sm:$0xf]
  %v2804 = vld [vmem:[%s4 + $0x14c] sm:$0xf]
  %v2805 = vld [vmem:[%s4 + $0x150] sm:$0xf]
  %v2806 = vld [vmem:[%s4 + $0x154] sm:$0xf]
  %v2807 = vld [vmem:[%s4 + $0x158] sm:$0xf]
  %v2808 = vld [vmem:[%s4 + $0x15c] sm:$0xf]
  %v2809 = vld [vmem:[%s4 + $0x160] sm:$0xf]
  %v2810 = vld [vmem:[%s4 + $0x164] sm:$0xf]
  %v2811 = vld [vmem:[%s4 + $0x168] sm:$0xf]
  %v2812 = vld [vmem:[%s4 + $0x16c] sm:$0xf]
  %v2813 = vld [vmem:[%s4 + $0x170] sm:$0xf]
  %v2814 = vld [vmem:[%s4 + $0x174] sm:$0xf]
  %v2815 = vld [vmem:[%s4 + $0x178] sm:$0xf]
  %v2816 = vld [vmem:[%s4 + $0x17c] sm:$0xf]
  %v2817 = vld [vmem:[%s4 + $0x180] sm:$0xf]
  %v2818 = vld [vmem:[%s4 + $0x184] sm:$0xf]
  %v2819 = vld [vmem:[%s4 + $0x188] sm:$0xf]
  %v2820 = vld [vmem:[%s4 + $0x18c] sm:$0xf]
  %v2821 = vld [vmem:[%s4 + $0x190] sm:$0xf]
  %v2822 = vld [vmem:[%s4 + $0x194] sm:$0xf]
  %v2823 = vld [vmem:[%s4 + $0x198] sm:$0xf]
  %v2824 = vld [vmem:[%s4 + $0x19c] sm:$0xf]
  %v2825 = vld [vmem:[%s4 + $0x1a0] sm:$0xf]
  %v2826 = vld [vmem:[%s4 + $0x1a4] sm:$0xf]
  %v2827 = vld [vmem:[%s4 + $0x1a8] sm:$0xf]
  %v2828 = vld [vmem:[%s4 + $0x1ac] sm:$0xf]
  %v2829 = vld [vmem:[%s4 + $0x1b0] sm:$0xf]
  %v2830 = vld [vmem:[%s4 + $0x1b4] sm:$0xf]
  %v2831 = vld [vmem:[%s4 + $0x1b8] sm:$0xf]
  %v2832 = vld [vmem:[%s4 + $0x1bc] sm:$0xf]
  %v2833 = vld [vmem:[%s4 + $0x1c0] sm:$0xf]
  %v2834 = vld [vmem:[%s4 + $0x1c4] sm:$0xf]
  %v2835 = vld [vmem:[%s4 + $0x1c8] sm:$0xf]
  %v2836 = vld [vmem:[%s4 + $0x1cc] sm:$0xf]
  %v2837 = vld [vmem:[%s4 + $0x1d0] sm:$0xf]
  %v2838 = vld [vmem:[%s4 + $0x1d4] sm:$0xf]
  %v2839 = vld [vmem:[%s4 + $0x1d8] sm:$0xf]
  %v2840 = vld [vmem:[%s4 + $0x1dc] sm:$0xf]
  %v2841 = vld [vmem:[%s4 + $0x1e0] sm:$0xf]
  %v2842 = vld [vmem:[%s4 + $0x1e4] sm:$0xf]
  %v2843 = vld [vmem:[%s4 + $0x1e8] sm:$0xf]
  %v2844 = vld [vmem:[%s4 + $0x1ec] sm:$0xf]
  %v2845 = vld [vmem:[%s4 + $0x1f0] sm:$0xf]
  %v2846 = vld [vmem:[%s4 + $0x1f4] sm:$0xf]
  %v2847 = vld [vmem:[%s4 + $0x1f8] sm:$0xf]
  %v2848 = vld [vmem:[%s4 + $0x1fc] sm:$0xf]
  %v2849 = vld [vmem:[%s4 + $0x200] sm:$0xf]
  %v2850 = vld [vmem:[%s4 + $0x204] sm:$0xf]
  %v2851 = vld [vmem:[%s4 + $0x208] sm:$0xf]
  %v2852 = vld [vmem:[%s4 + $0x20c] sm:$0xf]
  %v2853 = vld [vmem:[%s4 + $0x210] sm:$0xf]
  %v2854 = vld [vmem:[%s4 + $0x214] sm:$0xf]
  %v2855 = vld [vmem:[%s4 + $0x218] sm:$0xf]
  %v2856 = vld [vmem:[%s4 + $0x21c] sm:$0xf]
  %v2857 = vld [vmem:[%s4 + $0x220] sm:$0xf]
  %v2858 = vld [vmem:[%s4 + $0x224] sm:$0xf]
  %v2859 = vld [vmem:[%s4 + $0x228] sm:$0xf]
  %v2860 = vld [vmem:[%s4 + $0x22c] sm:$0xf]
  %v2861 = vld [vmem:[%s4 + $0x230] sm:$0xf]
  %v2862 = vld [vmem:[%s4 + $0x234] sm:$0xf]
  %v2863 = vld [vmem:[%s4 + $0x238] sm:$0xf]
  %v2864 = vld [vmem:[%s4 + $0x23c] sm:$0xf]
  %v2865 = vld [vmem:[%s4 + $0x240] sm:$0xf]
  %v2866 = vld [vmem:[%s4 + $0x244] sm:$0xf]
  %v2867 = vld [vmem:[%s4 + $0x248] sm:$0xf]
  %v2868 = vld [vmem:[%s4 + $0x24c] sm:$0xf]
  %v2869 = vld [vmem:[%s4 + $0x250] sm:$0xf]
  %v2870 = vld [vmem:[%s4 + $0x254] sm:$0xf]
  %v2871 = vld [vmem:[%s4 + $0x258] sm:$0xf]
  %v2872 = vld [vmem:[%s4 + $0x25c] sm:$0xf]
  %v2873 = vld [vmem:[%s4 + $0x260] sm:$0xf]
  %v2874 = vld [vmem:[%s4 + $0x264] sm:$0xf]
  %v2875 = vld [vmem:[%s4 + $0x268] sm:$0xf]
  %v2876 = vld [vmem:[%s4 + $0x26c] sm:$0xf]
  %v2877 = vld [vmem:[%s4 + $0x270] sm:$0xf]
  %v2878 = vld [vmem:[%s4 + $0x274] sm:$0xf]
  %v2879 = vld [vmem:[%s4 + $0x278] sm:$0xf]
  %v2880 = vld [vmem:[%s4 + $0x27c] sm:$0xf]
  %v2881 = vld [vmem:[%s4 + $0x280] sm:$0xf]
  %v2882 = vld [vmem:[%s4 + $0x284] sm:$0xf]
  %v2883 = vld [vmem:[%s4 + $0x288] sm:$0xf]
  %v2884 = vld [vmem:[%s4 + $0x28c] sm:$0xf]
  %v2885 = vld [vmem:[%s4 + $0x290] sm:$0xf]
  %v2886 = vld [vmem:[%s4 + $0x294] sm:$0xf]
  %v2887 = vld [vmem:[%s4 + $0x298] sm:$0xf]
  %v2888 = vld [vmem:[%s4 + $0x29c] sm:$0xf]
  %v2889 = vld [vmem:[%s4 + $0x2a0] sm:$0xf]
  %v2890 = vld [vmem:[%s4 + $0x2a4] sm:$0xf]
  %v2891 = vld [vmem:[%s4 + $0x2a8] sm:$0xf]
  %v2892 = vld [vmem:[%s4 + $0x2ac] sm:$0xf]
  %v2893 = vld [vmem:[%s4 + $0x2b0] sm:$0xf]
  %v2894 = vld [vmem:[%s4 + $0x2b4] sm:$0xf]
  %v2895 = vld [vmem:[%s4 + $0x2b8] sm:$0xf]
  %v2896 = vld [vmem:[%s4 + $0x2bc] sm:$0xf]
  %v2897 = vld [vmem:[%s4 + $0x2c0] sm:$0xf]
  %v2898 = vld [vmem:[%s4 + $0x2c4] sm:$0xf]
  %v2899 = vld [vmem:[%s4 + $0x2c8] sm:$0xf]
  %v2900 = vld [vmem:[%s4 + $0x2cc] sm:$0xf]
  %v2901 = vld [vmem:[%s4 + $0x2d0] sm:$0xf]
  %v2902 = vld [vmem:[%s4 + $0x2d4] sm:$0xf]
  %v2903 = vld [vmem:[%s4 + $0x2d8] sm:$0xf]
  %v2904 = vld [vmem:[%s4 + $0x2dc] sm:$0xf]
  %v2905 = vld [vmem:[%s4 + $0x2e0] sm:$0xf]
  %v2906 = vld [vmem:[%s4 + $0x2e4] sm:$0xf]
  %v2907 = vld [vmem:[%s4 + $0x2e8] sm:$0xf]
  %v2908 = vld [vmem:[%s4 + $0x2ec] sm:$0xf]
  %v2909 = vld [vmem:[%s4 + $0x2f0] sm:$0xf]
  %v2910 = vld [vmem:[%s4 + $0x2f4] sm:$0xf]
  %v2911 = vld [vmem:[%s4 + $0x2f8] sm:$0xf]
  %v2912 = vld [vmem:[%s4 + $0x2fc] sm:$0xf]
  %v2913 = vld [vmem:[%s4 + $0x300] sm:$0xf]
  %v2914 = vld [vmem:[%s4 + $0x304] sm:$0xf]
  %v2915 = vld [vmem:[%s4 + $0x308] sm:$0xf]
  %v2916 = vld [vmem:[%s4 + $0x30c] sm:$0xf]
  %v2917 = vld [vmem:[%s4 + $0x310] sm:$0xf]
  %v2918 = vld [vmem:[%s4 + $0x314] sm:$0xf]
  %v2919 = vld [vmem:[%s4 + $0x318] sm:$0xf]
  %v2920 = vld [vmem:[%s4 + $0x31c] sm:$0xf]
  %v2921 = vld [vmem:[%s4 + $0x320] sm:$0xf]
  %v2922 = vld [vmem:[%s4 + $0x324] sm:$0xf]
  %v2923 = vld [vmem:[%s4 + $0x328] sm:$0xf]
  %v2924 = vld [vmem:[%s4 + $0x32c] sm:$0xf]
  %v2925 = vld [vmem:[%s4 + $0x330] sm:$0xf]
  %v2926 = vld [vmem:[%s4 + $0x334] sm:$0xf]
  %v2927 = vld [vmem:[%s4 + $0x338] sm:$0xf]
  %v2928 = vld [vmem:[%s4 + $0x33c] sm:$0xf]
  %v2929 = vld [vmem:[%s4 + $0x340] sm:$0xf]
  %v2930 = vld [vmem:[%s4 + $0x344] sm:$0xf]
  %v2931 = vld [vmem:[%s4 + $0x348] sm:$0xf]
  %v2932 = vld [vmem:[%s4 + $0x34c] sm:$0xf]
  %v2933 = vld [vmem:[%s4 + $0x350] sm:$0xf]
  %v2934 = vld [vmem:[%s4 + $0x354] sm:$0xf]
  %v2935 = vld [vmem:[%s4 + $0x358] sm:$0xf]
  %v2936 = vld [vmem:[%s4 + $0x35c] sm:$0xf]
  %v2937 = vld [vmem:[%s4 + $0x360] sm:$0xf]
  %v2938 = vld [vmem:[%s4 + $0x364] sm:$0xf]
  %v2939 = vld [vmem:[%s4 + $0x368] sm:$0xf]
  %v2940 = vld [vmem:[%s4 + $0x36c] sm:$0xf]
  %v2941 = vld [vmem:[%s4 + $0x370] sm:$0xf]
  %v2942 = vld [vmem:[%s4 + $0x374] sm:$0xf]
  %v2943 = vld [vmem:[%s4 + $0x378] sm:$0xf]
  %v2944 = vld [vmem:[%s4 + $0x37c] sm:$0xf]
  %v2945 = vld [vmem:[%s4 + $0x380] sm:$0xf]
  %v2946 = vld [vmem:[%s4 + $0x384] sm:$0xf]
  %v2947 = vld [vmem:[%s4 + $0x388] sm:$0xf]
  %v2948 = vld [vmem:[%s4 + $0x38c] sm:$0xf]
  %v2949 = vld [vmem:[%s4 + $0x390] sm:$0xf]
  %v2950 = vld [vmem:[%s4 + $0x394] sm:$0xf]
  %v2951 = vld [vmem:[%s4 + $0x398] sm:$0xf]
  %v2952 = vld [vmem:[%s4 + $0x39c] sm:$0xf]
  %v2953 = vld [vmem:[%s4 + $0x3a0] sm:$0xf]
  %v2954 = vld [vmem:[%s4 + $0x3a4] sm:$0xf]
  %v2955 = vld [vmem:[%s4 + $0x3a8] sm:$0xf]
  %v2956 = vld [vmem:[%s4 + $0x3ac] sm:$0xf]
  %v2957 = vld [vmem:[%s4 + $0x3b0] sm:$0xf]
  %v2958 = vld [vmem:[%s4 + $0x3b4] sm:$0xf]
  %v2959 = vld [vmem:[%s4 + $0x3b8] sm:$0xf]
  %v2960 = vld [vmem:[%s4 + $0x3bc] sm:$0xf]
  %v2961 = vld [vmem:[%s4 + $0x3c0] sm:$0xf]
  %v2962 = vld [vmem:[%s4 + $0x3c4] sm:$0xf]
  %v2963 = vld [vmem:[%s4 + $0x3c8] sm:$0xf]
  %v2964 = vld [vmem:[%s4 + $0x3cc] sm:$0xf]
  %v2965 = vld [vmem:[%s4 + $0x3d0] sm:$0xf]
  %v2966 = vld [vmem:[%s4 + $0x3d4] sm:$0xf]
  %v2967 = vld [vmem:[%s4 + $0x3d8] sm:$0xf]
  %v2968 = vld [vmem:[%s4 + $0x3dc] sm:$0xf]
  %v2969 = vld [vmem:[%s4 + $0x3e0] sm:$0xf]
  %v2970 = vld [vmem:[%s4 + $0x3e4] sm:$0xf]
  %v2971 = vld [vmem:[%s4 + $0x3e8] sm:$0xf]
  %v2972 = vld [vmem:[%s4 + $0x3ec] sm:$0xf]
  %v2973 = vld [vmem:[%s4 + $0x3f0] sm:$0xf]
  %v2974 = vld [vmem:[%s4 + $0x3f4] sm:$0xf]
  %v2975 = vld [vmem:[%s4 + $0x3f8] sm:$0xf]
  %v2976 = vld [vmem:[%s4 + $0x3fc] sm:$0xf]
  %v2977 = vld [vmem:[%s4 + $0x400] sm:$0xf]
  %v2978 = vld [vmem:[%s4 + $0x404] sm:$0xf]
  %v2979 = vld [vmem:[%s4 + $0x408] sm:$0xf]
  %v2980 = vld [vmem:[%s4 + $0x40c] sm:$0xf]
  %v2981 = vld [vmem:[%s4 + $0x410] sm:$0xf]
  %v2982 = vld [vmem:[%s4 + $0x414] sm:$0xf]
  %v2983 = vld [vmem:[%s4 + $0x418] sm:$0xf]
  %v2984 = vld [vmem:[%s4 + $0x41c] sm:$0xf]
  %v2985 = vld [vmem:[%s4 + $0x420] sm:$0xf]
  %v2986 = vld [vmem:[%s4 + $0x424] sm:$0xf]
  %v2987 = vld [vmem:[%s4 + $0x428] sm:$0xf]
  %v2988 = vld [vmem:[%s4 + $0x42c] sm:$0xf]
  %v2989 = vld [vmem:[%s4 + $0x430] sm:$0xf]
  %v2990 = vld [vmem:[%s4 + $0x434] sm:$0xf]
  %v2991 = vld [vmem:[%s4 + $0x438] sm:$0xf]
  %v2992 = vld [vmem:[%s4 + $0x43c] sm:$0xf]
  %v2993 = vld [vmem:[%s4 + $0x440] sm:$0xf]
  %v2994 = vld [vmem:[%s4 + $0x444] sm:$0xf]
  %v2995 = vld [vmem:[%s4 + $0x448] sm:$0xf]
  %v2996 = vld [vmem:[%s4 + $0x44c] sm:$0xf]
  %v2997 = vld [vmem:[%s4 + $0x450] sm:$0xf]
  %v2998 = vld [vmem:[%s4 + $0x454] sm:$0xf]
  %v2999 = vld [vmem:[%s4 + $0x458] sm:$0xf]
  %v3000 = vld [vmem:[%s4 + $0x45c] sm:$0xf]
  %v3001 = vld [vmem:[%s4 + $0x460] sm:$0xf]
  %v3002 = vld [vmem:[%s4 + $0x464] sm:$0xf]
  %v3003 = vld [vmem:[%s4 + $0x468] sm:$0xf]
  %v3004 = vld [vmem:[%s4 + $0x46c] sm:$0xf]
  %v3005 = vld [vmem:[%s4 + $0x470] sm:$0xf]
  %v3006 = vld [vmem:[%s4 + $0x474] sm:$0xf]
  %v3007 = vld [vmem:[%s4 + $0x478] sm:$0xf]
  %v3008 = vld [vmem:[%s4 + $0x47c] sm:$0xf]
  %v3009 = vld [vmem:[%s4 + $0x480] sm:$0xf]
  %v3010 = vld [vmem:[%s4 + $0x484] sm:$0xf]
  %v3011 = vld [vmem:[%s4 + $0x488] sm:$0xf]
  %v3012 = vld [vmem:[%s4 + $0x48c] sm:$0xf]
  %v3013 = vld [vmem:[%s4 + $0x490] sm:$0xf]
  %v3014 = vld [vmem:[%s4 + $0x494] sm:$0xf]
  %v3015 = vld [vmem:[%s4 + $0x498] sm:$0xf]
  %v3016 = vld [vmem:[%s4 + $0x49c] sm:$0xf]
  %v3017 = vld [vmem:[%s4 + $0x4a0] sm:$0xf]
  %v3018 = vld [vmem:[%s4 + $0x4a4] sm:$0xf]
  %v3019 = vld [vmem:[%s4 + $0x4a8] sm:$0xf]
  %v3020 = vld [vmem:[%s4 + $0x4ac] sm:$0xf]
  %v3021 = vld [vmem:[%s4 + $0x4b0] sm:$0xf]
  %v3022 = vld [vmem:[%s4 + $0x4b4] sm:$0xf]
  %v3023 = vld [vmem:[%s4 + $0x4b8] sm:$0xf]
  %v3024 = vld [vmem:[%s4 + $0x4bc] sm:$0xf]
  %v3025 = vld [vmem:[%s4 + $0x4c0] sm:$0xf]
  %v3026 = vld [vmem:[%s4 + $0x4c4] sm:$0xf]
  %v3027 = vld [vmem:[%s4 + $0x4c8] sm:$0xf]
  %v3028 = vld [vmem:[%s4 + $0x4cc] sm:$0xf]
  %v3029 = vld [vmem:[%s4 + $0x4d0] sm:$0xf]
  %v3030 = vld [vmem:[%s4 + $0x4d4] sm:$0xf]
  %v3031 = vld [vmem:[%s4 + $0x4d8] sm:$0xf]
  %v3032 = vld [vmem:[%s4 + $0x4dc] sm:$0xf]
  %v3033 = vld [vmem:[%s4 + $0x4e0] sm:$0xf]
  %v3034 = vld [vmem:[%s4 + $0x4e4] sm:$0xf]
  %v3035 = vld [vmem:[%s4 + $0x4e8] sm:$0xf]
  %v3036 = vld [vmem:[%s4 + $0x4ec] sm:$0xf]
  %v3037 = vld [vmem:[%s4 + $0x4f0] sm:$0xf]
  %v3038 = vld [vmem:[%s4 + $0x4f4] sm:$0xf]
  %v3039 = vld [vmem:[%s4 + $0x4f8] sm:$0xf]
  %v3040 = vld [vmem:[%s4 + $0x4fc] sm:$0xf]
  %v3041 = vld [vmem:[%s4 + $0x500] sm:$0xf]
  %v3042 = vld [vmem:[%s4 + $0x504] sm:$0xf]
  %v3043 = vld [vmem:[%s4 + $0x508] sm:$0xf]
  %v3044 = vld [vmem:[%s4 + $0x50c] sm:$0xf]
  %v3045 = vld [vmem:[%s4 + $0x510] sm:$0xf]
  %v3046 = vld [vmem:[%s4 + $0x514] sm:$0xf]
  %v3047 = vld [vmem:[%s4 + $0x518] sm:$0xf]
  %v3048 = vld [vmem:[%s4 + $0x51c] sm:$0xf]
  %v3049 = vld [vmem:[%s4 + $0x520] sm:$0xf]
  %v3050 = vld [vmem:[%s4 + $0x524] sm:$0xf]
  %v3051 = vld [vmem:[%s4 + $0x528] sm:$0xf]
  %v3052 = vld [vmem:[%s4 + $0x52c] sm:$0xf]
  %v3053 = vld [vmem:[%s4 + $0x530] sm:$0xf]
  %v3054 = vld [vmem:[%s4 + $0x534] sm:$0xf]
  %v3055 = vld [vmem:[%s4 + $0x538] sm:$0xf]
  %v3056 = vld [vmem:[%s4 + $0x53c] sm:$0xf]
  %v3057 = vld [vmem:[%s4 + $0x540] sm:$0xf]
  %v3058 = vld [vmem:[%s4 + $0x544] sm:$0xf]
  %v3059 = vld [vmem:[%s4 + $0x548] sm:$0xf]
  %v3060 = vld [vmem:[%s4 + $0x54c] sm:$0xf]
  %v3061 = vld [vmem:[%s4 + $0x550] sm:$0xf]
  %v3062 = vld [vmem:[%s4 + $0x554] sm:$0xf]
  %v3063 = vld [vmem:[%s4 + $0x558] sm:$0xf]
  %v3064 = vld [vmem:[%s4 + $0x55c] sm:$0xf]
  %v3065 = vld [vmem:[%s4 + $0x560] sm:$0xf]
  %v3066 = vld [vmem:[%s4 + $0x564] sm:$0xf]
  %v3067 = vld [vmem:[%s4 + $0x568] sm:$0xf]
  %v3068 = vld [vmem:[%s4 + $0x56c] sm:$0xf]
  %v3069 = vld [vmem:[%s4 + $0x570] sm:$0xf]
  %v3070 = vld [vmem:[%s4 + $0x574] sm:$0xf]
  %v3071 = vld [vmem:[%s4 + $0x578] sm:$0xf]
  %v3072 = vld [vmem:[%s4 + $0x57c] sm:$0xf]
  %v3073 = vld [vmem:[%s4 + $0x580] sm:$0xf]
  %v3074 = vld [vmem:[%s4 + $0x584] sm:$0xf]
  %v3075 = vld [vmem:[%s4 + $0x588] sm:$0xf]
  %v3076 = vld [vmem:[%s4 + $0x58c] sm:$0xf]
  %v3077 = vld [vmem:[%s4 + $0x590] sm:$0xf]
  %v3078 = vld [vmem:[%s4 + $0x594] sm:$0xf]
  %v3079 = vld [vmem:[%s4 + $0x598] sm:$0xf]
  %v3080 = vld [vmem:[%s4 + $0x59c] sm:$0xf]
  %v3081 = vld [vmem:[%s4 + $0x5a0] sm:$0xf]
  %v3082 = vld [vmem:[%s4 + $0x5a4] sm:$0xf]
  %v3083 = vld [vmem:[%s4 + $0x5a8] sm:$0xf]
  %v3084 = vld [vmem:[%s4 + $0x5ac] sm:$0xf]
  %v3085 = vld [vmem:[%s4 + $0x5b0] sm:$0xf]
  %v3086 = vld [vmem:[%s4 + $0x5b4] sm:$0xf]
  %v3087 = vld [vmem:[%s4 + $0x5b8] sm:$0xf]
  %v3088 = vld [vmem:[%s4 + $0x5bc] sm:$0xf]
  %v3089 = vld [vmem:[%s4 + $0x5c0] sm:$0xf]
  %v3090 = vld [vmem:[%s4 + $0x5c4] sm:$0xf]
  %v3091 = vld [vmem:[%s4 + $0x5c8] sm:$0xf]
  %v3092 = vld [vmem:[%s4 + $0x5cc] sm:$0xf]
  %v3093 = vld [vmem:[%s4 + $0x5d0] sm:$0xf]
  %v3094 = vld [vmem:[%s4 + $0x5d4] sm:$0xf]
  %v3095 = vld [vmem:[%s4 + $0x5d8] sm:$0xf]
  %v3096 = vld [vmem:[%s4 + $0x5dc] sm:$0xf]
  %v3097 = vld [vmem:[%s4 + $0x5e0] sm:$0xf]
  %v3098 = vld [vmem:[%s4 + $0x5e4] sm:$0xf]
  %v3099 = vld [vmem:[%s4 + $0x5e8] sm:$0xf]
  %v3100 = vld [vmem:[%s4 + $0x5ec] sm:$0xf]
  %v3101 = vld [vmem:[%s4 + $0x5f0] sm:$0xf]
  %v3102 = vld [vmem:[%s4 + $0x5f4] sm:$0xf]
  %v3103 = vld [vmem:[%s4 + $0x5f8] sm:$0xf]
  %v3104 = vld [vmem:[%s4 + $0x5fc] sm:$0xf]
  %v3105 = vld [vmem:[%s4 + $0x600] sm:$0xf]
  %v3106 = vld [vmem:[%s4 + $0x604] sm:$0xf]
  %v3107 = vld [vmem:[%s4 + $0x608] sm:$0xf]
  %v3108 = vld [vmem:[%s4 + $0x60c] sm:$0xf]
  %v3109 = vld [vmem:[%s4 + $0x610] sm:$0xf]
  %v3110 = vld [vmem:[%s4 + $0x614] sm:$0xf]
  %v3111 = vld [vmem:[%s4 + $0x618] sm:$0xf]
  %v3112 = vld [vmem:[%s4 + $0x61c] sm:$0xf]
  %v3113 = vld [vmem:[%s4 + $0x620] sm:$0xf]
  %v3114 = vld [vmem:[%s4 + $0x624] sm:$0xf]
  %v3115 = vld [vmem:[%s4 + $0x628] sm:$0xf]
  %v3116 = vld [vmem:[%s4 + $0x62c] sm:$0xf]
  %v3117 = vld [vmem:[%s4 + $0x630] sm:$0xf]
  %v3118 = vld [vmem:[%s4 + $0x634] sm:$0xf]
  %v3119 = vld [vmem:[%s4 + $0x638] sm:$0xf]
  %v3120 = vld [vmem:[%s4 + $0x63c] sm:$0xf]
  %v3121 = vld [vmem:[%s4 + $0x640] sm:$0xf]
  %v3122 = vld [vmem:[%s4 + $0x644] sm:$0xf]
  %v3123 = vld [vmem:[%s4 + $0x648] sm:$0xf]
  %v3124 = vld [vmem:[%s4 + $0x64c] sm:$0xf]
  %v3125 = vld [vmem:[%s4 + $0x650] sm:$0xf]
  %v3126 = vld [vmem:[%s4 + $0x654] sm:$0xf]
  %v3127 = vld [vmem:[%s4 + $0x658] sm:$0xf]
  %v3128 = vld [vmem:[%s4 + $0x65c] sm:$0xf]
  %v3129 = vld [vmem:[%s4 + $0x660] sm:$0xf]
  %v3130 = vld [vmem:[%s4 + $0x664] sm:$0xf]
  %v3131 = vld [vmem:[%s4 + $0x668] sm:$0xf]
  %v3132 = vld [vmem:[%s4 + $0x66c] sm:$0xf]
  %v3133 = vld [vmem:[%s4 + $0x670] sm:$0xf]
  %v3134 = vld [vmem:[%s4 + $0x674] sm:$0xf]
  %v3135 = vld [vmem:[%s4 + $0x678] sm:$0xf]
  %v3136 = vld [vmem:[%s4 + $0x67c] sm:$0xf]
  %v3137 = vld [vmem:[%s4 + $0x680] sm:$0xf]
  %v3138 = vld [vmem:[%s4 + $0x684] sm:$0xf]
  %v3139 = vld [vmem:[%s4 + $0x688] sm:$0xf]
  %v3140 = vld [vmem:[%s4 + $0x68c] sm:$0xf]
  %v3141 = vld [vmem:[%s4 + $0x690] sm:$0xf]
  %v3142 = vld [vmem:[%s4 + $0x694] sm:$0xf]
  %v3143 = vld [vmem:[%s4 + $0x698] sm:$0xf]
  %v3144 = vld [vmem:[%s4 + $0x69c] sm:$0xf]
  %v3145 = vld [vmem:[%s4 + $0x6a0] sm:$0xf]
  %v3146 = vld [vmem:[%s4 + $0x6a4] sm:$0xf]
  %v3147 = vld [vmem:[%s4 + $0x6a8] sm:$0xf]
  %v3148 = vld [vmem:[%s4 + $0x6ac] sm:$0xf]
  %v3149 = vld [vmem:[%s4 + $0x6b0] sm:$0xf]
  %v3150 = vld [vmem:[%s4 + $0x6b4] sm:$0xf]
  %v3151 = vld [vmem:[%s4 + $0x6b8] sm:$0xf]
  %v3152 = vld [vmem:[%s4 + $0x6bc] sm:$0xf]
  %v3153 = vld [vmem:[%s4 + $0x6c0] sm:$0xf]
  %v3154 = vld [vmem:[%s4 + $0x6c4] sm:$0xf]
  %v3155 = vld [vmem:[%s4 + $0x6c8] sm:$0xf]
  %v3156 = vld [vmem:[%s4 + $0x6cc] sm:$0xf]
  %v3157 = vld [vmem:[%s4 + $0x6d0] sm:$0xf]
  %v3158 = vld [vmem:[%s4 + $0x6d4] sm:$0xf]
  %v3159 = vld [vmem:[%s4 + $0x6d8] sm:$0xf]
  %v3160 = vld [vmem:[%s4 + $0x6dc] sm:$0xf]
  %v3161 = vld [vmem:[%s4 + $0x6e0] sm:$0xf]
  %v3162 = vld [vmem:[%s4 + $0x6e4] sm:$0xf]
  %v3163 = vld [vmem:[%s4 + $0x6e8] sm:$0xf]
  %v3164 = vld [vmem:[%s4 + $0x6ec] sm:$0xf]
  %v3165 = vld [vmem:[%s4 + $0x6f0] sm:$0xf]
  %v3166 = vld [vmem:[%s4 + $0x6f4] sm:$0xf]
  %v3167 = vld [vmem:[%s4 + $0x6f8] sm:$0xf]
  %v3168 = vld [vmem:[%s4 + $0x6fc] sm:$0xf]
  %v3169 = vld [vmem:[%s4 + $0x700] sm:$0xf]
  %v3170 = vld [vmem:[%s4 + $0x704] sm:$0xf]
  %v3171 = vld [vmem:[%s4 + $0x708] sm:$0xf]
  %v3172 = vld [vmem:[%s4 + $0x70c] sm:$0xf]
  %v3173 = vld [vmem:[%s4 + $0x710] sm:$0xf]
  %v3174 = vld [vmem:[%s4 + $0x714] sm:$0xf]
  %v3175 = vld [vmem:[%s4 + $0x718] sm:$0xf]
  %v3176 = vld [vmem:[%s4 + $0x71c] sm:$0xf]
  %v3177 = vld [vmem:[%s4 + $0x720] sm:$0xf]
  %v3178 = vld [vmem:[%s4 + $0x724] sm:$0xf]
  %v3179 = vld [vmem:[%s4 + $0x728] sm:$0xf]
  %v3180 = vld [vmem:[%s4 + $0x72c] sm:$0xf]
  %v3181 = vld [vmem:[%s4 + $0x730] sm:$0xf]
  %v3182 = vld [vmem:[%s4 + $0x734] sm:$0xf]
  %v3183 = vld [vmem:[%s4 + $0x738] sm:$0xf]
  %v3184 = vld [vmem:[%s4 + $0x73c] sm:$0xf]
  %v3185 = vld [vmem:[%s4 + $0x740] sm:$0xf]
  %v3186 = vld [vmem:[%s4 + $0x744] sm:$0xf]
  %v3187 = vld [vmem:[%s4 + $0x748] sm:$0xf]
  %v3188 = vld [vmem:[%s4 + $0x74c] sm:$0xf]
  %v3189 = vld [vmem:[%s4 + $0x750] sm:$0xf]
  %v3190 = vld [vmem:[%s4 + $0x754] sm:$0xf]
  %v3191 = vld [vmem:[%s4 + $0x758] sm:$0xf]
  %v3192 = vld [vmem:[%s4 + $0x75c] sm:$0xf]
  %v3193 = vld [vmem:[%s4 + $0x760] sm:$0xf]
  %v3194 = vld [vmem:[%s4 + $0x764] sm:$0xf]
  %v3195 = vld [vmem:[%s4 + $0x768] sm:$0xf]
  %v3196 = vld [vmem:[%s4 + $0x76c] sm:$0xf]
  %v3197 = vld [vmem:[%s4 + $0x770] sm:$0xf]
  %v3198 = vld [vmem:[%s4 + $0x774] sm:$0xf]
  %v3199 = vld [vmem:[%s4 + $0x778] sm:$0xf]
  %v3200 = vld [vmem:[%s4 + $0x77c] sm:$0xf]
  %v3201 = vld [vmem:[%s4 + $0x780] sm:$0xf]
  %v3202 = vld [vmem:[%s4 + $0x784] sm:$0xf]
  %v3203 = vld [vmem:[%s4 + $0x788] sm:$0xf]
  %v3204 = vld [vmem:[%s4 + $0x78c] sm:$0xf]
  %v3205 = vld [vmem:[%s4 + $0x790] sm:$0xf]
  %v3206 = vld [vmem:[%s4 + $0x794] sm:$0xf]
  %v3207 = vld [vmem:[%s4 + $0x798] sm:$0xf]
  %v3208 = vld [vmem:[%s4 + $0x79c] sm:$0xf]
  %v3209 = vld [vmem:[%s4 + $0x7a0] sm:$0xf]
  %v3210 = vld [vmem:[%s4 + $0x7a4] sm:$0xf]
  %v3211 = vld [vmem:[%s4 + $0x7a8] sm:$0xf]
  %v3212 = vld [vmem:[%s4 + $0x7ac] sm:$0xf]
  %v3213 = vld [vmem:[%s4 + $0x7b0] sm:$0xf]
  %v3214 = vld [vmem:[%s4 + $0x7b4] sm:$0xf]
  %v3215 = vld [vmem:[%s4 + $0x7b8] sm:$0xf]
  %v3216 = vld [vmem:[%s4 + $0x7bc] sm:$0xf]
  %v3217 = vld [vmem:[%s4 + $0x7c0] sm:$0xf]
  %v3218 = vld [vmem:[%s4 + $0x7c4] sm:$0xf]
  %v3219 = vld [vmem:[%s4 + $0x7c8] sm:$0xf]
  %v3220 = vld [vmem:[%s4 + $0x7cc] sm:$0xf]
  %v3221 = vld [vmem:[%s4 + $0x7d0] sm:$0xf]
  %v3222 = vld [vmem:[%s4 + $0x7d4] sm:$0xf]
  %v3223 = vld [vmem:[%s4 + $0x7d8] sm:$0xf]
  %v3224 = vld [vmem:[%s4 + $0x7dc] sm:$0xf]
  %v3225 = vld [vmem:[%s4 + $0x7e0] sm:$0xf]
  %v3226 = vld [vmem:[%s4 + $0x7e4] sm:$0xf]
  %v3227 = vld [vmem:[%s4 + $0x7e8] sm:$0xf]
  %v3228 = vld [vmem:[%s4 + $0x7ec] sm:$0xf]
  %v3229 = vld [vmem:[%s4 + $0x7f0] sm:$0xf]
  %v3230 = vld [vmem:[%s4 + $0x7f4] sm:$0xf]
  %v3231 = vld [vmem:[%s4 + $0x7f8] sm:$0xf]
  %v3232 = vld [vmem:[%s4 + $0x7fc] sm:$0xf]
  %v3233 = vld [vmem:[%s4 + $0x800] sm:$0xf]
  %v3234 = vld [vmem:[%s4 + $0x804] sm:$0xf]
  %v3235 = vld [vmem:[%s4 + $0x808] sm:$0xf]
  %v3236 = vld [vmem:[%s4 + $0x80c] sm:$0xf]
  %v3237 = vld [vmem:[%s4 + $0x810] sm:$0xf]
  %v3238 = vld [vmem:[%s4 + $0x814] sm:$0xf]
  %v3239 = vld [vmem:[%s4 + $0x818] sm:$0xf]
  %v3240 = vld [vmem:[%s4 + $0x81c] sm:$0xf]
  %v3241 = vld [vmem:[%s4 + $0x820] sm:$0xf]
  %v3242 = vld [vmem:[%s4 + $0x824] sm:$0xf]
  %v3243 = vld [vmem:[%s4 + $0x828] sm:$0xf]
  %v3244 = vld [vmem:[%s4 + $0x82c] sm:$0xf]
  %v3245 = vld [vmem:[%s4 + $0x830] sm:$0xf]
  %v3246 = vld [vmem:[%s4 + $0x834] sm:$0xf]
  %v3247 = vld [vmem:[%s4 + $0x838] sm:$0xf]
  %v3248 = vld [vmem:[%s4 + $0x83c] sm:$0xf]
  %v3249 = vld [vmem:[%s4 + $0x840] sm:$0xf]
  %v3250 = vld [vmem:[%s4 + $0x844] sm:$0xf]
  %v3251 = vld [vmem:[%s4 + $0x848] sm:$0xf]
  %v3252 = vld [vmem:[%s4 + $0x84c] sm:$0xf]
  %v3253 = vld [vmem:[%s4 + $0x850] sm:$0xf]
  %v3254 = vld [vmem:[%s4 + $0x854] sm:$0xf]
  %v3255 = vld [vmem:[%s4 + $0x858] sm:$0xf]
  %v3256 = vld [vmem:[%s4 + $0x85c] sm:$0xf]
  %v3257 = vld [vmem:[%s4 + $0x860] sm:$0xf]
  %v3258 = vld [vmem:[%s4 + $0x864] sm:$0xf]
  %v3259 = vld [vmem:[%s4 + $0x868] sm:$0xf]
  %v3260 = vld [vmem:[%s4 + $0x86c] sm:$0xf]
  %v3261 = vld [vmem:[%s4 + $0x870] sm:$0xf]
  %v3262 = vld [vmem:[%s4 + $0x874] sm:$0xf]
  %v3263 = vld [vmem:[%s4 + $0x878] sm:$0xf]
  %v3264 = vld [vmem:[%s4 + $0x87c] sm:$0xf]
  %v3265 = vld [vmem:[%s4 + $0x880] sm:$0xf]
  %v3266 = vld [vmem:[%s4 + $0x884] sm:$0xf]
  %v3267 = vld [vmem:[%s4 + $0x888] sm:$0xf]
  %v3268 = vld [vmem:[%s4 + $0x88c] sm:$0xf]
  %v3269 = vld [vmem:[%s4 + $0x890] sm:$0xf]
  %v3270 = vld [vmem:[%s4 + $0x894] sm:$0xf]
  %v3271 = vld [vmem:[%s4 + $0x898] sm:$0xf]
  %v3272 = vld [vmem:[%s4 + $0x89c] sm:$0xf]
  %v3273 = vld [vmem:[%s4 + $0x8a0] sm:$0xf]
  %v3274 = vld [vmem:[%s4 + $0x8a4] sm:$0xf]
  %v3275 = vld [vmem:[%s4 + $0x8a8] sm:$0xf]
  %v3276 = vld [vmem:[%s4 + $0x8ac] sm:$0xf]
  %v3277 = vld [vmem:[%s4 + $0x8b0] sm:$0xf]
  %v3278 = vld [vmem:[%s4 + $0x8b4] sm:$0xf]
  %v3279 = vld [vmem:[%s4 + $0x8b8] sm:$0xf]
  %v3280 = vld [vmem:[%s4 + $0x8bc] sm:$0xf]
  %v3281 = vld [vmem:[%s4 + $0x8c0] sm:$0xf]
  %v3282 = vld [vmem:[%s4 + $0x8c4] sm:$0xf]
  %v3283 = vld [vmem:[%s4 + $0x8c8] sm:$0xf]
  %v3284 = vld [vmem:[%s4 + $0x8cc] sm:$0xf]
  %v3285 = vld [vmem:[%s4 + $0x8d0] sm:$0xf]
  %v3286 = vld [vmem:[%s4 + $0x8d4] sm:$0xf]
  %v3287 = vld [vmem:[%s4 + $0x8d8] sm:$0xf]
  %v3288 = vld [vmem:[%s4 + $0x8dc] sm:$0xf]
  %v3289 = vld [vmem:[%s4 + $0x8e0] sm:$0xf]
  %v3290 = vld [vmem:[%s4 + $0x8e4] sm:$0xf]
  %v3291 = vld [vmem:[%s4 + $0x8e8] sm:$0xf]
  %v3292 = vld [vmem:[%s4 + $0x8ec] sm:$0xf]
  %v3293 = vld [vmem:[%s4 + $0x8f0] sm:$0xf]
  %v3294 = vld [vmem:[%s4 + $0x8f4] sm:$0xf]
  %v3295 = vld [vmem:[%s4 + $0x8f8] sm:$0xf]
  %v3296 = vld [vmem:[%s4 + $0x8fc] sm:$0xf]
  %v3297 = vld [vmem:[%s4 + $0x900] sm:$0xf]
  %v3298 = vld [vmem:[%s4 + $0x904] sm:$0xf]
  %v3299 = vld [vmem:[%s4 + $0x908] sm:$0xf]
  %v3300 = vld [vmem:[%s4 + $0x90c] sm:$0xf]
  %v3301 = vld [vmem:[%s4 + $0x910] sm:$0xf]
  %v3302 = vld [vmem:[%s4 + $0x914] sm:$0xf]
  %v3303 = vld [vmem:[%s4 + $0x918] sm:$0xf]
  %v3304 = vld [vmem:[%s4 + $0x91c] sm:$0xf]
  %v3305 = vld [vmem:[%s4 + $0x920] sm:$0xf]
  %v3306 = vld [vmem:[%s4 + $0x924] sm:$0xf]
  %v3307 = vld [vmem:[%s4 + $0x928] sm:$0xf]
  %v3308 = vld [vmem:[%s4 + $0x92c] sm:$0xf]
  %v3309 = vld [vmem:[%s4 + $0x930] sm:$0xf]
  %v3310 = vld [vmem:[%s4 + $0x934] sm:$0xf]
  %v3311 = vld [vmem:[%s4 + $0x938] sm:$0xf]
  %v3312 = vld [vmem:[%s4 + $0x93c] sm:$0xf]
  %v3313 = vld [vmem:[%s4 + $0x940] sm:$0xf]
  %v3314 = vld [vmem:[%s4 + $0x944] sm:$0xf]
  %v3315 = vld [vmem:[%s4 + $0x948] sm:$0xf]
  %v3316 = vld [vmem:[%s4 + $0x94c] sm:$0xf]
  %v3317 = vld [vmem:[%s4 + $0x950] sm:$0xf]
  %v3318 = vld [vmem:[%s4 + $0x954] sm:$0xf]
  %v3319 = vld [vmem:[%s4 + $0x958] sm:$0xf]
  %v3320 = vld [vmem:[%s4 + $0x95c] sm:$0xf]
  %v3321 = vld [vmem:[%s4 + $0x960] sm:$0xf]
  %v3322 = vld [vmem:[%s4 + $0x964] sm:$0xf]
  %v3323 = vld [vmem:[%s4 + $0x968] sm:$0xf]
  %v3324 = vld [vmem:[%s4 + $0x96c] sm:$0xf]
  %v3325 = vld [vmem:[%s4 + $0x970] sm:$0xf]
  %v3326 = vld [vmem:[%s4 + $0x974] sm:$0xf]
  %v3327 = vld [vmem:[%s4 + $0x978] sm:$0xf]
  %v3328 = vld [vmem:[%s4 + $0x97c] sm:$0xf]
  %v3329 = vld [vmem:[%s4 + $0x980] sm:$0xf]
  %v3330 = vld [vmem:[%s4 + $0x984] sm:$0xf]
  %v3331 = vld [vmem:[%s4 + $0x988] sm:$0xf]
  %v3332 = vld [vmem:[%s4 + $0x98c] sm:$0xf]
  %v3333 = vld [vmem:[%s4 + $0x990] sm:$0xf]
  %v3334 = vld [vmem:[%s4 + $0x994] sm:$0xf]
  %v3335 = vld [vmem:[%s4 + $0x998] sm:$0xf]
  %v3336 = vld [vmem:[%s4 + $0x99c] sm:$0xf]
  %v3337 = vld [vmem:[%s4 + $0x9a0] sm:$0xf]
  %v3338 = vld [vmem:[%s4 + $0x9a4] sm:$0xf]
  %v3339 = vld [vmem:[%s4 + $0x9a8] sm:$0xf]
  %v3340 = vld [vmem:[%s4 + $0x9ac] sm:$0xf]
  %v3341 = vld [vmem:[%s4 + $0x9b0] sm:$0xf]
  %v3342 = vld [vmem:[%s4 + $0x9b4] sm:$0xf]
  %v3343 = vld [vmem:[%s4 + $0x9b8] sm:$0xf]
  %v3344 = vld [vmem:[%s4 + $0x9bc] sm:$0xf]
  %v3345 = vld [vmem:[%s4 + $0x9c0] sm:$0xf]
  %v3346 = vld [vmem:[%s4 + $0x9c4] sm:$0xf]
  %v3347 = vld [vmem:[%s4 + $0x9c8] sm:$0xf]
  %v3348 = vld [vmem:[%s4 + $0x9cc] sm:$0xf]
  %v3349 = vld [vmem:[%s4 + $0x9d0] sm:$0xf]
  %v3350 = vld [vmem:[%s4 + $0x9d4] sm:$0xf]
  %v3351 = vld [vmem:[%s4 + $0x9d8] sm:$0xf]
  %v3352 = vld [vmem:[%s4 + $0x9dc] sm:$0xf]
  %v3353 = vld [vmem:[%s4 + $0x9e0] sm:$0xf]
  %v3354 = vld [vmem:[%s4 + $0x9e4] sm:$0xf]
  %v3355 = vld [vmem:[%s4 + $0x9e8] sm:$0xf]
  %v3356 = vld [vmem:[%s4 + $0x9ec] sm:$0xf]
  %v3357 = vld [vmem:[%s4 + $0x9f0] sm:$0xf]
  %v3358 = vld [vmem:[%s4 + $0x9f4] sm:$0xf]
  %v3359 = vld [vmem:[%s4 + $0x9f8] sm:$0xf]
  %v3360 = vld [vmem:[%s4 + $0x9fc] sm:$0xf]
  %v3361 = vld [vmem:[%s4 + $0xa00] sm:$0xf]
  %v3362 = vld [vmem:[%s4 + $0xa04] sm:$0xf]
  %v3363 = vld [vmem:[%s4 + $0xa08] sm:$0xf]
  %v3364 = vld [vmem:[%s4 + $0xa0c] sm:$0xf]
  %v3365 = vld [vmem:[%s4 + $0xa10] sm:$0xf]
  %v3366 = vld [vmem:[%s4 + $0xa14] sm:$0xf]
  %v3367 = vld [vmem:[%s4 + $0xa18] sm:$0xf]
  %v3368 = vld [vmem:[%s4 + $0xa1c] sm:$0xf]
  %v3369 = vld [vmem:[%s4 + $0xa20] sm:$0xf]
  %v3370 = vld [vmem:[%s4 + $0xa24] sm:$0xf]
  %v3371 = vld [vmem:[%s4 + $0xa28] sm:$0xf]
  %v3372 = vld [vmem:[%s4 + $0xa2c] sm:$0xf]
  %v3373 = vld [vmem:[%s4 + $0xa30] sm:$0xf]
  %v3374 = vld [vmem:[%s4 + $0xa34] sm:$0xf]
  %v3375 = vld [vmem:[%s4 + $0xa38] sm:$0xf]
  %v3376 = vld [vmem:[%s4 + $0xa3c] sm:$0xf]
  %v3377 = vld [vmem:[%s4 + $0xa40] sm:$0xf]
  %v3378 = vld [vmem:[%s4 + $0xa44] sm:$0xf]
  %v3379 = vld [vmem:[%s4 + $0xa48] sm:$0xf]
  %v3380 = vld [vmem:[%s4 + $0xa4c] sm:$0xf]
  %v3381 = vld [vmem:[%s4 + $0xa50] sm:$0xf]
  %v3382 = vld [vmem:[%s4 + $0xa54] sm:$0xf]
  %v3383 = vld [vmem:[%s4 + $0xa58] sm:$0xf]
  %v3384 = vld [vmem:[%s4 + $0xa5c] sm:$0xf]
  %v3385 = vld [vmem:[%s4 + $0xa60] sm:$0xf]
  %v3386 = vld [vmem:[%s4 + $0xa64] sm:$0xf]
  %v3387 = vld [vmem:[%s4 + $0xa68] sm:$0xf]
  %v3388 = vld [vmem:[%s4 + $0xa6c] sm:$0xf]
  %v3389 = vld [vmem:[%s4 + $0xa70] sm:$0xf]
  %v3390 = vld [vmem:[%s4 + $0xa74] sm:$0xf]
  %v3391 = vld [vmem:[%s4 + $0xa78] sm:$0xf]
  %v3392 = vld [vmem:[%s4 + $0xa7c] sm:$0xf]
  %v3393 = vld [vmem:[%s4 + $0xa80] sm:$0xf]
  %v3394 = vld [vmem:[%s4 + $0xa84] sm:$0xf]
  %v3395 = vld [vmem:[%s4 + $0xa88] sm:$0xf]
  %v3396 = vld [vmem:[%s4 + $0xa8c] sm:$0xf]
  %v3397 = vld [vmem:[%s4 + $0xa90] sm:$0xf]
  %v3398 = vld [vmem:[%s4 + $0xa94] sm:$0xf]
  %v3399 = vld [vmem:[%s4 + $0xa98] sm:$0xf]
  %v3400 = vld [vmem:[%s4 + $0xa9c] sm:$0xf]
  %v3401 = vld [vmem:[%s4 + $0xaa0] sm:$0xf]
  %v3402 = vld [vmem:[%s4 + $0xaa4] sm:$0xf]
  %v3403 = vld [vmem:[%s4 + $0xaa8] sm:$0xf]
  %v3404 = vld [vmem:[%s4 + $0xaac] sm:$0xf]
  %v3405 = vld [vmem:[%s4 + $0xab0] sm:$0xf]
  %v3406 = vld [vmem:[%s4 + $0xab4] sm:$0xf]
  %v3407 = vld [vmem:[%s4 + $0xab8] sm:$0xf]
  %v3408 = vld [vmem:[%s4 + $0xabc] sm:$0xf]
  %v3409 = vld [vmem:[%s4 + $0xac0] sm:$0xf]
  %v3410 = vld [vmem:[%s4 + $0xac4] sm:$0xf]
  %v3411 = vld [vmem:[%s4 + $0xac8] sm:$0xf]
  %v3412 = vld [vmem:[%s4 + $0xacc] sm:$0xf]
  %v3413 = vld [vmem:[%s4 + $0xad0] sm:$0xf]
  %v3414 = vld [vmem:[%s4 + $0xad4] sm:$0xf]
  %v3415 = vld [vmem:[%s4 + $0xad8] sm:$0xf]
  %v3416 = vld [vmem:[%s4 + $0xadc] sm:$0xf]
  %v3417 = vld [vmem:[%s4 + $0xae0] sm:$0xf]
  %v3418 = vld [vmem:[%s4 + $0xae4] sm:$0xf]
  %v3419 = vld [vmem:[%s4 + $0xae8] sm:$0xf]
  %v3420 = vld [vmem:[%s4 + $0xaec] sm:$0xf]
  %v3421 = vld [vmem:[%s4 + $0xaf0] sm:$0xf]
  %v3422 = vld [vmem:[%s4 + $0xaf4] sm:$0xf]
  %v3423 = vld [vmem:[%s4 + $0xaf8] sm:$0xf]
  %v3424 = vld [vmem:[%s4 + $0xafc] sm:$0xf]
  %v3425 = vld [vmem:[%s4 + $0xb00] sm:$0xf]
  %v3426 = vld [vmem:[%s4 + $0xb04] sm:$0xf]
  %v3427 = vld [vmem:[%s4 + $0xb08] sm:$0xf]
  %v3428 = vld [vmem:[%s4 + $0xb0c] sm:$0xf]
  %v3429 = vld [vmem:[%s4 + $0xb10] sm:$0xf]
  %v3430 = vld [vmem:[%s4 + $0xb14] sm:$0xf]
  %v3431 = vld [vmem:[%s4 + $0xb18] sm:$0xf]
  %v3432 = vld [vmem:[%s4 + $0xb1c] sm:$0xf]
  %v3433 = vld [vmem:[%s4 + $0xb20] sm:$0xf]
  %v3434 = vld [vmem:[%s4 + $0xb24] sm:$0xf]
  %v3435 = vld [vmem:[%s4 + $0xb28] sm:$0xf]
  %v3436 = vld [vmem:[%s4 + $0xb2c] sm:$0xf]
  %v3437 = vld [vmem:[%s4 + $0xb30] sm:$0xf]
  %v3438 = vld [vmem:[%s4 + $0xb34] sm:$0xf]
  %v3439 = vld [vmem:[%s4 + $0xb38] sm:$0xf]
  %v3440 = vld [vmem:[%s4 + $0xb3c] sm:$0xf]
  %v3441 = vld [vmem:[%s4 + $0xb40] sm:$0xf]
  %v3442 = vld [vmem:[%s4 + $0xb44] sm:$0xf]
  %v3443 = vld [vmem:[%s4 + $0xb48] sm:$0xf]
  %v3444 = vld [vmem:[%s4 + $0xb4c] sm:$0xf]
  %v3445 = vld [vmem:[%s4 + $0xb50] sm:$0xf]
  %v3446 = vld [vmem:[%s4 + $0xb54] sm:$0xf]
  %v3447 = vld [vmem:[%s4 + $0xb58] sm:$0xf]
  %v3448 = vld [vmem:[%s4 + $0xb5c] sm:$0xf]
  %v3449 = vld [vmem:[%s4 + $0xb60] sm:$0xf]
  %v3450 = vld [vmem:[%s4 + $0xb64] sm:$0xf]
  %v3451 = vld [vmem:[%s4 + $0xb68] sm:$0xf]
  %v3452 = vld [vmem:[%s4 + $0xb6c] sm:$0xf]
  %v3453 = vld [vmem:[%s4 + $0xb70] sm:$0xf]
  %v3454 = vld [vmem:[%s4 + $0xb74] sm:$0xf]
  %v3455 = vld [vmem:[%s4 + $0xb78] sm:$0xf]
  %v3456 = vld [vmem:[%s4 + $0xb7c] sm:$0xf]
  %v3457 = vld [vmem:[%s4 + $0xb80] sm:$0xf]
  %v3458 = vld [vmem:[%s4 + $0xb84] sm:$0xf]
  %v3459 = vld [vmem:[%s4 + $0xb88] sm:$0xf]
  %v3460 = vld [vmem:[%s4 + $0xb8c] sm:$0xf]
  %v3461 = vld [vmem:[%s4 + $0xb90] sm:$0xf]
  %v3462 = vld [vmem:[%s4 + $0xb94] sm:$0xf]
  %v3463 = vld [vmem:[%s4 + $0xb98] sm:$0xf]
  %v3464 = vld [vmem:[%s4 + $0xb9c] sm:$0xf]
  %v3465 = vld [vmem:[%s4 + $0xba0] sm:$0xf]
  %v3466 = vld [vmem:[%s4 + $0xba4] sm:$0xf]
  %v3467 = vld [vmem:[%s4 + $0xba8] sm:$0xf]
  %v3468 = vld [vmem:[%s4 + $0xbac] sm:$0xf]
  %v3469 = vld [vmem:[%s4 + $0xbb0] sm:$0xf]
  %v3470 = vld [vmem:[%s4 + $0xbb4] sm:$0xf]
  %v3471 = vld [vmem:[%s4 + $0xbb8] sm:$0xf]
  %v3472 = vld [vmem:[%s4 + $0xbbc] sm:$0xf]
  %v3473 = vld [vmem:[%s4 + $0xbc0] sm:$0xf]
  %v3474 = vld [vmem:[%s4 + $0xbc4] sm:$0xf]
  %v3475 = vld [vmem:[%s4 + $0xbc8] sm:$0xf]
  %v3476 = vld [vmem:[%s4 + $0xbcc] sm:$0xf]
  %v3477 = vld [vmem:[%s4 + $0xbd0] sm:$0xf]
  %v3478 = vld [vmem:[%s4 + $0xbd4] sm:$0xf]
  %v3479 = vld [vmem:[%s4 + $0xbd8] sm:$0xf]
  %v3480 = vld [vmem:[%s4 + $0xbdc] sm:$0xf]
  %v3481 = vld [vmem:[%s4 + $0xbe0] sm:$0xf]
  %v3482 = vld [vmem:[%s4 + $0xbe4] sm:$0xf]
  %v3483 = vld [vmem:[%s4 + $0xbe8] sm:$0xf]
  %v3484 = vld [vmem:[%s4 + $0xbec] sm:$0xf]
  %v3485 = vld [vmem:[%s4 + $0xbf0] sm:$0xf]
  %v3486 = vld [vmem:[%s4 + $0xbf4] sm:$0xf]
  %v3487 = vld [vmem:[%s4 + $0xbf8] sm:$0xf]
  %v3488 = vld [vmem:[%s4 + $0xbfc] sm:$0xf]
  %v3489 = vld [vmem:[%s4 + $0xc00] sm:$0xf]
  %v3490 = vld [vmem:[%s4 + $0xc04] sm:$0xf]
  %v3491 = vld [vmem:[%s4 + $0xc08] sm:$0xf]
  %v3492 = vld [vmem:[%s4 + $0xc0c] sm:$0xf]
  %v3493 = vld [vmem:[%s4 + $0xc10] sm:$0xf]
  %v3494 = vld [vmem:[%s4 + $0xc14] sm:$0xf]
  %v3495 = vld [vmem:[%s4 + $0xc18] sm:$0xf]
  %v3496 = vld [vmem:[%s4 + $0xc1c] sm:$0xf]
  %v3497 = vld [vmem:[%s4 + $0xc20] sm:$0xf]
  %v3498 = vld [vmem:[%s4 + $0xc24] sm:$0xf]
  %v3499 = vld [vmem:[%s4 + $0xc28] sm:$0xf]
  %v3500 = vld [vmem:[%s4 + $0xc2c] sm:$0xf]
  %v3501 = vld [vmem:[%s4 + $0xc30] sm:$0xf]
  %v3502 = vld [vmem:[%s4 + $0xc34] sm:$0xf]
  %v3503 = vld [vmem:[%s4 + $0xc38] sm:$0xf]
  %v3504 = vld [vmem:[%s4 + $0xc3c] sm:$0xf]
  %v3505 = vld [vmem:[%s5] sm:$0x1]
  %v3507 = vperm.slane %v3505, 0
  %v3534 = vunpack.c.l.b16 %v2696
  %v3535 = vunpack.c.h.b16 %v2696
  %v3536 = vunpack.c.l.b16 %v2697
  %v3537 = vunpack.c.h.b16 %v2697
  %v3538 = vunpack.c.l.b16 %v2698
  %v3539 = vunpack.c.h.b16 %v2698
  %v3540 = vunpack.c.l.b16 %v2699
  %v3541 = vunpack.c.h.b16 %v2699
  %v3542 = vunpack.c.l.b16 %v2700
  %v3543 = vunpack.c.h.b16 %v2700
  %v3544 = vunpack.c.l.b16 %v2701
  %v3545 = vunpack.c.h.b16 %v2701
  %v3546 = vunpack.c.l.b16 %v2702
  %v3547 = vunpack.c.h.b16 %v2702
  %v3548 = vunpack.c.l.b16 %v2703
  %v3549 = vunpack.c.h.b16 %v2703
  %v3550 = vunpack.c.l.b16 %v2704
  %v3551 = vunpack.c.h.b16 %v2704
  %v3552 = vunpack.c.l.b16 %v2705
  %v3553 = vunpack.c.h.b16 %v2705
  %v3554 = vunpack.c.l.b16 %v2706
  %v3555 = vunpack.c.h.b16 %v2706
  %v3556 = vunpack.c.l.b16 %v2707
  %v3557 = vunpack.c.h.b16 %v2707
  %v3558 = vunpack.c.l.b16 %v2708
  %v3559 = vunpack.c.h.b16 %v2708
  %v3560 = vunpack.c.l.b16 %v2709
  %v3561 = vunpack.c.h.b16 %v2709
  %v3562 = vunpack.c.l.b16 %v2710
  %v3563 = vunpack.c.h.b16 %v2710
  %v3564 = vunpack.c.l.b16 %v2711
  %v3565 = vunpack.c.h.b16 %v2711
  %v3566 = vunpack.c.l.b16 %v2712
  %v3567 = vunpack.c.h.b16 %v2712
  %v3568 = vunpack.c.l.b16 %v2713
  %v3569 = vunpack.c.h.b16 %v2713
  %v3570 = vunpack.c.l.b16 %v2714
  %v3571 = vunpack.c.h.b16 %v2714
  %v3572 = vunpack.c.l.b16 %v2715
  %v3573 = vunpack.c.h.b16 %v2715
  %v3574 = vunpack.c.l.b16 %v2716
  %v3575 = vunpack.c.h.b16 %v2716
  %v3576 = vunpack.c.l.b16 %v2717
  %v3577 = vunpack.c.h.b16 %v2717
  %v3578 = vunpack.c.l.b16 %v2718
  %v3579 = vunpack.c.h.b16 %v2718
  %v3580 = vunpack.c.l.b16 %v2719
  %v3581 = vunpack.c.h.b16 %v2719
  %v3582 = vunpack.c.l.b16 %v2720
  %v3583 = vpack.c.b16 %v3534, %v3534
  %v3584 = vpack.c.b16 %v3535, %v3535
  %v3585 = vpack.c.b16 %v3536, %v3536
  %v3586 = vpack.c.b16 %v3537, %v3537
  %v3587 = vpack.c.b16 %v3538, %v3538
  %v3588 = vpack.c.b16 %v3539, %v3539
  %v3589 = vpack.c.b16 %v3540, %v3540
  %v3590 = vpack.c.b16 %v3541, %v3541
  %v3591 = vpack.c.b16 %v3542, %v3542
  %v3592 = vpack.c.b16 %v3543, %v3543
  %v3593 = vpack.c.b16 %v3544, %v3544
  %v3594 = vpack.c.b16 %v3545, %v3545
  %v3595 = vpack.c.b16 %v3546, %v3546
  %v3596 = vpack.c.b16 %v3547, %v3547
  %v3597 = vpack.c.b16 %v3548, %v3548
  %v3598 = vpack.c.b16 %v3549, %v3549
  %v3599 = vpack.c.b16 %v3550, %v3550
  %v3600 = vpack.c.b16 %v3551, %v3551
  %v3601 = vpack.c.b16 %v3552, %v3552
  %v3602 = vpack.c.b16 %v3553, %v3553
  %v3603 = vpack.c.b16 %v3554, %v3554
  %v3604 = vpack.c.b16 %v3555, %v3555
  %v3605 = vpack.c.b16 %v3556, %v3556
  %v3606 = vpack.c.b16 %v3557, %v3557
  %v3607 = vpack.c.b16 %v3558, %v3558
  %v3608 = vpack.c.b16 %v3559, %v3559
  %v3609 = vpack.c.b16 %v3560, %v3560
  %v3610 = vpack.c.b16 %v3561, %v3561
  %v3611 = vpack.c.b16 %v3562, %v3562
  %v3612 = vpack.c.b16 %v3563, %v3563
  %v3613 = vpack.c.b16 %v3564, %v3564
  %v3614 = vpack.c.b16 %v3565, %v3565
  %v3615 = vpack.c.b16 %v3566, %v3566
  %v3616 = vpack.c.b16 %v3567, %v3567
  %v3617 = vpack.c.b16 %v3568, %v3568
  %v3618 = vpack.c.b16 %v3569, %v3569
  %v3619 = vpack.c.b16 %v3570, %v3570
  %v3620 = vpack.c.b16 %v3571, %v3571
  %v3621 = vpack.c.b16 %v3572, %v3572
  %v3622 = vpack.c.b16 %v3573, %v3573
  %v3623 = vpack.c.b16 %v3574, %v3574
  %v3624 = vpack.c.b16 %v3575, %v3575
  %v3625 = vpack.c.b16 %v3576, %v3576
  %v3626 = vpack.c.b16 %v3577, %v3577
  %v3627 = vpack.c.b16 %v3578, %v3578
  %v3628 = vpack.c.b16 %v3579, %v3579
  %v3629 = vpack.c.b16 %v3580, %v3580
  %v3630 = vpack.c.b16 %v3581, %v3581
  %v3631 = vpack.c.b16 %v3582, %v3582
  %v4465 = vunpack.c.l.b16 %v2721
  %v4466 = vunpack.c.l.b16 %v2722
  %v4467 = vunpack.c.l.b16 %v2723
  %v4468 = vunpack.c.l.b16 %v2724
  %v4469 = vunpack.c.l.b16 %v2725
  %v4470 = vunpack.c.l.b16 %v2726
  %v4471 = vunpack.c.l.b16 %v2727
  %v4472 = vunpack.c.l.b16 %v2728
  %v4473 = vunpack.c.l.b16 %v2729
  %v4474 = vunpack.c.l.b16 %v2730
  %v4475 = vunpack.c.l.b16 %v2731
  %v4476 = vunpack.c.l.b16 %v2732
  %v4477 = vunpack.c.l.b16 %v2733
  %v4478 = vunpack.c.l.b16 %v2734
  %v4479 = vunpack.c.l.b16 %v2735
  %v4480 = vunpack.c.l.b16 %v2736
  %v4481 = vunpack.c.l.b16 %v2737
  %v4482 = vunpack.c.l.b16 %v2738
  %v4483 = vunpack.c.l.b16 %v2739
  %v4484 = vunpack.c.l.b16 %v2740
  %v4485 = vunpack.c.l.b16 %v2741
  %v4486 = vunpack.c.l.b16 %v2742
  %v4487 = vunpack.c.l.b16 %v2743
  %v4488 = vunpack.c.l.b16 %v2744
  %v4489 = vunpack.c.l.b16 %v2745
  %v4490 = vunpack.c.l.b16 %v2746
  %v4491 = vunpack.c.l.b16 %v2747
  %v4492 = vunpack.c.l.b16 %v2748
  %v4493 = vunpack.c.l.b16 %v2749
  %v4494 = vunpack.c.l.b16 %v2750
  %v4495 = vunpack.c.l.b16 %v2751
  %v4496 = vunpack.c.l.b16 %v2752
  %v4497 = vunpack.c.l.b16 %v2753
  %v4498 = vunpack.c.l.b16 %v2754
  %v4499 = vunpack.c.l.b16 %v2755
  %v4500 = vunpack.c.l.b16 %v2756
  %v4501 = vunpack.c.l.b16 %v2757
  %v4502 = vunpack.c.l.b16 %v2758
  %v4503 = vunpack.c.l.b16 %v2759
  %v4504 = vunpack.c.l.b16 %v2760
  %v4505 = vunpack.c.l.b16 %v2761
  %v4506 = vunpack.c.l.b16 %v2762
  %v4507 = vunpack.c.l.b16 %v2763
  %v4508 = vunpack.c.l.b16 %v2764
  %v4509 = vunpack.c.l.b16 %v2765
  %v4510 = vunpack.c.l.b16 %v2766
  %v4511 = vunpack.c.l.b16 %v2767
  %v4512 = vunpack.c.l.b16 %v2768
  %v4513 = vunpack.c.l.b16 %v2769
  %v4514 = vunpack.c.l.b16 %v2770
  %v4515 = vunpack.c.l.b16 %v2771
  %v4516 = vunpack.c.l.b16 %v2772
  %v4517 = vunpack.c.l.b16 %v2773
  %v4518 = vunpack.c.l.b16 %v2774
  %v4519 = vunpack.c.l.b16 %v2775
  %v4520 = vunpack.c.l.b16 %v2776
  %v4521 = vunpack.c.l.b16 %v2777
  %v4522 = vunpack.c.l.b16 %v2778
  %v4523 = vunpack.c.l.b16 %v2779
  %v4524 = vunpack.c.l.b16 %v2780
  %v4525 = vunpack.c.l.b16 %v2781
  %v4526 = vunpack.c.l.b16 %v2782
  %v4527 = vunpack.c.l.b16 %v2783
  %v4528 = vunpack.c.l.b16 %v2784
  %v4529 = vunpack.c.l.b16 %v2785
  %v4530 = vunpack.c.l.b16 %v2786
  %v4531 = vunpack.c.l.b16 %v2787
  %v4532 = vunpack.c.l.b16 %v2788
  %v4533 = vunpack.c.l.b16 %v2789
  %v4534 = vunpack.c.l.b16 %v2790
  %v4535 = vunpack.c.l.b16 %v2791
  %v4536 = vunpack.c.l.b16 %v2792
  %v4537 = vunpack.c.l.b16 %v2793
  %v4538 = vunpack.c.l.b16 %v2794
  %v4539 = vunpack.c.l.b16 %v2795
  %v4540 = vunpack.c.l.b16 %v2796
  %v4541 = vunpack.c.l.b16 %v2797
  %v4542 = vunpack.c.l.b16 %v2798
  %v4543 = vunpack.c.l.b16 %v2799
  %v4544 = vunpack.c.l.b16 %v2800
  %v4545 = vunpack.c.l.b16 %v2801
  %v4546 = vunpack.c.l.b16 %v2802
  %v4547 = vunpack.c.l.b16 %v2803
  %v4548 = vunpack.c.l.b16 %v2804
  %v4549 = vunpack.c.l.b16 %v2805
  %v4550 = vunpack.c.l.b16 %v2806
  %v4551 = vunpack.c.l.b16 %v2807
  %v4552 = vunpack.c.l.b16 %v2808
  %v4553 = vunpack.c.l.b16 %v2809
  %v4554 = vunpack.c.l.b16 %v2810
  %v4555 = vunpack.c.l.b16 %v2811
  %v4556 = vunpack.c.l.b16 %v2812
  %v4557 = vunpack.c.l.b16 %v2813
  %v4558 = vunpack.c.l.b16 %v2814
  %v4559 = vunpack.c.l.b16 %v2815
  %v4560 = vunpack.c.l.b16 %v2816
  %v4561 = vunpack.c.l.b16 %v2817
  %v4562 = vunpack.c.l.b16 %v2818
  %v4563 = vunpack.c.l.b16 %v2819
  %v4564 = vunpack.c.l.b16 %v2820
  %v4565 = vunpack.c.l.b16 %v2821
  %v4566 = vunpack.c.l.b16 %v2822
  %v4567 = vunpack.c.l.b16 %v2823
  %v4568 = vunpack.c.l.b16 %v2824
  %v4569 = vunpack.c.l.b16 %v2825
  %v4570 = vunpack.c.l.b16 %v2826
  %v4571 = vunpack.c.l.b16 %v2827
  %v4572 = vunpack.c.l.b16 %v2828
  %v4573 = vunpack.c.l.b16 %v2829
  %v4574 = vunpack.c.l.b16 %v2830
  %v4575 = vunpack.c.l.b16 %v2831
  %v4576 = vunpack.c.l.b16 %v2832
  %v4577 = vunpack.c.l.b16 %v2833
  %v4578 = vunpack.c.l.b16 %v2834
  %v4579 = vunpack.c.l.b16 %v2835
  %v4580 = vunpack.c.l.b16 %v2836
  %v4581 = vunpack.c.l.b16 %v2837
  %v4582 = vunpack.c.l.b16 %v2838
  %v4583 = vunpack.c.l.b16 %v2839
  %v4584 = vunpack.c.l.b16 %v2840
  %v4585 = vunpack.c.l.b16 %v2841
  %v4586 = vunpack.c.l.b16 %v2842
  %v4587 = vunpack.c.l.b16 %v2843
  %v4588 = vunpack.c.l.b16 %v2844
  %v4589 = vunpack.c.l.b16 %v2845
  %v4590 = vunpack.c.l.b16 %v2846
  %v4591 = vunpack.c.l.b16 %v2847
  %v4592 = vunpack.c.l.b16 %v2848
  %v4593 = vunpack.c.l.b16 %v2849
  %v4594 = vunpack.c.l.b16 %v2850
  %v4595 = vunpack.c.l.b16 %v2851
  %v4596 = vunpack.c.l.b16 %v2852
  %v4597 = vunpack.c.l.b16 %v2853
  %v4598 = vunpack.c.l.b16 %v2854
  %v4599 = vunpack.c.l.b16 %v2855
  %v4600 = vunpack.c.l.b16 %v2856
  %v4601 = vunpack.c.l.b16 %v2857
  %v4602 = vunpack.c.l.b16 %v2858
  %v4603 = vunpack.c.l.b16 %v2859
  %v4604 = vunpack.c.l.b16 %v2860
  %v4605 = vunpack.c.l.b16 %v2861
  %v4606 = vunpack.c.l.b16 %v2862
  %v4607 = vunpack.c.l.b16 %v2863
  %v4608 = vunpack.c.l.b16 %v2864
  %v4609 = vunpack.c.l.b16 %v2865
  %v4610 = vunpack.c.l.b16 %v2866
  %v4611 = vunpack.c.l.b16 %v2867
  %v4612 = vunpack.c.l.b16 %v2868
  %v4613 = vunpack.c.l.b16 %v2869
  %v4614 = vunpack.c.l.b16 %v2870
  %v4615 = vunpack.c.l.b16 %v2871
  %v4616 = vunpack.c.l.b16 %v2872
  %v4617 = vunpack.c.l.b16 %v2873
  %v4618 = vunpack.c.l.b16 %v2874
  %v4619 = vunpack.c.l.b16 %v2875
  %v4620 = vunpack.c.l.b16 %v2876
  %v4621 = vunpack.c.l.b16 %v2877
  %v4622 = vunpack.c.l.b16 %v2878
  %v4623 = vunpack.c.l.b16 %v2879
  %v4624 = vunpack.c.l.b16 %v2880
  %v4625 = vunpack.c.l.b16 %v2881
  %v4626 = vunpack.c.l.b16 %v2882
  %v4627 = vunpack.c.l.b16 %v2883
  %v4628 = vunpack.c.l.b16 %v2884
  %v4629 = vunpack.c.l.b16 %v2885
  %v4630 = vunpack.c.l.b16 %v2886
  %v4631 = vunpack.c.l.b16 %v2887
  %v4632 = vunpack.c.l.b16 %v2888
  %v4633 = vunpack.c.l.b16 %v2889
  %v4634 = vunpack.c.l.b16 %v2890
  %v4635 = vunpack.c.l.b16 %v2891
  %v4636 = vunpack.c.l.b16 %v2892
  %v4637 = vunpack.c.l.b16 %v2893
  %v4638 = vunpack.c.l.b16 %v2894
  %v4639 = vunpack.c.l.b16 %v2895
  %v4640 = vunpack.c.l.b16 %v2896
  %v4641 = vunpack.c.l.b16 %v2897
  %v4642 = vunpack.c.l.b16 %v2898
  %v4643 = vunpack.c.l.b16 %v2899
  %v4644 = vunpack.c.l.b16 %v2900
  %v4645 = vunpack.c.l.b16 %v2901
  %v4646 = vunpack.c.l.b16 %v2902
  %v4647 = vunpack.c.l.b16 %v2903
  %v4648 = vunpack.c.l.b16 %v2904
  %v4649 = vunpack.c.l.b16 %v2905
  %v4650 = vunpack.c.l.b16 %v2906
  %v4651 = vunpack.c.l.b16 %v2907
  %v4652 = vunpack.c.l.b16 %v2908
  %v4653 = vunpack.c.l.b16 %v2909
  %v4654 = vunpack.c.l.b16 %v2910
  %v4655 = vunpack.c.l.b16 %v2911
  %v4656 = vunpack.c.l.b16 %v2912
  %v4657 = vunpack.c.l.b16 %v2913
  %v4658 = vunpack.c.l.b16 %v2914
  %v4659 = vunpack.c.l.b16 %v2915
  %v4660 = vunpack.c.l.b16 %v2916
  %v4661 = vunpack.c.l.b16 %v2917
  %v4662 = vunpack.c.l.b16 %v2918
  %v4663 = vunpack.c.l.b16 %v2919
  %v4664 = vunpack.c.l.b16 %v2920
  %v4665 = vunpack.c.l.b16 %v2921
  %v4666 = vunpack.c.l.b16 %v2922
  %v4667 = vunpack.c.l.b16 %v2923
  %v4668 = vunpack.c.l.b16 %v2924
  %v4669 = vunpack.c.l.b16 %v2925
  %v4670 = vunpack.c.l.b16 %v2926
  %v4671 = vunpack.c.l.b16 %v2927
  %v4672 = vunpack.c.l.b16 %v2928
  %v4673 = vunpack.c.l.b16 %v2929
  %v4674 = vunpack.c.l.b16 %v2930
  %v4675 = vunpack.c.l.b16 %v2931
  %v4676 = vunpack.c.l.b16 %v2932
  %v4677 = vunpack.c.l.b16 %v2933
  %v4678 = vunpack.c.l.b16 %v2934
  %v4679 = vunpack.c.l.b16 %v2935
  %v4680 = vunpack.c.l.b16 %v2936
  %v4681 = vunpack.c.l.b16 %v2937
  %v4682 = vunpack.c.l.b16 %v2938
  %v4683 = vunpack.c.l.b16 %v2939
  %v4684 = vunpack.c.l.b16 %v2940
  %v4685 = vunpack.c.l.b16 %v2941
  %v4686 = vunpack.c.l.b16 %v2942
  %v4687 = vunpack.c.l.b16 %v2943
  %v4688 = vunpack.c.l.b16 %v2944
  %v4689 = vunpack.c.l.b16 %v2945
  %v4690 = vunpack.c.l.b16 %v2946
  %v4691 = vunpack.c.l.b16 %v2947
  %v4692 = vunpack.c.l.b16 %v2948
  %v4693 = vunpack.c.l.b16 %v2949
  %v4694 = vunpack.c.l.b16 %v2950
  %v4695 = vunpack.c.l.b16 %v2951
  %v4696 = vunpack.c.l.b16 %v2952
  %v4697 = vunpack.c.l.b16 %v2953
  %v4698 = vunpack.c.l.b16 %v2954
  %v4699 = vunpack.c.l.b16 %v2955
  %v4700 = vunpack.c.l.b16 %v2956
  %v4701 = vunpack.c.l.b16 %v2957
  %v4702 = vunpack.c.l.b16 %v2958
  %v4703 = vunpack.c.l.b16 %v2959
  %v4704 = vunpack.c.l.b16 %v2960
  %v4705 = vunpack.c.l.b16 %v2961
  %v4706 = vunpack.c.l.b16 %v2962
  %v4707 = vunpack.c.l.b16 %v2963
  %v4708 = vunpack.c.l.b16 %v2964
  %v4709 = vunpack.c.l.b16 %v2965
  %v4710 = vunpack.c.l.b16 %v2966
  %v4711 = vunpack.c.l.b16 %v2967
  %v4712 = vunpack.c.l.b16 %v2968
  %v4713 = vunpack.c.l.b16 %v2969
  %v4714 = vunpack.c.l.b16 %v2970
  %v4715 = vunpack.c.l.b16 %v2971
  %v4716 = vunpack.c.l.b16 %v2972
  %v4717 = vunpack.c.l.b16 %v2973
  %v4718 = vunpack.c.l.b16 %v2974
  %v4719 = vunpack.c.l.b16 %v2975
  %v4720 = vunpack.c.l.b16 %v2976
  %v4721 = vunpack.c.l.b16 %v2977
  %v4722 = vunpack.c.l.b16 %v2978
  %v4723 = vunpack.c.l.b16 %v2979
  %v4724 = vunpack.c.l.b16 %v2980
  %v4725 = vunpack.c.l.b16 %v2981
  %v4726 = vunpack.c.l.b16 %v2982
  %v4727 = vunpack.c.l.b16 %v2983
  %v4728 = vunpack.c.l.b16 %v2984
  %v4729 = vunpack.c.l.b16 %v2985
  %v4730 = vunpack.c.l.b16 %v2986
  %v4731 = vunpack.c.l.b16 %v2987
  %v4732 = vunpack.c.l.b16 %v2988
  %v4733 = vunpack.c.l.b16 %v2989
  %v4734 = vunpack.c.l.b16 %v2990
  %v4735 = vunpack.c.l.b16 %v2991
  %v4736 = vunpack.c.l.b16 %v2992
  %v4737 = vunpack.c.l.b16 %v2993
  %v4738 = vunpack.c.l.b16 %v2994
  %v4739 = vunpack.c.l.b16 %v2995
  %v4740 = vunpack.c.l.b16 %v2996
  %v4741 = vunpack.c.l.b16 %v2997
  %v4742 = vunpack.c.l.b16 %v2998
  %v4743 = vunpack.c.l.b16 %v2999
  %v4744 = vunpack.c.l.b16 %v3000
  %v4745 = vunpack.c.l.b16 %v3001
  %v4746 = vunpack.c.l.b16 %v3002
  %v4747 = vunpack.c.l.b16 %v3003
  %v4748 = vunpack.c.l.b16 %v3004
  %v4749 = vunpack.c.l.b16 %v3005
  %v4750 = vunpack.c.l.b16 %v3006
  %v4751 = vunpack.c.l.b16 %v3007
  %v4752 = vunpack.c.l.b16 %v3008
  %v4753 = vunpack.c.l.b16 %v3009
  %v4754 = vunpack.c.l.b16 %v3010
  %v4755 = vunpack.c.l.b16 %v3011
  %v4756 = vunpack.c.l.b16 %v3012
  %v4757 = vunpack.c.l.b16 %v3013
  %v4758 = vunpack.c.l.b16 %v3014
  %v4759 = vunpack.c.l.b16 %v3015
  %v4760 = vunpack.c.l.b16 %v3016
  %v4761 = vunpack.c.l.b16 %v3017
  %v4762 = vunpack.c.l.b16 %v3018
  %v4763 = vunpack.c.l.b16 %v3019
  %v4764 = vunpack.c.l.b16 %v3020
  %v4765 = vunpack.c.l.b16 %v3021
  %v4766 = vunpack.c.l.b16 %v3022
  %v4767 = vunpack.c.l.b16 %v3023
  %v4768 = vunpack.c.l.b16 %v3024
  %v4769 = vunpack.c.l.b16 %v3025
  %v4770 = vunpack.c.l.b16 %v3026
  %v4771 = vunpack.c.l.b16 %v3027
  %v4772 = vunpack.c.l.b16 %v3028
  %v4773 = vunpack.c.l.b16 %v3029
  %v4774 = vunpack.c.l.b16 %v3030
  %v4775 = vunpack.c.l.b16 %v3031
  %v4776 = vunpack.c.l.b16 %v3032
  %v4777 = vunpack.c.l.b16 %v3033
  %v4778 = vunpack.c.l.b16 %v3034
  %v4779 = vunpack.c.l.b16 %v3035
  %v4780 = vunpack.c.l.b16 %v3036
  %v4781 = vunpack.c.l.b16 %v3037
  %v4782 = vunpack.c.l.b16 %v3038
  %v4783 = vunpack.c.l.b16 %v3039
  %v4784 = vunpack.c.l.b16 %v3040
  %v4785 = vunpack.c.l.b16 %v3041
  %v4786 = vunpack.c.l.b16 %v3042
  %v4787 = vunpack.c.l.b16 %v3043
  %v4788 = vunpack.c.l.b16 %v3044
  %v4789 = vunpack.c.l.b16 %v3045
  %v4790 = vunpack.c.l.b16 %v3046
  %v4791 = vunpack.c.l.b16 %v3047
  %v4792 = vunpack.c.l.b16 %v3048
  %v4793 = vunpack.c.l.b16 %v3049
  %v4794 = vunpack.c.l.b16 %v3050
  %v4795 = vunpack.c.l.b16 %v3051
  %v4796 = vunpack.c.l.b16 %v3052
  %v4797 = vunpack.c.l.b16 %v3053
  %v4798 = vunpack.c.l.b16 %v3054
  %v4799 = vunpack.c.l.b16 %v3055
  %v4800 = vunpack.c.l.b16 %v3056
  %v4801 = vunpack.c.l.b16 %v3057
  %v4802 = vunpack.c.l.b16 %v3058
  %v4803 = vunpack.c.l.b16 %v3059
  %v4804 = vunpack.c.l.b16 %v3060
  %v4805 = vunpack.c.l.b16 %v3061
  %v4806 = vunpack.c.l.b16 %v3062
  %v4807 = vunpack.c.l.b16 %v3063
  %v4808 = vunpack.c.l.b16 %v3064
  %v4809 = vunpack.c.l.b16 %v3065
  %v4810 = vunpack.c.l.b16 %v3066
  %v4811 = vunpack.c.l.b16 %v3067
  %v4812 = vunpack.c.l.b16 %v3068
  %v4813 = vunpack.c.l.b16 %v3069
  %v4814 = vunpack.c.l.b16 %v3070
  %v4815 = vunpack.c.l.b16 %v3071
  %v4816 = vunpack.c.l.b16 %v3072
  %v4817 = vunpack.c.l.b16 %v3073
  %v4818 = vunpack.c.l.b16 %v3074
  %v4819 = vunpack.c.l.b16 %v3075
  %v4820 = vunpack.c.l.b16 %v3076
  %v4821 = vunpack.c.l.b16 %v3077
  %v4822 = vunpack.c.l.b16 %v3078
  %v4823 = vunpack.c.l.b16 %v3079
  %v4824 = vunpack.c.l.b16 %v3080
  %v4825 = vunpack.c.l.b16 %v3081
  %v4826 = vunpack.c.l.b16 %v3082
  %v4827 = vunpack.c.l.b16 %v3083
  %v4828 = vunpack.c.l.b16 %v3084
  %v4829 = vunpack.c.l.b16 %v3085
  %v4830 = vunpack.c.l.b16 %v3086
  %v4831 = vunpack.c.l.b16 %v3087
  %v4832 = vunpack.c.l.b16 %v3088
  %v4833 = vunpack.c.l.b16 %v3089
  %v4834 = vunpack.c.l.b16 %v3090
  %v4835 = vunpack.c.l.b16 %v3091
  %v4836 = vunpack.c.l.b16 %v3092
  %v4837 = vunpack.c.l.b16 %v3093
  %v4838 = vunpack.c.l.b16 %v3094
  %v4839 = vunpack.c.l.b16 %v3095
  %v4840 = vunpack.c.l.b16 %v3096
  %v4841 = vunpack.c.l.b16 %v3097
  %v4842 = vunpack.c.l.b16 %v3098
  %v4843 = vunpack.c.l.b16 %v3099
  %v4844 = vunpack.c.l.b16 %v3100
  %v4845 = vunpack.c.l.b16 %v3101
  %v4846 = vunpack.c.l.b16 %v3102
  %v4847 = vunpack.c.l.b16 %v3103
  %v4848 = vunpack.c.l.b16 %v3104
  %v4849 = vunpack.c.l.b16 %v3105
  %v4850 = vunpack.c.l.b16 %v3106
  %v4851 = vunpack.c.l.b16 %v3107
  %v4852 = vunpack.c.l.b16 %v3108
  %v4853 = vunpack.c.l.b16 %v3109
  %v4854 = vunpack.c.l.b16 %v3110
  %v4855 = vunpack.c.l.b16 %v3111
  %v4856 = vunpack.c.l.b16 %v3112
  %v4857 = vunpack.c.l.b16 %v3113
  %v4858 = vunpack.c.l.b16 %v3114
  %v4859 = vunpack.c.l.b16 %v3115
  %v4860 = vunpack.c.l.b16 %v3116
  %v4861 = vunpack.c.l.b16 %v3117
  %v4862 = vunpack.c.l.b16 %v3118
  %v4863 = vunpack.c.l.b16 %v3119
  %v4864 = vunpack.c.l.b16 %v3120
  %v4865 = vunpack.c.l.b16 %v3121
  %v4866 = vunpack.c.l.b16 %v3122
  %v4867 = vunpack.c.l.b16 %v3123
  %v4868 = vunpack.c.l.b16 %v3124
  %v4869 = vunpack.c.l.b16 %v3125
  %v4870 = vunpack.c.l.b16 %v3126
  %v4871 = vunpack.c.l.b16 %v3127
  %v4872 = vunpack.c.l.b16 %v3128
  %v4873 = vunpack.c.l.b16 %v3129
  %v4874 = vunpack.c.l.b16 %v3130
  %v4875 = vunpack.c.l.b16 %v3131
  %v4876 = vunpack.c.l.b16 %v3132
  %v4877 = vunpack.c.l.b16 %v3133
  %v4878 = vunpack.c.l.b16 %v3134
  %v4879 = vunpack.c.l.b16 %v3135
  %v4880 = vunpack.c.l.b16 %v3136
  %v4881 = vunpack.c.l.b16 %v3137
  %v4882 = vunpack.c.l.b16 %v3138
  %v4883 = vunpack.c.l.b16 %v3139
  %v4884 = vunpack.c.l.b16 %v3140
  %v4885 = vunpack.c.l.b16 %v3141
  %v4886 = vunpack.c.l.b16 %v3142
  %v4887 = vunpack.c.l.b16 %v3143
  %v4888 = vunpack.c.l.b16 %v3144
  %v4889 = vunpack.c.l.b16 %v3145
  %v4890 = vunpack.c.l.b16 %v3146
  %v4891 = vunpack.c.l.b16 %v3147
  %v4892 = vunpack.c.l.b16 %v3148
  %v4893 = vunpack.c.l.b16 %v3149
  %v4894 = vunpack.c.l.b16 %v3150
  %v4895 = vunpack.c.l.b16 %v3151
  %v4896 = vunpack.c.l.b16 %v3152
  %v4897 = vunpack.c.l.b16 %v3153
  %v4898 = vunpack.c.l.b16 %v3154
  %v4899 = vunpack.c.l.b16 %v3155
  %v4900 = vunpack.c.l.b16 %v3156
  %v4901 = vunpack.c.l.b16 %v3157
  %v4902 = vunpack.c.l.b16 %v3158
  %v4903 = vunpack.c.l.b16 %v3159
  %v4904 = vunpack.c.l.b16 %v3160
  %v4905 = vunpack.c.l.b16 %v3161
  %v4906 = vunpack.c.l.b16 %v3162
  %v4907 = vunpack.c.l.b16 %v3163
  %v4908 = vunpack.c.l.b16 %v3164
  %v4909 = vunpack.c.l.b16 %v3165
  %v4910 = vunpack.c.l.b16 %v3166
  %v4911 = vunpack.c.l.b16 %v3167
  %v4912 = vunpack.c.l.b16 %v3168
  %v4913 = vunpack.c.l.b16 %v3169
  %v4914 = vunpack.c.l.b16 %v3170
  %v4915 = vunpack.c.l.b16 %v3171
  %v4916 = vunpack.c.l.b16 %v3172
  %v4917 = vunpack.c.l.b16 %v3173
  %v4918 = vunpack.c.l.b16 %v3174
  %v4919 = vunpack.c.l.b16 %v3175
  %v4920 = vunpack.c.l.b16 %v3176
  %v4921 = vunpack.c.l.b16 %v3177
  %v4922 = vunpack.c.l.b16 %v3178
  %v4923 = vunpack.c.l.b16 %v3179
  %v4924 = vunpack.c.l.b16 %v3180
  %v4925 = vunpack.c.l.b16 %v3181
  %v4926 = vunpack.c.l.b16 %v3182
  %v4927 = vunpack.c.l.b16 %v3183
  %v4928 = vunpack.c.l.b16 %v3184
  %v4929 = vunpack.c.l.b16 %v3185
  %v4930 = vunpack.c.l.b16 %v3186
  %v4931 = vunpack.c.l.b16 %v3187
  %v4932 = vunpack.c.l.b16 %v3188
  %v4933 = vunpack.c.l.b16 %v3189
  %v4934 = vunpack.c.l.b16 %v3190
  %v4935 = vunpack.c.l.b16 %v3191
  %v4936 = vunpack.c.l.b16 %v3192
  %v4937 = vunpack.c.l.b16 %v3193
  %v4938 = vunpack.c.l.b16 %v3194
  %v4939 = vunpack.c.l.b16 %v3195
  %v4940 = vunpack.c.l.b16 %v3196
  %v4941 = vunpack.c.l.b16 %v3197
  %v4942 = vunpack.c.l.b16 %v3198
  %v4943 = vunpack.c.l.b16 %v3199
  %v4944 = vunpack.c.l.b16 %v3200
  %v4945 = vunpack.c.l.b16 %v3201
  %v4946 = vunpack.c.l.b16 %v3202
  %v4947 = vunpack.c.l.b16 %v3203
  %v4948 = vunpack.c.l.b16 %v3204
  %v4949 = vunpack.c.l.b16 %v3205
  %v4950 = vunpack.c.l.b16 %v3206
  %v4951 = vunpack.c.l.b16 %v3207
  %v4952 = vunpack.c.l.b16 %v3208
  %v4953 = vunpack.c.l.b16 %v3209
  %v4954 = vunpack.c.l.b16 %v3210
  %v4955 = vunpack.c.l.b16 %v3211
  %v4956 = vunpack.c.l.b16 %v3212
  %v4957 = vunpack.c.l.b16 %v3213
  %v4958 = vunpack.c.l.b16 %v3214
  %v4959 = vunpack.c.l.b16 %v3215
  %v4960 = vunpack.c.l.b16 %v3216
  %v4961 = vunpack.c.l.b16 %v3217
  %v4962 = vunpack.c.l.b16 %v3218
  %v4963 = vunpack.c.l.b16 %v3219
  %v4964 = vunpack.c.l.b16 %v3220
  %v4965 = vunpack.c.l.b16 %v3221
  %v4966 = vunpack.c.l.b16 %v3222
  %v4967 = vunpack.c.l.b16 %v3223
  %v4968 = vunpack.c.l.b16 %v3224
  %v4969 = vunpack.c.l.b16 %v3225
  %v4970 = vunpack.c.l.b16 %v3226
  %v4971 = vunpack.c.l.b16 %v3227
  %v4972 = vunpack.c.l.b16 %v3228
  %v4973 = vunpack.c.l.b16 %v3229
  %v4974 = vunpack.c.l.b16 %v3230
  %v4975 = vunpack.c.l.b16 %v3231
  %v4976 = vunpack.c.l.b16 %v3232
  %v4977 = vunpack.c.l.b16 %v3233
  %v4978 = vunpack.c.l.b16 %v3234
  %v4979 = vunpack.c.l.b16 %v3235
  %v4980 = vunpack.c.l.b16 %v3236
  %v4981 = vunpack.c.l.b16 %v3237
  %v4982 = vunpack.c.l.b16 %v3238
  %v4983 = vunpack.c.l.b16 %v3239
  %v4984 = vunpack.c.l.b16 %v3240
  %v4985 = vunpack.c.l.b16 %v3241
  %v4986 = vunpack.c.l.b16 %v3242
  %v4987 = vunpack.c.l.b16 %v3243
  %v4988 = vunpack.c.l.b16 %v3244
  %v4989 = vunpack.c.l.b16 %v3245
  %v4990 = vunpack.c.l.b16 %v3246
  %v4991 = vunpack.c.l.b16 %v3247
  %v4992 = vunpack.c.l.b16 %v3248
  %v4993 = vunpack.c.l.b16 %v3249
  %v4994 = vunpack.c.l.b16 %v3250
  %v4995 = vunpack.c.l.b16 %v3251
  %v4996 = vunpack.c.l.b16 %v3252
  %v4997 = vunpack.c.l.b16 %v3253
  %v4998 = vunpack.c.l.b16 %v3254
  %v4999 = vunpack.c.l.b16 %v3255
  %v5000 = vunpack.c.l.b16 %v3256
  %v5001 = vunpack.c.l.b16 %v3257
  %v5002 = vunpack.c.l.b16 %v3258
  %v5003 = vunpack.c.l.b16 %v3259
  %v5004 = vunpack.c.l.b16 %v3260
  %v5005 = vunpack.c.l.b16 %v3261
  %v5006 = vunpack.c.l.b16 %v3262
  %v5007 = vunpack.c.l.b16 %v3263
  %v5008 = vunpack.c.l.b16 %v3264
  %v5009 = vunpack.c.l.b16 %v3265
  %v5010 = vunpack.c.l.b16 %v3266
  %v5011 = vunpack.c.l.b16 %v3267
  %v5012 = vunpack.c.l.b16 %v3268
  %v5013 = vunpack.c.l.b16 %v3269
  %v5014 = vunpack.c.l.b16 %v3270
  %v5015 = vunpack.c.l.b16 %v3271
  %v5016 = vunpack.c.l.b16 %v3272
  %v5017 = vunpack.c.l.b16 %v3273
  %v5018 = vunpack.c.l.b16 %v3274
  %v5019 = vunpack.c.l.b16 %v3275
  %v5020 = vunpack.c.l.b16 %v3276
  %v5021 = vunpack.c.l.b16 %v3277
  %v5022 = vunpack.c.l.b16 %v3278
  %v5023 = vunpack.c.l.b16 %v3279
  %v5024 = vunpack.c.l.b16 %v3280
  %v5025 = vunpack.c.l.b16 %v3281
  %v5026 = vunpack.c.l.b16 %v3282
  %v5027 = vunpack.c.l.b16 %v3283
  %v5028 = vunpack.c.l.b16 %v3284
  %v5029 = vunpack.c.l.b16 %v3285
  %v5030 = vunpack.c.l.b16 %v3286
  %v5031 = vunpack.c.l.b16 %v3287
  %v5032 = vunpack.c.l.b16 %v3288
  %v5033 = vunpack.c.l.b16 %v3289
  %v5034 = vunpack.c.l.b16 %v3290
  %v5035 = vunpack.c.l.b16 %v3291
  %v5036 = vunpack.c.l.b16 %v3292
  %v5037 = vunpack.c.l.b16 %v3293
  %v5038 = vunpack.c.l.b16 %v3294
  %v5039 = vunpack.c.l.b16 %v3295
  %v5040 = vunpack.c.l.b16 %v3296
  %v5041 = vunpack.c.l.b16 %v3297
  %v5042 = vunpack.c.l.b16 %v3298
  %v5043 = vunpack.c.l.b16 %v3299
  %v5044 = vunpack.c.l.b16 %v3300
  %v5045 = vunpack.c.l.b16 %v3301
  %v5046 = vunpack.c.l.b16 %v3302
  %v5047 = vunpack.c.l.b16 %v3303
  %v5048 = vunpack.c.l.b16 %v3304
  %v5049 = vunpack.c.l.b16 %v3305
  %v5050 = vunpack.c.l.b16 %v3306
  %v5051 = vunpack.c.l.b16 %v3307
  %v5052 = vunpack.c.l.b16 %v3308
  %v5053 = vunpack.c.l.b16 %v3309
  %v5054 = vunpack.c.l.b16 %v3310
  %v5055 = vunpack.c.l.b16 %v3311
  %v5056 = vunpack.c.l.b16 %v3312
  %v5057 = vunpack.c.l.b16 %v3313
  %v5058 = vunpack.c.l.b16 %v3314
  %v5059 = vunpack.c.l.b16 %v3315
  %v5060 = vunpack.c.l.b16 %v3316
  %v5061 = vunpack.c.l.b16 %v3317
  %v5062 = vunpack.c.l.b16 %v3318
  %v5063 = vunpack.c.l.b16 %v3319
  %v5064 = vunpack.c.l.b16 %v3320
  %v5065 = vunpack.c.l.b16 %v3321
  %v5066 = vunpack.c.l.b16 %v3322
  %v5067 = vunpack.c.l.b16 %v3323
  %v5068 = vunpack.c.l.b16 %v3324
  %v5069 = vunpack.c.l.b16 %v3325
  %v5070 = vunpack.c.l.b16 %v3326
  %v5071 = vunpack.c.l.b16 %v3327
  %v5072 = vunpack.c.l.b16 %v3328
  %v5073 = vunpack.c.l.b16 %v3329
  %v5074 = vunpack.c.l.b16 %v3330
  %v5075 = vunpack.c.l.b16 %v3331
  %v5076 = vunpack.c.l.b16 %v3332
  %v5077 = vunpack.c.l.b16 %v3333
  %v5078 = vunpack.c.l.b16 %v3334
  %v5079 = vunpack.c.l.b16 %v3335
  %v5080 = vunpack.c.l.b16 %v3336
  %v5081 = vunpack.c.l.b16 %v3337
  %v5082 = vunpack.c.l.b16 %v3338
  %v5083 = vunpack.c.l.b16 %v3339
  %v5084 = vunpack.c.l.b16 %v3340
  %v5085 = vunpack.c.l.b16 %v3341
  %v5086 = vunpack.c.l.b16 %v3342
  %v5087 = vunpack.c.l.b16 %v3343
  %v5088 = vunpack.c.l.b16 %v3344
  %v5089 = vunpack.c.l.b16 %v3345
  %v5090 = vunpack.c.l.b16 %v3346
  %v5091 = vunpack.c.l.b16 %v3347
  %v5092 = vunpack.c.l.b16 %v3348
  %v5093 = vunpack.c.l.b16 %v3349
  %v5094 = vunpack.c.l.b16 %v3350
  %v5095 = vunpack.c.l.b16 %v3351
  %v5096 = vunpack.c.l.b16 %v3352
  %v5097 = vunpack.c.l.b16 %v3353
  %v5098 = vunpack.c.l.b16 %v3354
  %v5099 = vunpack.c.l.b16 %v3355
  %v5100 = vunpack.c.l.b16 %v3356
  %v5101 = vunpack.c.l.b16 %v3357
  %v5102 = vunpack.c.l.b16 %v3358
  %v5103 = vunpack.c.l.b16 %v3359
  %v5104 = vunpack.c.l.b16 %v3360
  %v5105 = vunpack.c.l.b16 %v3361
  %v5106 = vunpack.c.l.b16 %v3362
  %v5107 = vunpack.c.l.b16 %v3363
  %v5108 = vunpack.c.l.b16 %v3364
  %v5109 = vunpack.c.l.b16 %v3365
  %v5110 = vunpack.c.l.b16 %v3366
  %v5111 = vunpack.c.l.b16 %v3367
  %v5112 = vunpack.c.l.b16 %v3368
  %v5113 = vunpack.c.l.b16 %v3369
  %v5114 = vunpack.c.l.b16 %v3370
  %v5115 = vunpack.c.l.b16 %v3371
  %v5116 = vunpack.c.l.b16 %v3372
  %v5117 = vunpack.c.l.b16 %v3373
  %v5118 = vunpack.c.l.b16 %v3374
  %v5119 = vunpack.c.l.b16 %v3375
  %v5120 = vunpack.c.l.b16 %v3376
  %v5121 = vunpack.c.l.b16 %v3377
  %v5122 = vunpack.c.l.b16 %v3378
  %v5123 = vunpack.c.l.b16 %v3379
  %v5124 = vunpack.c.l.b16 %v3380
  %v5125 = vunpack.c.l.b16 %v3381
  %v5126 = vunpack.c.l.b16 %v3382
  %v5127 = vunpack.c.l.b16 %v3383
  %v5128 = vunpack.c.l.b16 %v3384
  %v5129 = vunpack.c.l.b16 %v3385
  %v5130 = vunpack.c.l.b16 %v3386
  %v5131 = vunpack.c.l.b16 %v3387
  %v5132 = vunpack.c.l.b16 %v3388
  %v5133 = vunpack.c.l.b16 %v3389
  %v5134 = vunpack.c.l.b16 %v3390
  %v5135 = vunpack.c.l.b16 %v3391
  %v5136 = vunpack.c.l.b16 %v3392
  %v5137 = vunpack.c.l.b16 %v3393
  %v5138 = vunpack.c.l.b16 %v3394
  %v5139 = vunpack.c.l.b16 %v3395
  %v5140 = vunpack.c.l.b16 %v3396
  %v5141 = vunpack.c.l.b16 %v3397
  %v5142 = vunpack.c.l.b16 %v3398
  %v5143 = vunpack.c.l.b16 %v3399
  %v5144 = vunpack.c.l.b16 %v3400
  %v5145 = vunpack.c.l.b16 %v3401
  %v5146 = vunpack.c.l.b16 %v3402
  %v5147 = vunpack.c.l.b16 %v3403
  %v5148 = vunpack.c.l.b16 %v3404
  %v5149 = vunpack.c.l.b16 %v3405
  %v5150 = vunpack.c.l.b16 %v3406
  %v5151 = vunpack.c.l.b16 %v3407
  %v5152 = vunpack.c.l.b16 %v3408
  %v5153 = vunpack.c.l.b16 %v3409
  %v5154 = vunpack.c.l.b16 %v3410
  %v5155 = vunpack.c.l.b16 %v3411
  %v5156 = vunpack.c.l.b16 %v3412
  %v5157 = vunpack.c.l.b16 %v3413
  %v5158 = vunpack.c.l.b16 %v3414
  %v5159 = vunpack.c.l.b16 %v3415
  %v5160 = vunpack.c.l.b16 %v3416
  %v5161 = vunpack.c.l.b16 %v3417
  %v5162 = vunpack.c.l.b16 %v3418
  %v5163 = vunpack.c.l.b16 %v3419
  %v5164 = vunpack.c.l.b16 %v3420
  %v5165 = vunpack.c.l.b16 %v3421
  %v5166 = vunpack.c.l.b16 %v3422
  %v5167 = vunpack.c.l.b16 %v3423
  %v5168 = vunpack.c.l.b16 %v3424
  %v5169 = vunpack.c.l.b16 %v3425
  %v5170 = vunpack.c.l.b16 %v3426
  %v5171 = vunpack.c.l.b16 %v3427
  %v5172 = vunpack.c.l.b16 %v3428
  %v5173 = vunpack.c.l.b16 %v3429
  %v5174 = vunpack.c.l.b16 %v3430
  %v5175 = vunpack.c.l.b16 %v3431
  %v5176 = vunpack.c.l.b16 %v3432
  %v5177 = vunpack.c.l.b16 %v3433
  %v5178 = vunpack.c.l.b16 %v3434
  %v5179 = vunpack.c.l.b16 %v3435
  %v5180 = vunpack.c.l.b16 %v3436
  %v5181 = vunpack.c.l.b16 %v3437
  %v5182 = vunpack.c.l.b16 %v3438
  %v5183 = vunpack.c.l.b16 %v3439
  %v5184 = vunpack.c.l.b16 %v3440
  %v5185 = vunpack.c.l.b16 %v3441
  %v5186 = vunpack.c.l.b16 %v3442
  %v5187 = vunpack.c.l.b16 %v3443
  %v5188 = vunpack.c.l.b16 %v3444
  %v5189 = vunpack.c.l.b16 %v3445
  %v5190 = vunpack.c.l.b16 %v3446
  %v5191 = vunpack.c.l.b16 %v3447
  %v5192 = vunpack.c.l.b16 %v3448
  %v5193 = vunpack.c.l.b16 %v3449
  %v5194 = vunpack.c.l.b16 %v3450
  %v5195 = vunpack.c.l.b16 %v3451
  %v5196 = vunpack.c.l.b16 %v3452
  %v5197 = vunpack.c.l.b16 %v3453
  %v5198 = vunpack.c.l.b16 %v3454
  %v5199 = vunpack.c.l.b16 %v3455
  %v5200 = vunpack.c.l.b16 %v3456
  %v5201 = vunpack.c.l.b16 %v3457
  %v5202 = vunpack.c.l.b16 %v3458
  %v5203 = vunpack.c.l.b16 %v3459
  %v5204 = vunpack.c.l.b16 %v3460
  %v5205 = vunpack.c.l.b16 %v3461
  %v5206 = vunpack.c.l.b16 %v3462
  %v5207 = vunpack.c.l.b16 %v3463
  %v5208 = vunpack.c.l.b16 %v3464
  %v5209 = vunpack.c.l.b16 %v3465
  %v5210 = vunpack.c.l.b16 %v3466
  %v5211 = vunpack.c.l.b16 %v3467
  %v5212 = vunpack.c.l.b16 %v3468
  %v5213 = vunpack.c.l.b16 %v3469
  %v5214 = vunpack.c.l.b16 %v3470
  %v5215 = vunpack.c.l.b16 %v3471
  %v5216 = vunpack.c.l.b16 %v3472
  %v5217 = vunpack.c.l.b16 %v3473
  %v5218 = vunpack.c.l.b16 %v3474
  %v5219 = vunpack.c.l.b16 %v3475
  %v5220 = vunpack.c.l.b16 %v3476
  %v5221 = vunpack.c.l.b16 %v3477
  %v5222 = vunpack.c.l.b16 %v3478
  %v5223 = vunpack.c.l.b16 %v3479
  %v5224 = vunpack.c.l.b16 %v3480
  %v5225 = vunpack.c.l.b16 %v3481
  %v5226 = vunpack.c.l.b16 %v3482
  %v5227 = vunpack.c.l.b16 %v3483
  %v5228 = vunpack.c.l.b16 %v3484
  %v5229 = vunpack.c.l.b16 %v3485
  %v5230 = vunpack.c.l.b16 %v3486
  %v5231 = vunpack.c.l.b16 %v3487
  %v5232 = vunpack.c.l.b16 %v3488
  %v5233 = vunpack.c.l.b16 %v3489
  %v5234 = vunpack.c.l.b16 %v3490
  %v5235 = vunpack.c.l.b16 %v3491
  %v5236 = vunpack.c.l.b16 %v3492
  %v5237 = vunpack.c.l.b16 %v3493
  %v5238 = vunpack.c.l.b16 %v3494
  %v5239 = vunpack.c.l.b16 %v3495
  %v5240 = vunpack.c.l.b16 %v3496
  %v5241 = vunpack.c.l.b16 %v3497
  %v5242 = vunpack.c.l.b16 %v3498
  %v5243 = vunpack.c.l.b16 %v3499
  %v5244 = vunpack.c.l.b16 %v3500
  %v5245 = vunpack.c.l.b16 %v3501
  %v5246 = vunpack.c.l.b16 %v3502
  %v5247 = vunpack.c.l.b16 %v3503
  %v5248 = vunpack.c.l.b16 %v3504
  %v5249 = vpack.c.b16 %v4466, %v4465
  %v5250 = vpack.c.b16 %v4468, %v4467
  %v5251 = vpack.c.b16 %v4470, %v4469
  %v5252 = vpack.c.b16 %v4472, %v4471
  %v5253 = vpack.c.b16 %v4474, %v4473
  %v5254 = vpack.c.b16 %v4476, %v4475
  %v5255 = vpack.c.b16 %v4478, %v4477
  %v5256 = vpack.c.b16 %v4480, %v4479
  %v5257 = vpack.c.b16 %v4482, %v4481
  %v5258 = vpack.c.b16 %v4484, %v4483
  %v5259 = vpack.c.b16 %v4486, %v4485
  %v5260 = vpack.c.b16 %v4488, %v4487
  %v5261 = vpack.c.b16 %v4490, %v4489
  %v5262 = vpack.c.b16 %v4492, %v4491
  %v5263 = vpack.c.b16 %v4494, %v4493
  %v5264 = vpack.c.b16 %v4496, %v4495
  %v5265 = vpack.c.b16 %v4498, %v4497
  %v5266 = vpack.c.b16 %v4500, %v4499
  %v5267 = vpack.c.b16 %v4502, %v4501
  %v5268 = vpack.c.b16 %v4504, %v4503
  %v5269 = vpack.c.b16 %v4506, %v4505
  %v5270 = vpack.c.b16 %v4508, %v4507
  %v5271 = vpack.c.b16 %v4510, %v4509
  %v5272 = vpack.c.b16 %v4512, %v4511
  %v5273 = vpack.c.b16 %v4514, %v4513
  %v5274 = vpack.c.b16 %v4516, %v4515
  %v5275 = vpack.c.b16 %v4518, %v4517
  %v5276 = vpack.c.b16 %v4520, %v4519
  %v5277 = vpack.c.b16 %v4522, %v4521
  %v5278 = vpack.c.b16 %v4524, %v4523
  %v5279 = vpack.c.b16 %v4526, %v4525
  %v5280 = vpack.c.b16 %v4528, %v4527
  %v5281 = vpack.c.b16 %v4530, %v4529
  %v5282 = vpack.c.b16 %v4532, %v4531
  %v5283 = vpack.c.b16 %v4534, %v4533
  %v5284 = vpack.c.b16 %v4536, %v4535
  %v5285 = vpack.c.b16 %v4538, %v4537
  %v5286 = vpack.c.b16 %v4540, %v4539
  %v5287 = vpack.c.b16 %v4542, %v4541
  %v5288 = vpack.c.b16 %v4544, %v4543
  %v5289 = vpack.c.b16 %v4546, %v4545
  %v5290 = vpack.c.b16 %v4548, %v4547
  %v5291 = vpack.c.b16 %v4550, %v4549
  %v5292 = vpack.c.b16 %v4552, %v4551
  %v5293 = vpack.c.b16 %v4554, %v4553
  %v5294 = vpack.c.b16 %v4556, %v4555
  %v5295 = vpack.c.b16 %v4558, %v4557
  %v5296 = vpack.c.b16 %v4560, %v4559
  %v5297 = vpack.c.b16 %v4562, %v4561
  %v5298 = vpack.c.b16 %v4564, %v4563
  %v5299 = vpack.c.b16 %v4566, %v4565
  %v5300 = vpack.c.b16 %v4568, %v4567
  %v5301 = vpack.c.b16 %v4570, %v4569
  %v5302 = vpack.c.b16 %v4572, %v4571
  %v5303 = vpack.c.b16 %v4574, %v4573
  %v5304 = vpack.c.b16 %v4576, %v4575
  %v5305 = vpack.c.b16 %v4578, %v4577
  %v5306 = vpack.c.b16 %v4580, %v4579
  %v5307 = vpack.c.b16 %v4582, %v4581
  %v5308 = vpack.c.b16 %v4584, %v4583
  %v5309 = vpack.c.b16 %v4586, %v4585
  %v5310 = vpack.c.b16 %v4588, %v4587
  %v5311 = vpack.c.b16 %v4590, %v4589
  %v5312 = vpack.c.b16 %v4592, %v4591
  %v5313 = vpack.c.b16 %v4594, %v4593
  %v5314 = vpack.c.b16 %v4596, %v4595
  %v5315 = vpack.c.b16 %v4598, %v4597
  %v5316 = vpack.c.b16 %v4600, %v4599
  %v5317 = vpack.c.b16 %v4602, %v4601
  %v5318 = vpack.c.b16 %v4604, %v4603
  %v5319 = vpack.c.b16 %v4606, %v4605
  %v5320 = vpack.c.b16 %v4608, %v4607
  %v5321 = vpack.c.b16 %v4610, %v4609
  %v5322 = vpack.c.b16 %v4612, %v4611
  %v5323 = vpack.c.b16 %v4614, %v4613
  %v5324 = vpack.c.b16 %v4616, %v4615
  %v5325 = vpack.c.b16 %v4618, %v4617
  %v5326 = vpack.c.b16 %v4620, %v4619
  %v5327 = vpack.c.b16 %v4622, %v4621
  %v5328 = vpack.c.b16 %v4624, %v4623
  %v5329 = vpack.c.b16 %v4626, %v4625
  %v5330 = vpack.c.b16 %v4628, %v4627
  %v5331 = vpack.c.b16 %v4630, %v4629
  %v5332 = vpack.c.b16 %v4632, %v4631
  %v5333 = vpack.c.b16 %v4634, %v4633
  %v5334 = vpack.c.b16 %v4636, %v4635
  %v5335 = vpack.c.b16 %v4638, %v4637
  %v5336 = vpack.c.b16 %v4640, %v4639
  %v5337 = vpack.c.b16 %v4642, %v4641
  %v5338 = vpack.c.b16 %v4644, %v4643
  %v5339 = vpack.c.b16 %v4646, %v4645
  %v5340 = vpack.c.b16 %v4648, %v4647
  %v5341 = vpack.c.b16 %v4650, %v4649
  %v5342 = vpack.c.b16 %v4652, %v4651
  %v5343 = vpack.c.b16 %v4654, %v4653
  %v5344 = vpack.c.b16 %v4656, %v4655
  %v5345 = vpack.c.b16 %v4658, %v4657
  %v5346 = vpack.c.b16 %v4660, %v4659
  %v5347 = vpack.c.b16 %v4662, %v4661
  %v5348 = vpack.c.b16 %v4664, %v4663
  %v5349 = vpack.c.b16 %v4666, %v4665
  %v5350 = vpack.c.b16 %v4668, %v4667
  %v5351 = vpack.c.b16 %v4670, %v4669
  %v5352 = vpack.c.b16 %v4672, %v4671
  %v5353 = vpack.c.b16 %v4674, %v4673
  %v5354 = vpack.c.b16 %v4676, %v4675
  %v5355 = vpack.c.b16 %v4678, %v4677
  %v5356 = vpack.c.b16 %v4680, %v4679
  %v5357 = vpack.c.b16 %v4682, %v4681
  %v5358 = vpack.c.b16 %v4684, %v4683
  %v5359 = vpack.c.b16 %v4686, %v4685
  %v5360 = vpack.c.b16 %v4688, %v4687
  %v5361 = vpack.c.b16 %v4690, %v4689
  %v5362 = vpack.c.b16 %v4692, %v4691
  %v5363 = vpack.c.b16 %v4694, %v4693
  %v5364 = vpack.c.b16 %v4696, %v4695
  %v5365 = vpack.c.b16 %v4698, %v4697
  %v5366 = vpack.c.b16 %v4700, %v4699
  %v5367 = vpack.c.b16 %v4702, %v4701
  %v5368 = vpack.c.b16 %v4704, %v4703
  %v5369 = vpack.c.b16 %v4706, %v4705
  %v5370 = vpack.c.b16 %v4708, %v4707
  %v5371 = vpack.c.b16 %v4710, %v4709
  %v5372 = vpack.c.b16 %v4712, %v4711
  %v5373 = vpack.c.b16 %v4714, %v4713
  %v5374 = vpack.c.b16 %v4716, %v4715
  %v5375 = vpack.c.b16 %v4718, %v4717
  %v5376 = vpack.c.b16 %v4720, %v4719
  %v5377 = vpack.c.b16 %v4722, %v4721
  %v5378 = vpack.c.b16 %v4724, %v4723
  %v5379 = vpack.c.b16 %v4726, %v4725
  %v5380 = vpack.c.b16 %v4728, %v4727
  %v5381 = vpack.c.b16 %v4730, %v4729
  %v5382 = vpack.c.b16 %v4732, %v4731
  %v5383 = vpack.c.b16 %v4734, %v4733
  %v5384 = vpack.c.b16 %v4736, %v4735
  %v5385 = vpack.c.b16 %v4738, %v4737
  %v5386 = vpack.c.b16 %v4740, %v4739
  %v5387 = vpack.c.b16 %v4742, %v4741
  %v5388 = vpack.c.b16 %v4744, %v4743
  %v5389 = vpack.c.b16 %v4746, %v4745
  %v5390 = vpack.c.b16 %v4748, %v4747
  %v5391 = vpack.c.b16 %v4750, %v4749
  %v5392 = vpack.c.b16 %v4752, %v4751
  %v5393 = vpack.c.b16 %v4754, %v4753
  %v5394 = vpack.c.b16 %v4756, %v4755
  %v5395 = vpack.c.b16 %v4758, %v4757
  %v5396 = vpack.c.b16 %v4760, %v4759
  %v5397 = vpack.c.b16 %v4762, %v4761
  %v5398 = vpack.c.b16 %v4764, %v4763
  %v5399 = vpack.c.b16 %v4766, %v4765
  %v5400 = vpack.c.b16 %v4768, %v4767
  %v5401 = vpack.c.b16 %v4770, %v4769
  %v5402 = vpack.c.b16 %v4772, %v4771
  %v5403 = vpack.c.b16 %v4774, %v4773
  %v5404 = vpack.c.b16 %v4776, %v4775
  %v5405 = vpack.c.b16 %v4778, %v4777
  %v5406 = vpack.c.b16 %v4780, %v4779
  %v5407 = vpack.c.b16 %v4782, %v4781
  %v5408 = vpack.c.b16 %v4784, %v4783
  %v5409 = vpack.c.b16 %v4786, %v4785
  %v5410 = vpack.c.b16 %v4788, %v4787
  %v5411 = vpack.c.b16 %v4790, %v4789
  %v5412 = vpack.c.b16 %v4792, %v4791
  %v5413 = vpack.c.b16 %v4794, %v4793
  %v5414 = vpack.c.b16 %v4796, %v4795
  %v5415 = vpack.c.b16 %v4798, %v4797
  %v5416 = vpack.c.b16 %v4800, %v4799
  %v5417 = vpack.c.b16 %v4802, %v4801
  %v5418 = vpack.c.b16 %v4804, %v4803
  %v5419 = vpack.c.b16 %v4806, %v4805
  %v5420 = vpack.c.b16 %v4808, %v4807
  %v5421 = vpack.c.b16 %v4810, %v4809
  %v5422 = vpack.c.b16 %v4812, %v4811
  %v5423 = vpack.c.b16 %v4814, %v4813
  %v5424 = vpack.c.b16 %v4816, %v4815
  %v5425 = vpack.c.b16 %v4818, %v4817
  %v5426 = vpack.c.b16 %v4820, %v4819
  %v5427 = vpack.c.b16 %v4822, %v4821
  %v5428 = vpack.c.b16 %v4824, %v4823
  %v5429 = vpack.c.b16 %v4826, %v4825
  %v5430 = vpack.c.b16 %v4828, %v4827
  %v5431 = vpack.c.b16 %v4830, %v4829
  %v5432 = vpack.c.b16 %v4832, %v4831
  %v5433 = vpack.c.b16 %v4834, %v4833
  %v5434 = vpack.c.b16 %v4836, %v4835
  %v5435 = vpack.c.b16 %v4838, %v4837
  %v5436 = vpack.c.b16 %v4840, %v4839
  %v5437 = vpack.c.b16 %v4842, %v4841
  %v5438 = vpack.c.b16 %v4844, %v4843
  %v5439 = vpack.c.b16 %v4846, %v4845
  %v5440 = vpack.c.b16 %v4848, %v4847
  %v5441 = vpack.c.b16 %v4850, %v4849
  %v5442 = vpack.c.b16 %v4852, %v4851
  %v5443 = vpack.c.b16 %v4854, %v4853
  %v5444 = vpack.c.b16 %v4856, %v4855
  %v5445 = vpack.c.b16 %v4858, %v4857
  %v5446 = vpack.c.b16 %v4860, %v4859
  %v5447 = vpack.c.b16 %v4862, %v4861
  %v5448 = vpack.c.b16 %v4864, %v4863
  %v5449 = vpack.c.b16 %v4866, %v4865
  %v5450 = vpack.c.b16 %v4868, %v4867
  %v5451 = vpack.c.b16 %v4870, %v4869
  %v5452 = vpack.c.b16 %v4872, %v4871
  %v5453 = vpack.c.b16 %v4874, %v4873
  %v5454 = vpack.c.b16 %v4876, %v4875
  %v5455 = vpack.c.b16 %v4878, %v4877
  %v5456 = vpack.c.b16 %v4880, %v4879
  %v5457 = vpack.c.b16 %v4882, %v4881
  %v5458 = vpack.c.b16 %v4884, %v4883
  %v5459 = vpack.c.b16 %v4886, %v4885
  %v5460 = vpack.c.b16 %v4888, %v4887
  %v5461 = vpack.c.b16 %v4890, %v4889
  %v5462 = vpack.c.b16 %v4892, %v4891
  %v5463 = vpack.c.b16 %v4894, %v4893
  %v5464 = vpack.c.b16 %v4896, %v4895
  %v5465 = vpack.c.b16 %v4898, %v4897
  %v5466 = vpack.c.b16 %v4900, %v4899
  %v5467 = vpack.c.b16 %v4902, %v4901
  %v5468 = vpack.c.b16 %v4904, %v4903
  %v5469 = vpack.c.b16 %v4906, %v4905
  %v5470 = vpack.c.b16 %v4908, %v4907
  %v5471 = vpack.c.b16 %v4910, %v4909
  %v5472 = vpack.c.b16 %v4912, %v4911
  %v5473 = vpack.c.b16 %v4914, %v4913
  %v5474 = vpack.c.b16 %v4916, %v4915
  %v5475 = vpack.c.b16 %v4918, %v4917
  %v5476 = vpack.c.b16 %v4920, %v4919
  %v5477 = vpack.c.b16 %v4922, %v4921
  %v5478 = vpack.c.b16 %v4924, %v4923
  %v5479 = vpack.c.b16 %v4926, %v4925
  %v5480 = vpack.c.b16 %v4928, %v4927
  %v5481 = vpack.c.b16 %v4930, %v4929
  %v5482 = vpack.c.b16 %v4932, %v4931
  %v5483 = vpack.c.b16 %v4934, %v4933
  %v5484 = vpack.c.b16 %v4936, %v4935
  %v5485 = vpack.c.b16 %v4938, %v4937
  %v5486 = vpack.c.b16 %v4940, %v4939
  %v5487 = vpack.c.b16 %v4942, %v4941
  %v5488 = vpack.c.b16 %v4944, %v4943
  %v5489 = vpack.c.b16 %v4946, %v4945
  %v5490 = vpack.c.b16 %v4948, %v4947
  %v5491 = vpack.c.b16 %v4950, %v4949
  %v5492 = vpack.c.b16 %v4952, %v4951
  %v5493 = vpack.c.b16 %v4954, %v4953
  %v5494 = vpack.c.b16 %v4956, %v4955
  %v5495 = vpack.c.b16 %v4958, %v4957
  %v5496 = vpack.c.b16 %v4960, %v4959
  %v5497 = vpack.c.b16 %v4962, %v4961
  %v5498 = vpack.c.b16 %v4964, %v4963
  %v5499 = vpack.c.b16 %v4966, %v4965
  %v5500 = vpack.c.b16 %v4968, %v4967
  %v5501 = vpack.c.b16 %v4970, %v4969
  %v5502 = vpack.c.b16 %v4972, %v4971
  %v5503 = vpack.c.b16 %v4974, %v4973
  %v5504 = vpack.c.b16 %v4976, %v4975
  %v5505 = vpack.c.b16 %v4978, %v4977
  %v5506 = vpack.c.b16 %v4980, %v4979
  %v5507 = vpack.c.b16 %v4982, %v4981
  %v5508 = vpack.c.b16 %v4984, %v4983
  %v5509 = vpack.c.b16 %v4986, %v4985
  %v5510 = vpack.c.b16 %v4988, %v4987
  %v5511 = vpack.c.b16 %v4990, %v4989
  %v5512 = vpack.c.b16 %v4992, %v4991
  %v5513 = vpack.c.b16 %v4994, %v4993
  %v5514 = vpack.c.b16 %v4996, %v4995
  %v5515 = vpack.c.b16 %v4998, %v4997
  %v5516 = vpack.c.b16 %v5000, %v4999
  %v5517 = vpack.c.b16 %v5002, %v5001
  %v5518 = vpack.c.b16 %v5004, %v5003
  %v5519 = vpack.c.b16 %v5006, %v5005
  %v5520 = vpack.c.b16 %v5008, %v5007
  %v5521 = vpack.c.b16 %v5010, %v5009
  %v5522 = vpack.c.b16 %v5012, %v5011
  %v5523 = vpack.c.b16 %v5014, %v5013
  %v5524 = vpack.c.b16 %v5016, %v5015
  %v5525 = vpack.c.b16 %v5018, %v5017
  %v5526 = vpack.c.b16 %v5020, %v5019
  %v5527 = vpack.c.b16 %v5022, %v5021
  %v5528 = vpack.c.b16 %v5024, %v5023
  %v5529 = vpack.c.b16 %v5026, %v5025
  %v5530 = vpack.c.b16 %v5028, %v5027
  %v5531 = vpack.c.b16 %v5030, %v5029
  %v5532 = vpack.c.b16 %v5032, %v5031
  %v5533 = vpack.c.b16 %v5034, %v5033
  %v5534 = vpack.c.b16 %v5036, %v5035
  %v5535 = vpack.c.b16 %v5038, %v5037
  %v5536 = vpack.c.b16 %v5040, %v5039
  %v5537 = vpack.c.b16 %v5042, %v5041
  %v5538 = vpack.c.b16 %v5044, %v5043
  %v5539 = vpack.c.b16 %v5046, %v5045
  %v5540 = vpack.c.b16 %v5048, %v5047
  %v5541 = vpack.c.b16 %v5050, %v5049
  %v5542 = vpack.c.b16 %v5052, %v5051
  %v5543 = vpack.c.b16 %v5054, %v5053
  %v5544 = vpack.c.b16 %v5056, %v5055
  %v5545 = vpack.c.b16 %v5058, %v5057
  %v5546 = vpack.c.b16 %v5060, %v5059
  %v5547 = vpack.c.b16 %v5062, %v5061
  %v5548 = vpack.c.b16 %v5064, %v5063
  %v5549 = vpack.c.b16 %v5066, %v5065
  %v5550 = vpack.c.b16 %v5068, %v5067
  %v5551 = vpack.c.b16 %v5070, %v5069
  %v5552 = vpack.c.b16 %v5072, %v5071
  %v5553 = vpack.c.b16 %v5074, %v5073
  %v5554 = vpack.c.b16 %v5076, %v5075
  %v5555 = vpack.c.b16 %v5078, %v5077
  %v5556 = vpack.c.b16 %v5080, %v5079
  %v5557 = vpack.c.b16 %v5082, %v5081
  %v5558 = vpack.c.b16 %v5084, %v5083
  %v5559 = vpack.c.b16 %v5086, %v5085
  %v5560 = vpack.c.b16 %v5088, %v5087
  %v5561 = vpack.c.b16 %v5090, %v5089
  %v5562 = vpack.c.b16 %v5092, %v5091
  %v5563 = vpack.c.b16 %v5094, %v5093
  %v5564 = vpack.c.b16 %v5096, %v5095
  %v5565 = vpack.c.b16 %v5098, %v5097
  %v5566 = vpack.c.b16 %v5100, %v5099
  %v5567 = vpack.c.b16 %v5102, %v5101
  %v5568 = vpack.c.b16 %v5104, %v5103
  %v5569 = vpack.c.b16 %v5106, %v5105
  %v5570 = vpack.c.b16 %v5108, %v5107
  %v5571 = vpack.c.b16 %v5110, %v5109
  %v5572 = vpack.c.b16 %v5112, %v5111
  %v5573 = vpack.c.b16 %v5114, %v5113
  %v5574 = vpack.c.b16 %v5116, %v5115
  %v5575 = vpack.c.b16 %v5118, %v5117
  %v5576 = vpack.c.b16 %v5120, %v5119
  %v5577 = vpack.c.b16 %v5122, %v5121
  %v5578 = vpack.c.b16 %v5124, %v5123
  %v5579 = vpack.c.b16 %v5126, %v5125
  %v5580 = vpack.c.b16 %v5128, %v5127
  %v5581 = vpack.c.b16 %v5130, %v5129
  %v5582 = vpack.c.b16 %v5132, %v5131
  %v5583 = vpack.c.b16 %v5134, %v5133
  %v5584 = vpack.c.b16 %v5136, %v5135
  %v5585 = vpack.c.b16 %v5138, %v5137
  %v5586 = vpack.c.b16 %v5140, %v5139
  %v5587 = vpack.c.b16 %v5142, %v5141
  %v5588 = vpack.c.b16 %v5144, %v5143
  %v5589 = vpack.c.b16 %v5146, %v5145
  %v5590 = vpack.c.b16 %v5148, %v5147
  %v5591 = vpack.c.b16 %v5150, %v5149
  %v5592 = vpack.c.b16 %v5152, %v5151
  %v5593 = vpack.c.b16 %v5154, %v5153
  %v5594 = vpack.c.b16 %v5156, %v5155
  %v5595 = vpack.c.b16 %v5158, %v5157
  %v5596 = vpack.c.b16 %v5160, %v5159
  %v5597 = vpack.c.b16 %v5162, %v5161
  %v5598 = vpack.c.b16 %v5164, %v5163
  %v5599 = vpack.c.b16 %v5166, %v5165
  %v5600 = vpack.c.b16 %v5168, %v5167
  %v5601 = vpack.c.b16 %v5170, %v5169
  %v5602 = vpack.c.b16 %v5172, %v5171
  %v5603 = vpack.c.b16 %v5174, %v5173
  %v5604 = vpack.c.b16 %v5176, %v5175
  %v5605 = vpack.c.b16 %v5178, %v5177
  %v5606 = vpack.c.b16 %v5180, %v5179
  %v5607 = vpack.c.b16 %v5182, %v5181
  %v5608 = vpack.c.b16 %v5184, %v5183
  %v5609 = vpack.c.b16 %v5186, %v5185
  %v5610 = vpack.c.b16 %v5188, %v5187
  %v5611 = vpack.c.b16 %v5190, %v5189
  %v5612 = vpack.c.b16 %v5192, %v5191
  %v5613 = vpack.c.b16 %v5194, %v5193
  %v5614 = vpack.c.b16 %v5196, %v5195
  %v5615 = vpack.c.b16 %v5198, %v5197
  %v5616 = vpack.c.b16 %v5200, %v5199
  %v5617 = vpack.c.b16 %v5202, %v5201
  %v5618 = vpack.c.b16 %v5204, %v5203
  %v5619 = vpack.c.b16 %v5206, %v5205
  %v5620 = vpack.c.b16 %v5208, %v5207
  %v5621 = vpack.c.b16 %v5210, %v5209
  %v5622 = vpack.c.b16 %v5212, %v5211
  %v5623 = vpack.c.b16 %v5214, %v5213
  %v5624 = vpack.c.b16 %v5216, %v5215
  %v5625 = vpack.c.b16 %v5218, %v5217
  %v5626 = vpack.c.b16 %v5220, %v5219
  %v5627 = vpack.c.b16 %v5222, %v5221
  %v5628 = vpack.c.b16 %v5224, %v5223
  %v5629 = vpack.c.b16 %v5226, %v5225
  %v5630 = vpack.c.b16 %v5228, %v5227
  %v5631 = vpack.c.b16 %v5230, %v5229
  %v5632 = vpack.c.b16 %v5232, %v5231
  %v5633 = vpack.c.b16 %v5234, %v5233
  %v5634 = vpack.c.b16 %v5236, %v5235
  %v5635 = vpack.c.b16 %v5238, %v5237
  %v5636 = vpack.c.b16 %v5240, %v5239
  %v5637 = vpack.c.b16 %v5242, %v5241
  %v5638 = vpack.c.b16 %v5244, %v5243
  %v5639 = vpack.c.b16 %v5246, %v5245
  %v5640 = vpack.c.b16 %v5248, %v5247
  %6033 = vmatpush.bf16.msra.mxu0 %v5256
  %6034 = vmatpush.bf16.msra.mxu0 %v5255
  %6035 = vmatpush.bf16.msra.mxu0 %v5254
  %6036 = vmatpush.bf16.msra.mxu0 %v5253
  %6037 = vmatpush.bf16.msra.mxu0 %v5252
  %6038 = vmatpush.bf16.msra.mxu0 %v5251
  %6039 = vmatpush.bf16.msra.mxu0 %v5250
  %6040 = vmatpush.bf16.msra.mxu0 %v5249
  %6041 = vmatmul.bf16.gmra.mxu0 %v3583
  %v6042 = vpop.f32.mrf.mxu0
  %v6043 = vadd.f32 %v3507, %v6042
  %v6044 = vpop.f32.mrf.mxu0
  %6045 = vdwg.mxu0
  %6046 = vmatpush.bf16.msra.mxu0 %v5264
  %6047 = vmatpush.bf16.msra.mxu0 %v5263
  %6048 = vmatpush.bf16.msra.mxu0 %v5262
  %6049 = vmatpush.bf16.msra.mxu0 %v5261
  %6050 = vmatpush.bf16.msra.mxu0 %v5260
  %6051 = vmatpush.bf16.msra.mxu0 %v5259
  %6052 = vmatpush.bf16.msra.mxu0 %v5258
  %6053 = vmatpush.bf16.msra.mxu0 %v5257
  %6054 = vmatmul.bf16.gmra.mxu0 %v3584
  %v6055 = vpop.f32.mrf.mxu0
  %v6056 = vadd.f32 %v6043, %v6055
  %v6057 = vpop.f32.mrf.mxu0
  %6058 = vdwg.mxu0
  %6059 = vmatpush.bf16.msra.mxu0 %v5272
  %6060 = vmatpush.bf16.msra.mxu0 %v5271
  %6061 = vmatpush.bf16.msra.mxu0 %v5270
  %6062 = vmatpush.bf16.msra.mxu0 %v5269
  %6063 = vmatpush.bf16.msra.mxu0 %v5268
  %6064 = vmatpush.bf16.msra.mxu0 %v5267
  %6065 = vmatpush.bf16.msra.mxu0 %v5266
  %6066 = vmatpush.bf16.msra.mxu0 %v5265
  %6067 = vmatmul.bf16.gmra.mxu0 %v3585
  %v6068 = vpop.f32.mrf.mxu0
  %v6069 = vadd.f32 %v6056, %v6068
  %v6070 = vpop.f32.mrf.mxu0
  %6071 = vdwg.mxu0
  %6072 = vmatpush.bf16.msra.mxu0 %v5280
  %6073 = vmatpush.bf16.msra.mxu0 %v5279
  %6074 = vmatpush.bf16.msra.mxu0 %v5278
  %6075 = vmatpush.bf16.msra.mxu0 %v5277
  %6076 = vmatpush.bf16.msra.mxu0 %v5276
  %6077 = vmatpush.bf16.msra.mxu0 %v5275
  %6078 = vmatpush.bf16.msra.mxu0 %v5274
  %6079 = vmatpush.bf16.msra.mxu0 %v5273
  %6080 = vmatmul.bf16.gmra.mxu0 %v3586
  %v6081 = vpop.f32.mrf.mxu0
  %v6082 = vadd.f32 %v6069, %v6081
  %v6083 = vpop.f32.mrf.mxu0
  %6084 = vdwg.mxu0
  %6085 = vmatpush.bf16.msra.mxu0 %v5288
  %6086 = vmatpush.bf16.msra.mxu0 %v5287
  %6087 = vmatpush.bf16.msra.mxu0 %v5286
  %6088 = vmatpush.bf16.msra.mxu0 %v5285
  %6089 = vmatpush.bf16.msra.mxu0 %v5284
  %6090 = vmatpush.bf16.msra.mxu0 %v5283
  %6091 = vmatpush.bf16.msra.mxu0 %v5282
  %6092 = vmatpush.bf16.msra.mxu0 %v5281
  %6093 = vmatmul.bf16.gmra.mxu0 %v3587
  %v6094 = vpop.f32.mrf.mxu0
  %v6095 = vadd.f32 %v6082, %v6094
  %v6096 = vpop.f32.mrf.mxu0
  %6097 = vdwg.mxu0
  %6098 = vmatpush.bf16.msra.mxu0 %v5296
  %6099 = vmatpush.bf16.msra.mxu0 %v5295
  %6100 = vmatpush.bf16.msra.mxu0 %v5294
  %6101 = vmatpush.bf16.msra.mxu0 %v5293
  %6102 = vmatpush.bf16.msra.mxu0 %v5292
  %6103 = vmatpush.bf16.msra.mxu0 %v5291
  %6104 = vmatpush.bf16.msra.mxu0 %v5290
  %6105 = vmatpush.bf16.msra.mxu0 %v5289
  %6106 = vmatmul.bf16.gmra.mxu0 %v3588
  %v6107 = vpop.f32.mrf.mxu0
  %v6108 = vadd.f32 %v6095, %v6107
  %v6109 = vpop.f32.mrf.mxu0
  %6110 = vdwg.mxu0
  %6111 = vmatpush.bf16.msra.mxu0 %v5304
  %6112 = vmatpush.bf16.msra.mxu0 %v5303
  %6113 = vmatpush.bf16.msra.mxu0 %v5302
  %6114 = vmatpush.bf16.msra.mxu0 %v5301
  %6115 = vmatpush.bf16.msra.mxu0 %v5300
  %6116 = vmatpush.bf16.msra.mxu0 %v5299
  %6117 = vmatpush.bf16.msra.mxu0 %v5298
  %6118 = vmatpush.bf16.msra.mxu0 %v5297
  %6119 = vmatmul.bf16.gmra.mxu0 %v3589
  %v6120 = vpop.f32.mrf.mxu0
  %v6121 = vadd.f32 %v6108, %v6120
  %v6122 = vpop.f32.mrf.mxu0
  %6123 = vdwg.mxu0
  %6124 = vmatpush.bf16.msra.mxu0 %v5312
  %6125 = vmatpush.bf16.msra.mxu0 %v5311
  %6126 = vmatpush.bf16.msra.mxu0 %v5310
  %6127 = vmatpush.bf16.msra.mxu0 %v5309
  %6128 = vmatpush.bf16.msra.mxu0 %v5308
  %6129 = vmatpush.bf16.msra.mxu0 %v5307
  %6130 = vmatpush.bf16.msra.mxu0 %v5306
  %6131 = vmatpush.bf16.msra.mxu0 %v5305
  %6132 = vmatmul.bf16.gmra.mxu0 %v3590
  %v6133 = vpop.f32.mrf.mxu0
  %v6134 = vadd.f32 %v6121, %v6133
  %v6135 = vpop.f32.mrf.mxu0
  %6136 = vdwg.mxu0
  %6137 = vmatpush.bf16.msra.mxu0 %v5320
  %6138 = vmatpush.bf16.msra.mxu0 %v5319
  %6139 = vmatpush.bf16.msra.mxu0 %v5318
  %6140 = vmatpush.bf16.msra.mxu0 %v5317
  %6141 = vmatpush.bf16.msra.mxu0 %v5316
  %6142 = vmatpush.bf16.msra.mxu0 %v5315
  %6143 = vmatpush.bf16.msra.mxu0 %v5314
  %6144 = vmatpush.bf16.msra.mxu0 %v5313
  %6145 = vmatmul.bf16.gmra.mxu0 %v3591
  %v6146 = vpop.f32.mrf.mxu0
  %v6147 = vadd.f32 %v6134, %v6146
  %v6148 = vpop.f32.mrf.mxu0
  %6149 = vdwg.mxu0
  %6150 = vmatpush.bf16.msra.mxu0 %v5328
  %6151 = vmatpush.bf16.msra.mxu0 %v5327
  %6152 = vmatpush.bf16.msra.mxu0 %v5326
  %6153 = vmatpush.bf16.msra.mxu0 %v5325
  %6154 = vmatpush.bf16.msra.mxu0 %v5324
  %6155 = vmatpush.bf16.msra.mxu0 %v5323
  %6156 = vmatpush.bf16.msra.mxu0 %v5322
  %6157 = vmatpush.bf16.msra.mxu0 %v5321
  %6158 = vmatmul.bf16.gmra.mxu0 %v3592
  %v6159 = vpop.f32.mrf.mxu0
  %v6160 = vadd.f32 %v6147, %v6159
  %v6161 = vpop.f32.mrf.mxu0
  %6162 = vdwg.mxu0
  %6163 = vmatpush.bf16.msra.mxu0 %v5336
  %6164 = vmatpush.bf16.msra.mxu0 %v5335
  %6165 = vmatpush.bf16.msra.mxu0 %v5334
  %6166 = vmatpush.bf16.msra.mxu0 %v5333
  %6167 = vmatpush.bf16.msra.mxu0 %v5332
  %6168 = vmatpush.bf16.msra.mxu0 %v5331
  %6169 = vmatpush.bf16.msra.mxu0 %v5330
  %6170 = vmatpush.bf16.msra.mxu0 %v5329
  %6171 = vmatmul.bf16.gmra.mxu0 %v3593
  %v6172 = vpop.f32.mrf.mxu0
  %v6173 = vadd.f32 %v6160, %v6172
  %v6174 = vpop.f32.mrf.mxu0
  %6175 = vdwg.mxu0
  %6176 = vmatpush.bf16.msra.mxu0 %v5344
  %6177 = vmatpush.bf16.msra.mxu0 %v5343
  %6178 = vmatpush.bf16.msra.mxu0 %v5342
  %6179 = vmatpush.bf16.msra.mxu0 %v5341
  %6180 = vmatpush.bf16.msra.mxu0 %v5340
  %6181 = vmatpush.bf16.msra.mxu0 %v5339
  %6182 = vmatpush.bf16.msra.mxu0 %v5338
  %6183 = vmatpush.bf16.msra.mxu0 %v5337
  %6184 = vmatmul.bf16.gmra.mxu0 %v3594
  %v6185 = vpop.f32.mrf.mxu0
  %v6186 = vadd.f32 %v6173, %v6185
  %v6187 = vpop.f32.mrf.mxu0
  %6188 = vdwg.mxu0
  %6189 = vmatpush.bf16.msra.mxu0 %v5352
  %6190 = vmatpush.bf16.msra.mxu0 %v5351
  %6191 = vmatpush.bf16.msra.mxu0 %v5350
  %6192 = vmatpush.bf16.msra.mxu0 %v5349
  %6193 = vmatpush.bf16.msra.mxu0 %v5348
  %6194 = vmatpush.bf16.msra.mxu0 %v5347
  %6195 = vmatpush.bf16.msra.mxu0 %v5346
  %6196 = vmatpush.bf16.msra.mxu0 %v5345
  %6197 = vmatmul.bf16.gmra.mxu0 %v3595
  %v6198 = vpop.f32.mrf.mxu0
  %v6199 = vadd.f32 %v6186, %v6198
  %v6200 = vpop.f32.mrf.mxu0
  %6201 = vdwg.mxu0
  %6202 = vmatpush.bf16.msra.mxu0 %v5360
  %6203 = vmatpush.bf16.msra.mxu0 %v5359
  %6204 = vmatpush.bf16.msra.mxu0 %v5358
  %6205 = vmatpush.bf16.msra.mxu0 %v5357
  %6206 = vmatpush.bf16.msra.mxu0 %v5356
  %6207 = vmatpush.bf16.msra.mxu0 %v5355
  %6208 = vmatpush.bf16.msra.mxu0 %v5354
  %6209 = vmatpush.bf16.msra.mxu0 %v5353
  %6210 = vmatmul.bf16.gmra.mxu0 %v3596
  %v6211 = vpop.f32.mrf.mxu0
  %v6212 = vadd.f32 %v6199, %v6211
  %v6213 = vpop.f32.mrf.mxu0
  %6214 = vdwg.mxu0
  %6215 = vmatpush.bf16.msra.mxu0 %v5368
  %6216 = vmatpush.bf16.msra.mxu0 %v5367
  %6217 = vmatpush.bf16.msra.mxu0 %v5366
  %6218 = vmatpush.bf16.msra.mxu0 %v5365
  %6219 = vmatpush.bf16.msra.mxu0 %v5364
  %6220 = vmatpush.bf16.msra.mxu0 %v5363
  %6221 = vmatpush.bf16.msra.mxu0 %v5362
  %6222 = vmatpush.bf16.msra.mxu0 %v5361
  %6223 = vmatmul.bf16.gmra.mxu0 %v3597
  %v6224 = vpop.f32.mrf.mxu0
  %v6225 = vadd.f32 %v6212, %v6224
  %v6226 = vpop.f32.mrf.mxu0
  %6227 = vdwg.mxu0
  %6228 = vmatpush.bf16.msra.mxu0 %v5376
  %6229 = vmatpush.bf16.msra.mxu0 %v5375
  %6230 = vmatpush.bf16.msra.mxu0 %v5374
  %6231 = vmatpush.bf16.msra.mxu0 %v5373
  %6232 = vmatpush.bf16.msra.mxu0 %v5372
  %6233 = vmatpush.bf16.msra.mxu0 %v5371
  %6234 = vmatpush.bf16.msra.mxu0 %v5370
  %6235 = vmatpush.bf16.msra.mxu0 %v5369
  %6236 = vmatmul.bf16.gmra.mxu0 %v3598
  %v6237 = vpop.f32.mrf.mxu0
  %v6238 = vadd.f32 %v6225, %v6237
  %v6239 = vpop.f32.mrf.mxu0
  %6240 = vdwg.mxu0
  %6241 = vmatpush.bf16.msra.mxu0 %v5384
  %6242 = vmatpush.bf16.msra.mxu0 %v5383
  %6243 = vmatpush.bf16.msra.mxu0 %v5382
  %6244 = vmatpush.bf16.msra.mxu0 %v5381
  %6245 = vmatpush.bf16.msra.mxu0 %v5380
  %6246 = vmatpush.bf16.msra.mxu0 %v5379
  %6247 = vmatpush.bf16.msra.mxu0 %v5378
  %6248 = vmatpush.bf16.msra.mxu0 %v5377
  %6249 = vmatmul.bf16.gmra.mxu0 %v3599
  %v6250 = vpop.f32.mrf.mxu0
  %v6251 = vadd.f32 %v6238, %v6250
  %v6252 = vpop.f32.mrf.mxu0
  %6253 = vdwg.mxu0
  %6254 = vmatpush.bf16.msra.mxu0 %v5392
  %6255 = vmatpush.bf16.msra.mxu0 %v5391
  %6256 = vmatpush.bf16.msra.mxu0 %v5390
  %6257 = vmatpush.bf16.msra.mxu0 %v5389
  %6258 = vmatpush.bf16.msra.mxu0 %v5388
  %6259 = vmatpush.bf16.msra.mxu0 %v5387
  %6260 = vmatpush.bf16.msra.mxu0 %v5386
  %6261 = vmatpush.bf16.msra.mxu0 %v5385
  %6262 = vmatmul.bf16.gmra.mxu0 %v3600
  %v6263 = vpop.f32.mrf.mxu0
  %v6264 = vadd.f32 %v6251, %v6263
  %v6265 = vpop.f32.mrf.mxu0
  %6266 = vdwg.mxu0
  %6267 = vmatpush.bf16.msra.mxu0 %v5400
  %6268 = vmatpush.bf16.msra.mxu0 %v5399
  %6269 = vmatpush.bf16.msra.mxu0 %v5398
  %6270 = vmatpush.bf16.msra.mxu0 %v5397
  %6271 = vmatpush.bf16.msra.mxu0 %v5396
  %6272 = vmatpush.bf16.msra.mxu0 %v5395
  %6273 = vmatpush.bf16.msra.mxu0 %v5394
  %6274 = vmatpush.bf16.msra.mxu0 %v5393
  %6275 = vmatmul.bf16.gmra.mxu0 %v3601
  %v6276 = vpop.f32.mrf.mxu0
  %v6277 = vadd.f32 %v6264, %v6276
  %v6278 = vpop.f32.mrf.mxu0
  %6279 = vdwg.mxu0
  %6280 = vmatpush.bf16.msra.mxu0 %v5408
  %6281 = vmatpush.bf16.msra.mxu0 %v5407
  %6282 = vmatpush.bf16.msra.mxu0 %v5406
  %6283 = vmatpush.bf16.msra.mxu0 %v5405
  %6284 = vmatpush.bf16.msra.mxu0 %v5404
  %6285 = vmatpush.bf16.msra.mxu0 %v5403
  %6286 = vmatpush.bf16.msra.mxu0 %v5402
  %6287 = vmatpush.bf16.msra.mxu0 %v5401
  %6288 = vmatmul.bf16.gmra.mxu0 %v3602
  %v6289 = vpop.f32.mrf.mxu0
  %v6290 = vadd.f32 %v6277, %v6289
  %v6291 = vpop.f32.mrf.mxu0
  %6292 = vdwg.mxu0
  %6293 = vmatpush.bf16.msra.mxu0 %v5416
  %6294 = vmatpush.bf16.msra.mxu0 %v5415
  %6295 = vmatpush.bf16.msra.mxu0 %v5414
  %6296 = vmatpush.bf16.msra.mxu0 %v5413
  %6297 = vmatpush.bf16.msra.mxu0 %v5412
  %6298 = vmatpush.bf16.msra.mxu0 %v5411
  %6299 = vmatpush.bf16.msra.mxu0 %v5410
  %6300 = vmatpush.bf16.msra.mxu0 %v5409
  %6301 = vmatmul.bf16.gmra.mxu0 %v3603
  %v6302 = vpop.f32.mrf.mxu0
  %v6303 = vadd.f32 %v6290, %v6302
  %v6304 = vpop.f32.mrf.mxu0
  %6305 = vdwg.mxu0
  %6306 = vmatpush.bf16.msra.mxu0 %v5424
  %6307 = vmatpush.bf16.msra.mxu0 %v5423
  %6308 = vmatpush.bf16.msra.mxu0 %v5422
  %6309 = vmatpush.bf16.msra.mxu0 %v5421
  %6310 = vmatpush.bf16.msra.mxu0 %v5420
  %6311 = vmatpush.bf16.msra.mxu0 %v5419
  %6312 = vmatpush.bf16.msra.mxu0 %v5418
  %6313 = vmatpush.bf16.msra.mxu0 %v5417
  %6314 = vmatmul.bf16.gmra.mxu0 %v3604
  %v6315 = vpop.f32.mrf.mxu0
  %v6316 = vadd.f32 %v6303, %v6315
  %v6317 = vpop.f32.mrf.mxu0
  %6318 = vdwg.mxu0
  %6319 = vmatpush.bf16.msra.mxu0 %v5432
  %6320 = vmatpush.bf16.msra.mxu0 %v5431
  %6321 = vmatpush.bf16.msra.mxu0 %v5430
  %6322 = vmatpush.bf16.msra.mxu0 %v5429
  %6323 = vmatpush.bf16.msra.mxu0 %v5428
  %6324 = vmatpush.bf16.msra.mxu0 %v5427
  %6325 = vmatpush.bf16.msra.mxu0 %v5426
  %6326 = vmatpush.bf16.msra.mxu0 %v5425
  %6327 = vmatmul.bf16.gmra.mxu0 %v3605
  %v6328 = vpop.f32.mrf.mxu0
  %v6329 = vadd.f32 %v6316, %v6328
  %v6330 = vpop.f32.mrf.mxu0
  %6331 = vdwg.mxu0
  %6332 = vmatpush.bf16.msra.mxu0 %v5440
  %6333 = vmatpush.bf16.msra.mxu0 %v5439
  %6334 = vmatpush.bf16.msra.mxu0 %v5438
  %6335 = vmatpush.bf16.msra.mxu0 %v5437
  %6336 = vmatpush.bf16.msra.mxu0 %v5436
  %6337 = vmatpush.bf16.msra.mxu0 %v5435
  %6338 = vmatpush.bf16.msra.mxu0 %v5434
  %6339 = vmatpush.bf16.msra.mxu0 %v5433
  %6340 = vmatmul.bf16.gmra.mxu0 %v3606
  %v6341 = vpop.f32.mrf.mxu0
  %v6342 = vadd.f32 %v6329, %v6341
  %v6343 = vpop.f32.mrf.mxu0
  %6344 = vdwg.mxu0
  %6345 = vmatpush.bf16.msra.mxu0 %v5448
  %6346 = vmatpush.bf16.msra.mxu0 %v5447
  %6347 = vmatpush.bf16.msra.mxu0 %v5446
  %6348 = vmatpush.bf16.msra.mxu0 %v5445
  %6349 = vmatpush.bf16.msra.mxu0 %v5444
  %6350 = vmatpush.bf16.msra.mxu0 %v5443
  %6351 = vmatpush.bf16.msra.mxu0 %v5442
  %6352 = vmatpush.bf16.msra.mxu0 %v5441
  %6353 = vmatmul.bf16.gmra.mxu0 %v3607
  %v6354 = vpop.f32.mrf.mxu0
  %v6355 = vadd.f32 %v6342, %v6354
  %v6356 = vpop.f32.mrf.mxu0
  %6357 = vdwg.mxu0
  %6358 = vmatpush.bf16.msra.mxu0 %v5456
  %6359 = vmatpush.bf16.msra.mxu0 %v5455
  %6360 = vmatpush.bf16.msra.mxu0 %v5454
  %6361 = vmatpush.bf16.msra.mxu0 %v5453
  %6362 = vmatpush.bf16.msra.mxu0 %v5452
  %6363 = vmatpush.bf16.msra.mxu0 %v5451
  %6364 = vmatpush.bf16.msra.mxu0 %v5450
  %6365 = vmatpush.bf16.msra.mxu0 %v5449
  %6366 = vmatmul.bf16.gmra.mxu0 %v3608
  %v6367 = vpop.f32.mrf.mxu0
  %v6368 = vadd.f32 %v6355, %v6367
  %v6369 = vpop.f32.mrf.mxu0
  %6370 = vdwg.mxu0
  %6371 = vmatpush.bf16.msra.mxu0 %v5464
  %6372 = vmatpush.bf16.msra.mxu0 %v5463
  %6373 = vmatpush.bf16.msra.mxu0 %v5462
  %6374 = vmatpush.bf16.msra.mxu0 %v5461
  %6375 = vmatpush.bf16.msra.mxu0 %v5460
  %6376 = vmatpush.bf16.msra.mxu0 %v5459
  %6377 = vmatpush.bf16.msra.mxu0 %v5458
  %6378 = vmatpush.bf16.msra.mxu0 %v5457
  %6379 = vmatmul.bf16.gmra.mxu0 %v3609
  %v6380 = vpop.f32.mrf.mxu0
  %v6381 = vadd.f32 %v6368, %v6380
  %v6382 = vpop.f32.mrf.mxu0
  %6383 = vdwg.mxu0
  %6384 = vmatpush.bf16.msra.mxu0 %v5472
  %6385 = vmatpush.bf16.msra.mxu0 %v5471
  %6386 = vmatpush.bf16.msra.mxu0 %v5470
  %6387 = vmatpush.bf16.msra.mxu0 %v5469
  %6388 = vmatpush.bf16.msra.mxu0 %v5468
  %6389 = vmatpush.bf16.msra.mxu0 %v5467
  %6390 = vmatpush.bf16.msra.mxu0 %v5466
  %6391 = vmatpush.bf16.msra.mxu0 %v5465
  %6392 = vmatmul.bf16.gmra.mxu0 %v3610
  %v6393 = vpop.f32.mrf.mxu0
  %v6394 = vadd.f32 %v6381, %v6393
  %v6395 = vpop.f32.mrf.mxu0
  %6396 = vdwg.mxu0
  %6397 = vmatpush.bf16.msra.mxu0 %v5480
  %6398 = vmatpush.bf16.msra.mxu0 %v5479
  %6399 = vmatpush.bf16.msra.mxu0 %v5478
  %6400 = vmatpush.bf16.msra.mxu0 %v5477
  %6401 = vmatpush.bf16.msra.mxu0 %v5476
  %6402 = vmatpush.bf16.msra.mxu0 %v5475
  %6403 = vmatpush.bf16.msra.mxu0 %v5474
  %6404 = vmatpush.bf16.msra.mxu0 %v5473
  %6405 = vmatmul.bf16.gmra.mxu0 %v3611
  %v6406 = vpop.f32.mrf.mxu0
  %v6407 = vadd.f32 %v6394, %v6406
  %v6408 = vpop.f32.mrf.mxu0
  %6409 = vdwg.mxu0
  %6410 = vmatpush.bf16.msra.mxu0 %v5488
  %6411 = vmatpush.bf16.msra.mxu0 %v5487
  %6412 = vmatpush.bf16.msra.mxu0 %v5486
  %6413 = vmatpush.bf16.msra.mxu0 %v5485
  %6414 = vmatpush.bf16.msra.mxu0 %v5484
  %6415 = vmatpush.bf16.msra.mxu0 %v5483
  %6416 = vmatpush.bf16.msra.mxu0 %v5482
  %6417 = vmatpush.bf16.msra.mxu0 %v5481
  %6418 = vmatmul.bf16.gmra.mxu0 %v3612
  %v6419 = vpop.f32.mrf.mxu0
  %v6420 = vadd.f32 %v6407, %v6419
  %v6421 = vpop.f32.mrf.mxu0
  %6422 = vdwg.mxu0
  %6423 = vmatpush.bf16.msra.mxu0 %v5496
  %6424 = vmatpush.bf16.msra.mxu0 %v5495
  %6425 = vmatpush.bf16.msra.mxu0 %v5494
  %6426 = vmatpush.bf16.msra.mxu0 %v5493
  %6427 = vmatpush.bf16.msra.mxu0 %v5492
  %6428 = vmatpush.bf16.msra.mxu0 %v5491
  %6429 = vmatpush.bf16.msra.mxu0 %v5490
  %6430 = vmatpush.bf16.msra.mxu0 %v5489
  %6431 = vmatmul.bf16.gmra.mxu0 %v3613
  %v6432 = vpop.f32.mrf.mxu0
  %v6433 = vadd.f32 %v6420, %v6432
  %v6434 = vpop.f32.mrf.mxu0
  %6435 = vdwg.mxu0
  %6436 = vmatpush.bf16.msra.mxu0 %v5504
  %6437 = vmatpush.bf16.msra.mxu0 %v5503
  %6438 = vmatpush.bf16.msra.mxu0 %v5502
  %6439 = vmatpush.bf16.msra.mxu0 %v5501
  %6440 = vmatpush.bf16.msra.mxu0 %v5500
  %6441 = vmatpush.bf16.msra.mxu0 %v5499
  %6442 = vmatpush.bf16.msra.mxu0 %v5498
  %6443 = vmatpush.bf16.msra.mxu0 %v5497
  %6444 = vmatmul.bf16.gmra.mxu0 %v3614
  %v6445 = vpop.f32.mrf.mxu0
  %v6446 = vadd.f32 %v6433, %v6445
  %v6447 = vpop.f32.mrf.mxu0
  %6448 = vdwg.mxu0
  %6449 = vmatpush.bf16.msra.mxu0 %v5512
  %6450 = vmatpush.bf16.msra.mxu0 %v5511
  %6451 = vmatpush.bf16.msra.mxu0 %v5510
  %6452 = vmatpush.bf16.msra.mxu0 %v5509
  %6453 = vmatpush.bf16.msra.mxu0 %v5508
  %6454 = vmatpush.bf16.msra.mxu0 %v5507
  %6455 = vmatpush.bf16.msra.mxu0 %v5506
  %6456 = vmatpush.bf16.msra.mxu0 %v5505
  %6457 = vmatmul.bf16.gmra.mxu0 %v3615
  %v6458 = vpop.f32.mrf.mxu0
  %v6459 = vadd.f32 %v6446, %v6458
  %v6460 = vpop.f32.mrf.mxu0
  %6461 = vdwg.mxu0
  %6462 = vmatpush.bf16.msra.mxu0 %v5520
  %6463 = vmatpush.bf16.msra.mxu0 %v5519
  %6464 = vmatpush.bf16.msra.mxu0 %v5518
  %6465 = vmatpush.bf16.msra.mxu0 %v5517
  %6466 = vmatpush.bf16.msra.mxu0 %v5516
  %6467 = vmatpush.bf16.msra.mxu0 %v5515
  %6468 = vmatpush.bf16.msra.mxu0 %v5514
  %6469 = vmatpush.bf16.msra.mxu0 %v5513
  %6470 = vmatmul.bf16.gmra.mxu0 %v3616
  %v6471 = vpop.f32.mrf.mxu0
  %v6472 = vadd.f32 %v6459, %v6471
  %v6473 = vpop.f32.mrf.mxu0
  %6474 = vdwg.mxu0
  %6475 = vmatpush.bf16.msra.mxu0 %v5528
  %6476 = vmatpush.bf16.msra.mxu0 %v5527
  %6477 = vmatpush.bf16.msra.mxu0 %v5526
  %6478 = vmatpush.bf16.msra.mxu0 %v5525
  %6479 = vmatpush.bf16.msra.mxu0 %v5524
  %6480 = vmatpush.bf16.msra.mxu0 %v5523
  %6481 = vmatpush.bf16.msra.mxu0 %v5522
  %6482 = vmatpush.bf16.msra.mxu0 %v5521
  %6483 = vmatmul.bf16.gmra.mxu0 %v3617
  %v6484 = vpop.f32.mrf.mxu0
  %v6485 = vadd.f32 %v6472, %v6484
  %v6486 = vpop.f32.mrf.mxu0
  %6487 = vdwg.mxu0
  %6488 = vmatpush.bf16.msra.mxu0 %v5536
  %6489 = vmatpush.bf16.msra.mxu0 %v5535
  %6490 = vmatpush.bf16.msra.mxu0 %v5534
  %6491 = vmatpush.bf16.msra.mxu0 %v5533
  %6492 = vmatpush.bf16.msra.mxu0 %v5532
  %6493 = vmatpush.bf16.msra.mxu0 %v5531
  %6494 = vmatpush.bf16.msra.mxu0 %v5530
  %6495 = vmatpush.bf16.msra.mxu0 %v5529
  %6496 = vmatmul.bf16.gmra.mxu0 %v3618
  %v6497 = vpop.f32.mrf.mxu0
  %v6498 = vadd.f32 %v6485, %v6497
  %v6499 = vpop.f32.mrf.mxu0
  %6500 = vdwg.mxu0
  %6501 = vmatpush.bf16.msra.mxu0 %v5544
  %6502 = vmatpush.bf16.msra.mxu0 %v5543
  %6503 = vmatpush.bf16.msra.mxu0 %v5542
  %6504 = vmatpush.bf16.msra.mxu0 %v5541
  %6505 = vmatpush.bf16.msra.mxu0 %v5540
  %6506 = vmatpush.bf16.msra.mxu0 %v5539
  %6507 = vmatpush.bf16.msra.mxu0 %v5538
  %6508 = vmatpush.bf16.msra.mxu0 %v5537
  %6509 = vmatmul.bf16.gmra.mxu0 %v3619
  %v6510 = vpop.f32.mrf.mxu0
  %v6511 = vadd.f32 %v6498, %v6510
  %v6512 = vpop.f32.mrf.mxu0
  %6513 = vdwg.mxu0
  %6514 = vmatpush.bf16.msra.mxu0 %v5552
  %6515 = vmatpush.bf16.msra.mxu0 %v5551
  %6516 = vmatpush.bf16.msra.mxu0 %v5550
  %6517 = vmatpush.bf16.msra.mxu0 %v5549
  %6518 = vmatpush.bf16.msra.mxu0 %v5548
  %6519 = vmatpush.bf16.msra.mxu0 %v5547
  %6520 = vmatpush.bf16.msra.mxu0 %v5546
  %6521 = vmatpush.bf16.msra.mxu0 %v5545
  %6522 = vmatmul.bf16.gmra.mxu0 %v3620
  %v6523 = vpop.f32.mrf.mxu0
  %v6524 = vadd.f32 %v6511, %v6523
  %v6525 = vpop.f32.mrf.mxu0
  %6526 = vdwg.mxu0
  %6527 = vmatpush.bf16.msra.mxu0 %v5560
  %6528 = vmatpush.bf16.msra.mxu0 %v5559
  %6529 = vmatpush.bf16.msra.mxu0 %v5558
  %6530 = vmatpush.bf16.msra.mxu0 %v5557
  %6531 = vmatpush.bf16.msra.mxu0 %v5556
  %6532 = vmatpush.bf16.msra.mxu0 %v5555
  %6533 = vmatpush.bf16.msra.mxu0 %v5554
  %6534 = vmatpush.bf16.msra.mxu0 %v5553
  %6535 = vmatmul.bf16.gmra.mxu0 %v3621
  %v6536 = vpop.f32.mrf.mxu0
  %v6537 = vadd.f32 %v6524, %v6536
  %v6538 = vpop.f32.mrf.mxu0
  %6539 = vdwg.mxu0
  %6540 = vmatpush.bf16.msra.mxu0 %v5568
  %6541 = vmatpush.bf16.msra.mxu0 %v5567
  %6542 = vmatpush.bf16.msra.mxu0 %v5566
  %6543 = vmatpush.bf16.msra.mxu0 %v5565
  %6544 = vmatpush.bf16.msra.mxu0 %v5564
  %6545 = vmatpush.bf16.msra.mxu0 %v5563
  %6546 = vmatpush.bf16.msra.mxu0 %v5562
  %6547 = vmatpush.bf16.msra.mxu0 %v5561
  %6548 = vmatmul.bf16.gmra.mxu0 %v3622
  %v6549 = vpop.f32.mrf.mxu0
  %v6550 = vadd.f32 %v6537, %v6549
  %v6551 = vpop.f32.mrf.mxu0
  %6552 = vdwg.mxu0
  %6553 = vmatpush.bf16.msra.mxu0 %v5576
  %6554 = vmatpush.bf16.msra.mxu0 %v5575
  %6555 = vmatpush.bf16.msra.mxu0 %v5574
  %6556 = vmatpush.bf16.msra.mxu0 %v5573
  %6557 = vmatpush.bf16.msra.mxu0 %v5572
  %6558 = vmatpush.bf16.msra.mxu0 %v5571
  %6559 = vmatpush.bf16.msra.mxu0 %v5570
  %6560 = vmatpush.bf16.msra.mxu0 %v5569
  %6561 = vmatmul.bf16.gmra.mxu0 %v3623
  %v6562 = vpop.f32.mrf.mxu0
  %v6563 = vadd.f32 %v6550, %v6562
  %v6564 = vpop.f32.mrf.mxu0
  %6565 = vdwg.mxu0
  %6566 = vmatpush.bf16.msra.mxu0 %v5584
  %6567 = vmatpush.bf16.msra.mxu0 %v5583
  %6568 = vmatpush.bf16.msra.mxu0 %v5582
  %6569 = vmatpush.bf16.msra.mxu0 %v5581
  %6570 = vmatpush.bf16.msra.mxu0 %v5580
  %6571 = vmatpush.bf16.msra.mxu0 %v5579
  %6572 = vmatpush.bf16.msra.mxu0 %v5578
  %6573 = vmatpush.bf16.msra.mxu0 %v5577
  %6574 = vmatmul.bf16.gmra.mxu0 %v3624
  %v6575 = vpop.f32.mrf.mxu0
  %v6576 = vadd.f32 %v6563, %v6575
  %v6577 = vpop.f32.mrf.mxu0
  %6578 = vdwg.mxu0
  %6579 = vmatpush.bf16.msra.mxu0 %v5592
  %6580 = vmatpush.bf16.msra.mxu0 %v5591
  %6581 = vmatpush.bf16.msra.mxu0 %v5590
  %6582 = vmatpush.bf16.msra.mxu0 %v5589
  %6583 = vmatpush.bf16.msra.mxu0 %v5588
  %6584 = vmatpush.bf16.msra.mxu0 %v5587
  %6585 = vmatpush.bf16.msra.mxu0 %v5586
  %6586 = vmatpush.bf16.msra.mxu0 %v5585
  %6587 = vmatmul.bf16.gmra.mxu0 %v3625
  %v6588 = vpop.f32.mrf.mxu0
  %v6589 = vadd.f32 %v6576, %v6588
  %v6590 = vpop.f32.mrf.mxu0
  %6591 = vdwg.mxu0
  %6592 = vmatpush.bf16.msra.mxu0 %v5600
  %6593 = vmatpush.bf16.msra.mxu0 %v5599
  %6594 = vmatpush.bf16.msra.mxu0 %v5598
  %6595 = vmatpush.bf16.msra.mxu0 %v5597
  %6596 = vmatpush.bf16.msra.mxu0 %v5596
  %6597 = vmatpush.bf16.msra.mxu0 %v5595
  %6598 = vmatpush.bf16.msra.mxu0 %v5594
  %6599 = vmatpush.bf16.msra.mxu0 %v5593
  %6600 = vmatmul.bf16.gmra.mxu0 %v3626
  %v6601 = vpop.f32.mrf.mxu0
  %v6602 = vadd.f32 %v6589, %v6601
  %v6603 = vpop.f32.mrf.mxu0
  %6604 = vdwg.mxu0
  %6605 = vmatpush.bf16.msra.mxu0 %v5608
  %6606 = vmatpush.bf16.msra.mxu0 %v5607
  %6607 = vmatpush.bf16.msra.mxu0 %v5606
  %6608 = vmatpush.bf16.msra.mxu0 %v5605
  %6609 = vmatpush.bf16.msra.mxu0 %v5604
  %6610 = vmatpush.bf16.msra.mxu0 %v5603
  %6611 = vmatpush.bf16.msra.mxu0 %v5602
  %6612 = vmatpush.bf16.msra.mxu0 %v5601
  %6613 = vmatmul.bf16.gmra.mxu0 %v3627
  %v6614 = vpop.f32.mrf.mxu0
  %v6615 = vadd.f32 %v6602, %v6614
  %v6616 = vpop.f32.mrf.mxu0
  %6617 = vdwg.mxu0
  %6618 = vmatpush.bf16.msra.mxu0 %v5616
  %6619 = vmatpush.bf16.msra.mxu0 %v5615
  %6620 = vmatpush.bf16.msra.mxu0 %v5614
  %6621 = vmatpush.bf16.msra.mxu0 %v5613
  %6622 = vmatpush.bf16.msra.mxu0 %v5612
  %6623 = vmatpush.bf16.msra.mxu0 %v5611
  %6624 = vmatpush.bf16.msra.mxu0 %v5610
  %6625 = vmatpush.bf16.msra.mxu0 %v5609
  %6626 = vmatmul.bf16.gmra.mxu0 %v3628
  %v6627 = vpop.f32.mrf.mxu0
  %v6628 = vadd.f32 %v6615, %v6627
  %v6629 = vpop.f32.mrf.mxu0
  %6630 = vdwg.mxu0
  %6631 = vmatpush.bf16.msra.mxu0 %v5624
  %6632 = vmatpush.bf16.msra.mxu0 %v5623
  %6633 = vmatpush.bf16.msra.mxu0 %v5622
  %6634 = vmatpush.bf16.msra.mxu0 %v5621
  %6635 = vmatpush.bf16.msra.mxu0 %v5620
  %6636 = vmatpush.bf16.msra.mxu0 %v5619
  %6637 = vmatpush.bf16.msra.mxu0 %v5618
  %6638 = vmatpush.bf16.msra.mxu0 %v5617
  %6639 = vmatmul.bf16.gmra.mxu0 %v3629
  %v6640 = vpop.f32.mrf.mxu0
  %v6641 = vadd.f32 %v6628, %v6640
  %v6642 = vpop.f32.mrf.mxu0
  %6643 = vdwg.mxu0
  %6644 = vmatpush.bf16.msra.mxu0 %v5632
  %6645 = vmatpush.bf16.msra.mxu0 %v5631
  %6646 = vmatpush.bf16.msra.mxu0 %v5630
  %6647 = vmatpush.bf16.msra.mxu0 %v5629
  %6648 = vmatpush.bf16.msra.mxu0 %v5628
  %6649 = vmatpush.bf16.msra.mxu0 %v5627
  %6650 = vmatpush.bf16.msra.mxu0 %v5626
  %6651 = vmatpush.bf16.msra.mxu0 %v5625
  %6652 = vmatmul.bf16.gmra.mxu0 %v3630
  %v6653 = vpop.f32.mrf.mxu0
  %v6654 = vadd.f32 %v6641, %v6653
  %v6655 = vpop.f32.mrf.mxu0
  %6656 = vdwg.mxu0
  %6657 = vmatpush.bf16.msra.mxu0 %v5640
  %6658 = vmatpush.bf16.msra.mxu0 %v5639
  %6659 = vmatpush.bf16.msra.mxu0 %v5638
  %6660 = vmatpush.bf16.msra.mxu0 %v5637
  %6661 = vmatpush.bf16.msra.mxu0 %v5636
  %6662 = vmatpush.bf16.msra.mxu0 %v5635
  %6663 = vmatpush.bf16.msra.mxu0 %v5634
  %6664 = vmatpush.bf16.msra.mxu0 %v5633
  %6665 = vmatmul.bf16.gmra.mxu0 %v3631
  %v6666 = vpop.f32.mrf.mxu0
  %v6667 = vadd.f32 %v6654, %v6666
  %v6668 = vpop.f32.mrf.mxu0
  %6669 = vdwg.mxu0
  %v6670 = vmax.f32 %v6667, 0.0
  %v6671 = vpack.c.bf16 %v6670, %v6670
  %v6672 = vld [vmem:[%s6] sm:$0xf]
  %v6673 = vld [vmem:[%s6 + $0x4] sm:$0xf]
  %v6674 = vld [vmem:[%s6 + $0x8] sm:$0xf]
  %v6675 = vld [vmem:[%s6 + $0xc] sm:$0xf]
  %v6676 = vld [vmem:[%s6 + $0x10] sm:$0xf]
  %v6677 = vld [vmem:[%s6 + $0x14] sm:$0xf]
  %v6678 = vld [vmem:[%s6 + $0x18] sm:$0xf]
  %v6679 = vld [vmem:[%s6 + $0x1c] sm:$0xf]
  %v6680 = vld [vmem:[%s7] sm:$0x1]
  %v6682 = vperm.slane %v6680, 0
  %v6692 = vunpack.c.l.b16 %v6672
  %v6693 = vunpack.c.l.b16 %v6673
  %v6694 = vunpack.c.l.b16 %v6674
  %v6695 = vunpack.c.l.b16 %v6675
  %v6696 = vunpack.c.l.b16 %v6676
  %v6697 = vunpack.c.l.b16 %v6677
  %v6698 = vunpack.c.l.b16 %v6678
  %v6699 = vunpack.c.l.b16 %v6679
  %v6700 = vpack.c.b16 %v6693, %v6692
  %v6701 = vpack.c.b16 %v6695, %v6694
  %v6702 = vpack.c.b16 %v6697, %v6696
  %v6703 = vpack.c.b16 %v6699, %v6698
  %v6709 = vsel %vm1808, %v6671, 0
  %6711 = vmatpush.bf16.msra.mxu0 0
  %6712 = vmatpush.bf16.msra.mxu0 0
  %6713 = vmatpush.bf16.msra.mxu0 0
  %6714 = vmatpush.bf16.msra.mxu0 0
  %6715 = vmatpush.bf16.msra.mxu0 %v6703
  %6716 = vmatpush.bf16.msra.mxu0 %v6702
  %6717 = vmatpush.bf16.msra.mxu0 %v6701
  %6718 = vmatpush.bf16.msra.mxu0 %v6700
  %6719 = vmatmul.bf16.gmra.mxu0 %v6709
  %v6720 = vpop.f32.mrf.mxu0
  %v6721 = vadd.f32 %v6682, %v6720
  %v6722 = vpop.f32.mrf.mxu0
  %6723 = vdwg.mxu0
  %vm6724 = vcmask 80896
  %v6725 = vsel %vm6724, %v6721, -inf
  %6726 = vmax.xlane.f32.xlu0 %v6725
  %v6727 = vpop.xlane.xlu0 %6726
  %v6728 = vsub.f32 %v6721, %v6727
  %v6729 = vmul.f32 %v6728, 1.442695
  %v6730 = vpow.pop %v6729
  %v6731 = vsel %vm6724, %v6730, 0.0
  %6732 = vadd.xlane.f32.xlu0 %v6731
  %v6733 = vpop.xlane.xlu0 %6732
  %v6734 = vlog2.pop %v6733
  %v6735 = vmul.f32 %v6734, 0.6931472
  %v6736 = vsub.f32 %v6728, %v6735
  %6737 = vst.msk [vmem:[%s8] sm:$0xff] %vm6724, %v6736
  // Predicated region
  $region34: #{mnist_forward.1} parent=0 // pred_check
    _
  $region35: #{mnist_forward.1} parent=0 // pred_check_branch
    %6739 = sbr.rel (0) target = $region37
  $region36: #{mnist_forward.1} parent=0 // pred_region
    _
  $region37: #{mnist_forward.1} parent=0 // pred_fallthru
    _
  // Predicated region
  $region38: #{mnist_forward.1} parent=0 // pred_check
    _
  $region39: #{mnist_forward.1} parent=0 // pred_check_branch
    %6741 = sbr.rel (0) target = $region41
  $region40: #{mnist_forward.1} parent=0 // pred_region
    _
  $region41: #{mnist_forward.1} parent=0 // pred_fallthru
    _

</llo_original>
